<compile_context>
chip_gen: v7x
topology: tpu7x:2x2x1
jax: 0.10.0
libtpu: 0.0.40
codegen_flags: <defaults>
</compile_context>

<pallas_src>
import functools

import jax
import jax.numpy as jnp
from jax.experimental import pallas as pl
from jax.experimental.pallas import tpu as pltpu

VMEM_LIMIT_BYTES = 32 * 1024 * 1024   # safe on v5e/v6e (128 MiB) and v7x (64 MiB)


def _compiler_params(n_parallel_axes):
    return pltpu.CompilerParams(
        dimension_semantics=("parallel",) * n_parallel_axes,
        vmem_limit_bytes=VMEM_LIMIT_BYTES)


# ----------------------------------------------------------------------------
# Kernel 1: conv1 (1->32, 3x3, VPU taps) + bias + ReLU + 2x2 max-pool, fused.
# ----------------------------------------------------------------------------
def _conv1_relu_pool_kernel(xs_ref, wb_ref, bb_ref, o_ref):
    """One image x one channel-group.

    xs_ref : [1, 16, 13, 13]  stride-2 sampled input planes,
             xs[a*4+b, p, q] == x[2p+a, 2q+b]
    wb_ref : [9, CG, 13, 13]  conv1 weights, tap-major, pre-broadcast spatially
    bb_ref : [CG, 13, 13]     conv1 bias, pre-broadcast spatially
    o_ref  : [1, CG, 13, 13]  ReLU(maxpool(conv1) + bias)
    """
    pooled = None
    for di in range(2):            # pool-window quadrant (rows)
        for dj in range(2):        # pool-window quadrant (cols)
            acc = None
            for i in range(3):     # 3x3 taps
                for j in range(3):
                    xs = xs_ref[0, (di + i) * 4 + (dj + j)]        # [13, 13]
                    term = wb_ref[i * 3 + j] * xs[None, :, :]      # [CG, 13, 13]
                    acc = term if acc is None else acc + term
            pooled = acc if pooled is None else jnp.maximum(pooled, acc)
    # Per-channel bias and ReLU commute with max-pool -> apply once post-pool.
    o_ref[0] = jnp.maximum(pooled + bb_ref[...], 0.0)


def conv1_relu_pool(x_nhw, wb1, bb1, *, channel_group=8):
    """x_nhw: [N, 28, 28] f32 -> [N, 32, 13, 13] f32."""
    N = x_nhw.shape[0]
    C1 = wb1.shape[1]
    cg = channel_group
    G = C1 // cg

    # TODO(synk): these stride-2 window gathers are thin XLA glue (3.4x of a
    # 3 KB/img tensor); a fully in-kernel gather would need strided ref reads.
    planes = [x_nhw[:, a:a + 26:2, b:b + 26:2]
              for a in range(4) for b in range(4)]
    xs = jnp.stack(planes, axis=1)                                 # [N, 16, 13, 13]

    flops = N * 4 * 9 * C1 * 13 * 13 * 2
    bytes_accessed = 4 * (xs.size + wb1.size + bb1.size + N * C1 * 13 * 13)
    return pl.pallas_call(
        _conv1_relu_pool_kernel,
        out_shape=jax.ShapeDtypeStruct((N, C1, 13, 13), jnp.float32),
        grid=(N, G),
        in_specs=[
            pl.BlockSpec((1, 16, 13, 13), lambda n, g: (n, 0, 0, 0)),
            pl.BlockSpec((9, cg, 13, 13), lambda n, g: (0, g, 0, 0)),
            pl.BlockSpec((cg, 13, 13), lambda n, g: (g, 0, 0)),
        ],
        out_specs=pl.BlockSpec((1, cg, 13, 13), lambda n, g: (n, g, 0, 0)),
        compiler_params=_compiler_params(2),
        cost_estimate=pl.CostEstimate(flops=flops, transcendentals=0,
                                      bytes_accessed=bytes_accessed),
    )(xs, wb1, bb1)


# ----------------------------------------------------------------------------
# Kernel 2: generic MXU matmul + bias (+ ReLU), bf16 in / f32 accumulate.
# ----------------------------------------------------------------------------
def _matmul_bias_act_kernel(x_ref, w_ref, b_ref, o_ref, *, apply_relu):
    acc = jnp.dot(x_ref[...], w_ref[...], preferred_element_type=jnp.float32)
    acc = acc + b_ref[...]               # f32 epilogue (VPU-friendly on v5e too)
    if apply_relu:
        acc = jnp.maximum(acc, 0.0)
    o_ref[...] = acc


def matmul_bias_act(x_bf16, w_bf16, b_f32, *, apply_relu, tile_m=512):
    """relu?(x @ w + b).  M-tiled grid; no padding copies (Mosaic pads tiles)."""
    M, K = x_bf16.shape
    _, Nout = w_bf16.shape
    tm = M if M <= tile_m else tile_m          # cap tile: flat VMEM vs. batch
    grid = (pl.cdiv(M, tm),)
    flops = 2 * M * K * Nout + 2 * M * Nout
    bytes_accessed = 2 * (M * K + K * Nout) + 4 * (M * Nout + Nout)
    return pl.pallas_call(
        functools.partial(_matmul_bias_act_kernel, apply_relu=apply_relu),
        out_shape=jax.ShapeDtypeStruct((M, Nout), jnp.float32),
        grid=grid,
        in_specs=[
            pl.BlockSpec((tm, K), lambda m: (m, 0)),
            pl.BlockSpec((K, Nout), lambda m: (0, 0)),
            pl.BlockSpec((1, Nout), lambda m: (0, 0)),
        ],
        out_specs=pl.BlockSpec((tm, Nout), lambda m: (m, 0)),
        compiler_params=_compiler_params(1),
        cost_estimate=pl.CostEstimate(flops=flops, transcendentals=0,
                                      bytes_accessed=bytes_accessed),
    )(x_bf16, w_bf16, b_f32)


# ----------------------------------------------------------------------------
# Kernel 3: 2x2 max-pool (lane-dense corners) + fc1 + ReLU + fc2, fused head.
# ----------------------------------------------------------------------------
def _pool_fc_head_kernel(a_ref, b_ref, c_ref, d_ref,
                         w1_ref, b1_ref, w2_ref, b2_ref, o_ref):
    f = jnp.maximum(jnp.maximum(a_ref[...], b_ref[...]),
                    jnp.maximum(c_ref[...], d_ref[...]))           # [TB, 1600] f32
    h = jnp.dot(f.astype(jnp.bfloat16), w1_ref[...],
                preferred_element_type=jnp.float32) + b1_ref[...]
    h = jnp.maximum(h, 0.0)
    o_ref[...] = jnp.dot(h.astype(jnp.bfloat16), w2_ref[...],
                         preferred_element_type=jnp.float32) + b2_ref[...]


def pool_fc_head(corners, w1, b1, w2, b2, *, tile_rows=256):
    """corners: 4 x [N, 1600] f32 (pool window corners, already in the exact
    flattened fc1 input order) -> logits [N, Nout]."""
    N, F = corners[0].shape
    H1 = w1.shape[1]
    Nout = w2.shape[1]
    tb = N if N <= tile_rows else tile_rows
    grid = (pl.cdiv(N, tb),)
    flops = 2 * N * (F * H1 + H1 * Nout) + 4 * N * F
    bytes_accessed = 4 * 4 * N * F + 2 * (F * H1 + H1 * Nout) + 4 * (N * Nout)
    row_spec = pl.BlockSpec((tb, F), lambda i: (i, 0))
    return pl.pallas_call(
        _pool_fc_head_kernel,
        out_shape=jax.ShapeDtypeStruct((N, Nout), jnp.float32),
        grid=grid,
        in_specs=[row_spec, row_spec, row_spec, row_spec,
                  pl.BlockSpec((F, H1), lambda i: (0, 0)),
                  pl.BlockSpec((1, H1), lambda i: (0, 0)),
                  pl.BlockSpec((H1, Nout), lambda i: (0, 0)),
                  pl.BlockSpec((1, Nout), lambda i: (0, 0))],
        out_specs=pl.BlockSpec((tb, Nout), lambda i: (i, 0)),
        compiler_params=_compiler_params(1),
        cost_estimate=pl.CostEstimate(flops=flops, transcendentals=0,
                                      bytes_accessed=bytes_accessed),
    )(*corners, w1, b1, w2, b2)


# ----------------------------------------------------------------------------
# Constant prep (once, outside jit) and the jitted forward pass.
# ----------------------------------------------------------------------------
def prepare_params(params):
    """Weight re-layouts done once: transposes, spatial broadcast for the VPU
    conv1 kernel, bf16 casts for the MXU operands."""
    w1t = params["conv1_w"][:, 0].reshape(32, 9).T                 # [9, 32] tap-major
    wb1 = jnp.broadcast_to(w1t[:, :, None, None], (9, 32, 13, 13)).astype(jnp.float32)
    bb1 = jnp.broadcast_to(params["conv1_b"][:, None, None], (32, 13, 13)).astype(jnp.float32)

    w2m = params["conv2_w"].reshape(64, 32 * 9).T.astype(jnp.bfloat16)   # [288, 64]
    b2m = params["conv2_b"].reshape(1, 64).astype(jnp.float32)

    wf1 = params["fc1_w"].T.astype(jnp.bfloat16)                   # [1600, 128]
    bf1 = params["fc1_b"].reshape(1, 128).astype(jnp.float32)
    wf2 = params["fc2_w"].T.astype(jnp.bfloat16)                   # [128, 10]
    bf2 = params["fc2_b"].reshape(1, 10).astype(jnp.float32)
    return dict(wb1=wb1, bb1=bb1, w2m=w2m, b2m=b2m,
                wf1=wf1, bf1=bf1, wf2=wf2, bf2=bf2)


def net_forward(x, prep):
    """x: [N, 1, 28, 28] f32 -> logits [N, 10]."""
    N = x.shape[0]
    x_nhw = x.reshape(N, 28, 28)                                   # Cin == 1

    # conv1 + bias + ReLU + pool (fused Pallas kernel, VPU 9-tap, no im2col).
    h1 = conv1_relu_pool(x_nhw, prep["wb1"], prep["bb1"])          # [N, 32, 13, 13]

    # conv2 as im2col matmul (MXU, bf16 operands / f32 accumulate) + bias+ReLU.
    # TODO(synk): pull this im2col gather inside the Pallas kernel (9 shifted
    # VMEM reads accumulated into the MXU) instead of XLA stack/transpose.
    patches = [h1[:, :, i:i + 11, j:j + 11] for i in range(3) for j in range(3)]
    cols = jnp.stack(patches, axis=-1)                             # [N, 32, 11, 11, 9]
    cols = cols.transpose(0, 2, 3, 1, 4).reshape(N * 121, 32 * 9)  # (ci, i, j) K-order
    cols = cols.astype(jnp.bfloat16)
    y2 = matmul_bias_act(cols, prep["w2m"], prep["b2m"], apply_relu=True)
    y2 = y2.reshape(N, 11, 11, 64).transpose(0, 3, 1, 2)           # [N, 64, 11, 11]

    # 2x2 pool corners flattened to the exact fc1 input layout (lane-dense
    # 1600 columns), then pool + fc1 + ReLU + fc2 in one fused kernel.
    c00 = y2[:, :, 0:10:2, 0:10:2].reshape(N, 1600)
    c01 = y2[:, :, 0:10:2, 1:10:2].reshape(N, 1600)
    c10 = y2[:, :, 1:10:2, 0:10:2].reshape(N, 1600)
    c11 = y2[:, :, 1:10:2, 1:10:2].reshape(N, 1600)
    return pool_fc_head((c00, c01, c10, c11),
                        prep["wf1"], prep["bf1"], prep["wf2"], prep["bf2"])


# ----------------------------------------------------------------------------
# Pure-JAX f32 reference (sanity check for the Pallas path).
# ----------------------------------------------------------------------------
def _ref_pool(x):
    N, C, H, W = x.shape
    Ho, Wo = H // 2, W // 2
    a = x[:, :, 0:2 * Ho:2, 0:2 * Wo:2]
    b = x[:, :, 0:2 * Ho:2, 1:2 * Wo:2]
    c = x[:, :, 1:2 * Ho:2, 0:2 * Wo:2]
    d = x[:, :, 1:2 * Ho:2, 1:2 * Wo:2]
    return jnp.maximum(jnp.maximum(a, b), jnp.maximum(c, d))


def reference_forward(x, params):
    dn = ("NCHW", "OIHW", "NCHW")
    hp = jax.lax.Precision.HIGHEST
    y = jax.lax.conv_general_dilated(x, params["conv1_w"], (1, 1), "VALID",
                                     dimension_numbers=dn, precision=hp)
    y = jnp.maximum(y + params["conv1_b"][None, :, None, None], 0.0)
    y = _ref_pool(y)
    y = jax.lax.conv_general_dilated(y, params["conv2_w"], (1, 1), "VALID",
                                     dimension_numbers=dn, precision=hp)
    y = jnp.maximum(y + params["conv2_b"][None, :, None, None], 0.0)
    y = _ref_pool(y)
    f = y.reshape(x.shape[0], 64 * 5 * 5)
    h = jnp.maximum(f @ params["fc1_w"].T + params["fc1_b"], 0.0)
    return h @ params["fc2_w"].T + params["fc2_b"]


# ----------------------------------------------------------------------------
# Deterministic parameter init (PyTorch-default-style uniform bounds)
# ----------------------------------------------------------------------------
def init_params(key):
    ks = jax.random.split(key, 8)

    def u(k, shape, fan_in):
        bound = 1.0 / jnp.sqrt(float(fan_in))
        return jax.random.uniform(k, shape, jnp.float32, -bound, bound)

    return {
        "conv1_w": u(ks[0], (32, 1, 3, 3), 1 * 3 * 3),
        "conv1_b": u(ks[1], (32,), 1 * 3 * 3),
        "conv2_w": u(ks[2], (64, 32, 3, 3), 32 * 3 * 3),
        "conv2_b": u(ks[3], (64,), 32 * 3 * 3),
        "fc1_w":   u(ks[4], (128, 64 * 5 * 5), 64 * 5 * 5),
        "fc1_b":   u(ks[5], (128,), 64 * 5 * 5),
        "fc2_w":   u(ks[6], (10, 128), 128),
        "fc2_b":   u(ks[7], (10,), 128),
    }


if __name__ == "__main__":
    root = jax.random.PRNGKey(0)
    k_x, k_p = jax.random.split(root)
    x = jax.random.normal(k_x, (2, 1, 28, 28), jnp.float32)   # batch=2, MNIST-sized
    params = init_params(k_p)
    prep = prepare_params(params)        # constant re-layouts, outside jit

    fwd = jax.jit(net_forward)
    out = jax.block_until_ready(fwd(x, prep))
    assert out.shape == (2, 10), out.shape

    ref = reference_forward(x, params)
    max_err = float(jnp.max(jnp.abs(out - ref)))
    # conv2 / fc matmuls use bf16 operands (f32 accumulate) -> looser tolerance.
    assert max_err < 1e-1, f"mismatch vs reference: {max_err}"

    print("KERNEL_OK")
</pallas_src>

<mosaic_0001>
module attributes {stable_mosaic.version = 11 : i64} {
  func.func @_conv1_relu_pool_kernel(%arg0: i32, %arg1: i32, %arg2: memref<1x16x13x13xf32, #tpu.memory_space<vmem>>, %arg3: memref<9x8x13x13xf32, #tpu.memory_space<vmem>>, %arg4: memref<8x13x13xf32, #tpu.memory_space<vmem>>, %arg5: memref<1x8x13x13xf32, #tpu.memory_space<vmem>>) attributes {dimension_semantics = [#tpu.dimension_semantics<parallel>, #tpu.dimension_semantics<parallel>], iteration_bounds = array<i64: 2, 4>, scalar_prefetch = 0 : i64, scratch_operands = 0 : i64, tpu.core_type = #tpu.core_type<tc>, window_params = [{transform_indices = @transform_0, window_bounds = array<i64: 1, 16, 13, 13>}, {transform_indices = @transform_1, window_bounds = array<i64: 9, 8, 13, 13>}, {transform_indices = @transform_2, window_bounds = array<i64: 8, 13, 13>}, {transform_indices = @transform_3, window_bounds = array<i64: 1, 8, 13, 13>}]} {
    %c0 = arith.constant 0 : index
    %c0_0 = arith.constant 0 : index
    %c0_1 = arith.constant 0 : index
    %c0_2 = arith.constant 0 : index
    %0 = vector.load %arg2[%c0, %c0_0, %c0_1, %c0_2] : memref<1x16x13x13xf32, #tpu.memory_space<vmem>>, vector<1x1x13x13xf32>
    %1 = vector.shape_cast %0 : vector<1x1x13x13xf32> to vector<13x13xf32>
    %c0_3 = arith.constant 0 : index
    %c0_4 = arith.constant 0 : index
    %c0_5 = arith.constant 0 : index
    %c0_6 = arith.constant 0 : index
    %2 = vector.load %arg3[%c0_3, %c0_4, %c0_5, %c0_6] : memref<9x8x13x13xf32, #tpu.memory_space<vmem>>, vector<1x8x13x13xf32>
    %3 = vector.shape_cast %2 : vector<1x8x13x13xf32> to vector<8x13x13xf32>
    %4 = vector.shape_cast %1 : vector<13x13xf32> to vector<1x13x13xf32>
    %5 = vector.broadcast %4 : vector<1x13x13xf32> to vector<8x13x13xf32>
    %6 = arith.mulf %3, %5 : vector<8x13x13xf32>
    %c0_7 = arith.constant 0 : index
    %c1 = arith.constant 1 : index
    %c0_8 = arith.constant 0 : index
    %c0_9 = arith.constant 0 : index
    %7 = vector.load %arg2[%c0_7, %c1, %c0_8, %c0_9] : memref<1x16x13x13xf32, #tpu.memory_space<vmem>>, vector<1x1x13x13xf32>
    %8 = vector.shape_cast %7 : vector<1x1x13x13xf32> to vector<13x13xf32>
    %c1_10 = arith.constant 1 : index
    %c0_11 = arith.constant 0 : index
    %c0_12 = arith.constant 0 : index
    %c0_13 = arith.constant 0 : index
    %9 = vector.load %arg3[%c1_10, %c0_11, %c0_12, %c0_13] : memref<9x8x13x13xf32, #tpu.memory_space<vmem>>, vector<1x8x13x13xf32>
    %10 = vector.shape_cast %9 : vector<1x8x13x13xf32> to vector<8x13x13xf32>
    %11 = vector.shape_cast %8 : vector<13x13xf32> to vector<1x13x13xf32>
    %12 = vector.broadcast %11 : vector<1x13x13xf32> to vector<8x13x13xf32>
    %13 = arith.mulf %10, %12 : vector<8x13x13xf32>
    %14 = arith.addf %6, %13 : vector<8x13x13xf32>
    %c0_14 = arith.constant 0 : index
    %c2 = arith.constant 2 : index
    %c0_15 = arith.constant 0 : index
    %c0_16 = arith.constant 0 : index
    %15 = vector.load %arg2[%c0_14, %c2, %c0_15, %c0_16] : memref<1x16x13x13xf32, #tpu.memory_space<vmem>>, vector<1x1x13x13xf32>
    %16 = vector.shape_cast %15 : vector<1x1x13x13xf32> to vector<13x13xf32>
    %c2_17 = arith.constant 2 : index
    %c0_18 = arith.constant 0 : index
    %c0_19 = arith.constant 0 : index
    %c0_20 = arith.constant 0 : index
    %17 = vector.load %arg3[%c2_17, %c0_18, %c0_19, %c0_20] : memref<9x8x13x13xf32, #tpu.memory_space<vmem>>, vector<1x8x13x13xf32>
    %18 = vector.shape_cast %17 : vector<1x8x13x13xf32> to vector<8x13x13xf32>
    %19 = vector.shape_cast %16 : vector<13x13xf32> to vector<1x13x13xf32>
    %20 = vector.broadcast %19 : vector<1x13x13xf32> to vector<8x13x13xf32>
    %21 = arith.mulf %18, %20 : vector<8x13x13xf32>
    %22 = arith.addf %14, %21 : vector<8x13x13xf32>
    %c0_21 = arith.constant 0 : index
    %c4 = arith.constant 4 : index
    %c0_22 = arith.constant 0 : index
    %c0_23 = arith.constant 0 : index
    %23 = vector.load %arg2[%c0_21, %c4, %c0_22, %c0_23] : memref<1x16x13x13xf32, #tpu.memory_space<vmem>>, vector<1x1x13x13xf32>
    %24 = vector.shape_cast %23 : vector<1x1x13x13xf32> to vector<13x13xf32>
    %c3 = arith.constant 3 : index
    %c0_24 = arith.constant 0 : index
    %c0_25 = arith.constant 0 : index
    %c0_26 = arith.constant 0 : index
    %25 = vector.load %arg3[%c3, %c0_24, %c0_25, %c0_26] : memref<9x8x13x13xf32, #tpu.memory_space<vmem>>, vector<1x8x13x13xf32>
    %26 = vector.shape_cast %25 : vector<1x8x13x13xf32> to vector<8x13x13xf32>
    %27 = vector.shape_cast %24 : vector<13x13xf32> to vector<1x13x13xf32>
    %28 = vector.broadcast %27 : vector<1x13x13xf32> to vector<8x13x13xf32>
    %29 = arith.mulf %26, %28 : vector<8x13x13xf32>
    %30 = arith.addf %22, %29 : vector<8x13x13xf32>
    %c0_27 = arith.constant 0 : index
    %c5 = arith.constant 5 : index
    %c0_28 = arith.constant 0 : index
    %c0_29 = arith.constant 0 : index
    %31 = vector.load %arg2[%c0_27, %c5, %c0_28, %c0_29] : memref<1x16x13x13xf32, #tpu.memory_space<vmem>>, vector<1x1x13x13xf32>
    %32 = vector.shape_cast %31 : vector<1x1x13x13xf32> to vector<13x13xf32>
    %c4_30 = arith.constant 4 : index
    %c0_31 = arith.constant 0 : index
    %c0_32 = arith.constant 0 : index
    %c0_33 = arith.constant 0 : index
    %33 = vector.load %arg3[%c4_30, %c0_31, %c0_32, %c0_33] : memref<9x8x13x13xf32, #tpu.memory_space<vmem>>, vector<1x8x13x13xf32>
    %34 = vector.shape_cast %33 : vector<1x8x13x13xf32> to vector<8x13x13xf32>
    %35 = vector.shape_cast %32 : vector<13x13xf32> to vector<1x13x13xf32>
    %36 = vector.broadcast %35 : vector<1x13x13xf32> to vector<8x13x13xf32>
    %37 = arith.mulf %34, %36 : vector<8x13x13xf32>
    %38 = arith.addf %30, %37 : vector<8x13x13xf32>
    %c0_34 = arith.constant 0 : index
    %c6 = arith.constant 6 : index
    %c0_35 = arith.constant 0 : index
    %c0_36 = arith.constant 0 : index
    %39 = vector.load %arg2[%c0_34, %c6, %c0_35, %c0_36] : memref<1x16x13x13xf32, #tpu.memory_space<vmem>>, vector<1x1x13x13xf32>
    %40 = vector.shape_cast %39 : vector<1x1x13x13xf32> to vector<13x13xf32>
    %c5_37 = arith.constant 5 : index
    %c0_38 = arith.constant 0 : index
    %c0_39 = arith.constant 0 : index
    %c0_40 = arith.constant 0 : index
    %41 = vector.load %arg3[%c5_37, %c0_38, %c0_39, %c0_40] : memref<9x8x13x13xf32, #tpu.memory_space<vmem>>, vector<1x8x13x13xf32>
    %42 = vector.shape_cast %41 : vector<1x8x13x13xf32> to vector<8x13x13xf32>
    %43 = vector.shape_cast %40 : vector<13x13xf32> to vector<1x13x13xf32>
    %44 = vector.broadcast %43 : vector<1x13x13xf32> to vector<8x13x13xf32>
    %45 = arith.mulf %42, %44 : vector<8x13x13xf32>
    %46 = arith.addf %38, %45 : vector<8x13x13xf32>
    %c0_41 = arith.constant 0 : index
    %c8 = arith.constant 8 : index
    %c0_42 = arith.constant 0 : index
    %c0_43 = arith.constant 0 : index
    %47 = vector.load %arg2[%c0_41, %c8, %c0_42, %c0_43] : memref<1x16x13x13xf32, #tpu.memory_space<vmem>>, vector<1x1x13x13xf32>
    %48 = vector.shape_cast %47 : vector<1x1x13x13xf32> to vector<13x13xf32>
    %c6_44 = arith.constant 6 : index
    %c0_45 = arith.constant 0 : index
    %c0_46 = arith.constant 0 : index
    %c0_47 = arith.constant 0 : index
    %49 = vector.load %arg3[%c6_44, %c0_45, %c0_46, %c0_47] : memref<9x8x13x13xf32, #tpu.memory_space<vmem>>, vector<1x8x13x13xf32>
    %50 = vector.shape_cast %49 : vector<1x8x13x13xf32> to vector<8x13x13xf32>
    %51 = vector.shape_cast %48 : vector<13x13xf32> to vector<1x13x13xf32>
    %52 = vector.broadcast %51 : vector<1x13x13xf32> to vector<8x13x13xf32>
    %53 = arith.mulf %50, %52 : vector<8x13x13xf32>
    %54 = arith.addf %46, %53 : vector<8x13x13xf32>
    %c0_48 = arith.constant 0 : index
    %c9 = arith.constant 9 : index
    %c0_49 = arith.constant 0 : index
    %c0_50 = arith.constant 0 : index
    %55 = vector.load %arg2[%c0_48, %c9, %c0_49, %c0_50] : memref<1x16x13x13xf32, #tpu.memory_space<vmem>>, vector<1x1x13x13xf32>
    %56 = vector.shape_cast %55 : vector<1x1x13x13xf32> to vector<13x13xf32>
    %c7 = arith.constant 7 : index
    %c0_51 = arith.constant 0 : index
    %c0_52 = arith.constant 0 : index
    %c0_53 = arith.constant 0 : index
    %57 = vector.load %arg3[%c7, %c0_51, %c0_52, %c0_53] : memref<9x8x13x13xf32, #tpu.memory_space<vmem>>, vector<1x8x13x13xf32>
    %58 = vector.shape_cast %57 : vector<1x8x13x13xf32> to vector<8x13x13xf32>
    %59 = vector.shape_cast %56 : vector<13x13xf32> to vector<1x13x13xf32>
    %60 = vector.broadcast %59 : vector<1x13x13xf32> to vector<8x13x13xf32>
    %61 = arith.mulf %58, %60 : vector<8x13x13xf32>
    %62 = arith.addf %54, %61 : vector<8x13x13xf32>
    %c0_54 = arith.constant 0 : index
    %c10 = arith.constant 10 : index
    %c0_55 = arith.constant 0 : index
    %c0_56 = arith.constant 0 : index
    %63 = vector.load %arg2[%c0_54, %c10, %c0_55, %c0_56] : memref<1x16x13x13xf32, #tpu.memory_space<vmem>>, vector<1x1x13x13xf32>
    %64 = vector.shape_cast %63 : vector<1x1x13x13xf32> to vector<13x13xf32>
    %c8_57 = arith.constant 8 : index
    %c0_58 = arith.constant 0 : index
    %c0_59 = arith.constant 0 : index
    %c0_60 = arith.constant 0 : index
    %65 = vector.load %arg3[%c8_57, %c0_58, %c0_59, %c0_60] : memref<9x8x13x13xf32, #tpu.memory_space<vmem>>, vector<1x8x13x13xf32>
    %66 = vector.shape_cast %65 : vector<1x8x13x13xf32> to vector<8x13x13xf32>
    %67 = vector.shape_cast %64 : vector<13x13xf32> to vector<1x13x13xf32>
    %68 = vector.broadcast %67 : vector<1x13x13xf32> to vector<8x13x13xf32>
    %69 = arith.mulf %66, %68 : vector<8x13x13xf32>
    %70 = arith.addf %62, %69 : vector<8x13x13xf32>
    %c0_61 = arith.constant 0 : index
    %c1_62 = arith.constant 1 : index
    %c0_63 = arith.constant 0 : index
    %c0_64 = arith.constant 0 : index
    %71 = vector.load %arg2[%c0_61, %c1_62, %c0_63, %c0_64] : memref<1x16x13x13xf32, #tpu.memory_space<vmem>>, vector<1x1x13x13xf32>
    %72 = vector.shape_cast %71 : vector<1x1x13x13xf32> to vector<13x13xf32>
    %c0_65 = arith.constant 0 : index
    %c0_66 = arith.constant 0 : index
    %c0_67 = arith.constant 0 : index
    %c0_68 = arith.constant 0 : index
    %73 = vector.load %arg3[%c0_65, %c0_66, %c0_67, %c0_68] : memref<9x8x13x13xf32, #tpu.memory_space<vmem>>, vector<1x8x13x13xf32>
    %74 = vector.shape_cast %73 : vector<1x8x13x13xf32> to vector<8x13x13xf32>
    %75 = vector.shape_cast %72 : vector<13x13xf32> to vector<1x13x13xf32>
    %76 = vector.broadcast %75 : vector<1x13x13xf32> to vector<8x13x13xf32>
    %77 = arith.mulf %74, %76 : vector<8x13x13xf32>
    %c0_69 = arith.constant 0 : index
    %c2_70 = arith.constant 2 : index
    %c0_71 = arith.constant 0 : index
    %c0_72 = arith.constant 0 : index
    %78 = vector.load %arg2[%c0_69, %c2_70, %c0_71, %c0_72] : memref<1x16x13x13xf32, #tpu.memory_space<vmem>>, vector<1x1x13x13xf32>
    %79 = vector.shape_cast %78 : vector<1x1x13x13xf32> to vector<13x13xf32>
    %c1_73 = arith.constant 1 : index
    %c0_74 = arith.constant 0 : index
    %c0_75 = arith.constant 0 : index
    %c0_76 = arith.constant 0 : index
    %80 = vector.load %arg3[%c1_73, %c0_74, %c0_75, %c0_76] : memref<9x8x13x13xf32, #tpu.memory_space<vmem>>, vector<1x8x13x13xf32>
    %81 = vector.shape_cast %80 : vector<1x8x13x13xf32> to vector<8x13x13xf32>
    %82 = vector.shape_cast %79 : vector<13x13xf32> to vector<1x13x13xf32>
    %83 = vector.broadcast %82 : vector<1x13x13xf32> to vector<8x13x13xf32>
    %84 = arith.mulf %81, %83 : vector<8x13x13xf32>
    %85 = arith.addf %77, %84 : vector<8x13x13xf32>
    %c0_77 = arith.constant 0 : index
    %c3_78 = arith.constant 3 : index
    %c0_79 = arith.constant 0 : index
    %c0_80 = arith.constant 0 : index
    %86 = vector.load %arg2[%c0_77, %c3_78, %c0_79, %c0_80] : memref<1x16x13x13xf32, #tpu.memory_space<vmem>>, vector<1x1x13x13xf32>
    %87 = vector.shape_cast %86 : vector<1x1x13x13xf32> to vector<13x13xf32>
    %c2_81 = arith.constant 2 : index
    %c0_82 = arith.constant 0 : index
    %c0_83 = arith.constant 0 : index
    %c0_84 = arith.constant 0 : index
    %88 = vector.load %arg3[%c2_81, %c0_82, %c0_83, %c0_84] : memref<9x8x13x13xf32, #tpu.memory_space<vmem>>, vector<1x8x13x13xf32>
    %89 = vector.shape_cast %88 : vector<1x8x13x13xf32> to vector<8x13x13xf32>
    %90 = vector.shape_cast %87 : vector<13x13xf32> to vector<1x13x13xf32>
    %91 = vector.broadcast %90 : vector<1x13x13xf32> to vector<8x13x13xf32>
    %92 = arith.mulf %89, %91 : vector<8x13x13xf32>
    %93 = arith.addf %85, %92 : vector<8x13x13xf32>
    %c0_85 = arith.constant 0 : index
    %c5_86 = arith.constant 5 : index
    %c0_87 = arith.constant 0 : index
    %c0_88 = arith.constant 0 : index
    %94 = vector.load %arg2[%c0_85, %c5_86, %c0_87, %c0_88] : memref<1x16x13x13xf32, #tpu.memory_space<vmem>>, vector<1x1x13x13xf32>
    %95 = vector.shape_cast %94 : vector<1x1x13x13xf32> to vector<13x13xf32>
    %c3_89 = arith.constant 3 : index
    %c0_90 = arith.constant 0 : index
    %c0_91 = arith.constant 0 : index
    %c0_92 = arith.constant 0 : index
    %96 = vector.load %arg3[%c3_89, %c0_90, %c0_91, %c0_92] : memref<9x8x13x13xf32, #tpu.memory_space<vmem>>, vector<1x8x13x13xf32>
    %97 = vector.shape_cast %96 : vector<1x8x13x13xf32> to vector<8x13x13xf32>
    %98 = vector.shape_cast %95 : vector<13x13xf32> to vector<1x13x13xf32>
    %99 = vector.broadcast %98 : vector<1x13x13xf32> to vector<8x13x13xf32>
    %100 = arith.mulf %97, %99 : vector<8x13x13xf32>
    %101 = arith.addf %93, %100 : vector<8x13x13xf32>
    %c0_93 = arith.constant 0 : index
    %c6_94 = arith.constant 6 : index
    %c0_95 = arith.constant 0 : index
    %c0_96 = arith.constant 0 : index
    %102 = vector.load %arg2[%c0_93, %c6_94, %c0_95, %c0_96] : memref<1x16x13x13xf32, #tpu.memory_space<vmem>>, vector<1x1x13x13xf32>
    %103 = vector.shape_cast %102 : vector<1x1x13x13xf32> to vector<13x13xf32>
    %c4_97 = arith.constant 4 : index
    %c0_98 = arith.constant 0 : index
    %c0_99 = arith.constant 0 : index
    %c0_100 = arith.constant 0 : index
    %104 = vector.load %arg3[%c4_97, %c0_98, %c0_99, %c0_100] : memref<9x8x13x13xf32, #tpu.memory_space<vmem>>, vector<1x8x13x13xf32>
    %105 = vector.shape_cast %104 : vector<1x8x13x13xf32> to vector<8x13x13xf32>
    %106 = vector.shape_cast %103 : vector<13x13xf32> to vector<1x13x13xf32>
    %107 = vector.broadcast %106 : vector<1x13x13xf32> to vector<8x13x13xf32>
    %108 = arith.mulf %105, %107 : vector<8x13x13xf32>
    %109 = arith.addf %101, %108 : vector<8x13x13xf32>
    %c0_101 = arith.constant 0 : index
    %c7_102 = arith.constant 7 : index
    %c0_103 = arith.constant 0 : index
    %c0_104 = arith.constant 0 : index
    %110 = vector.load %arg2[%c0_101, %c7_102, %c0_103, %c0_104] : memref<1x16x13x13xf32, #tpu.memory_space<vmem>>, vector<1x1x13x13xf32>
    %111 = vector.shape_cast %110 : vector<1x1x13x13xf32> to vector<13x13xf32>
    %c5_105 = arith.constant 5 : index
    %c0_106 = arith.constant 0 : index
    %c0_107 = arith.constant 0 : index
    %c0_108 = arith.constant 0 : index
    %112 = vector.load %arg3[%c5_105, %c0_106, %c0_107, %c0_108] : memref<9x8x13x13xf32, #tpu.memory_space<vmem>>, vector<1x8x13x13xf32>
    %113 = vector.shape_cast %112 : vector<1x8x13x13xf32> to vector<8x13x13xf32>
    %114 = vector.shape_cast %111 : vector<13x13xf32> to vector<1x13x13xf32>
    %115 = vector.broadcast %114 : vector<1x13x13xf32> to vector<8x13x13xf32>
    %116 = arith.mulf %113, %115 : vector<8x13x13xf32>
    %117 = arith.addf %109, %116 : vector<8x13x13xf32>
    %c0_109 = arith.constant 0 : index
    %c9_110 = arith.constant 9 : index
    %c0_111 = arith.constant 0 : index
    %c0_112 = arith.constant 0 : index
    %118 = vector.load %arg2[%c0_109, %c9_110, %c0_111, %c0_112] : memref<1x16x13x13xf32, #tpu.memory_space<vmem>>, vector<1x1x13x13xf32>
    %119 = vector.shape_cast %118 : vector<1x1x13x13xf32> to vector<13x13xf32>
    %c6_113 = arith.constant 6 : index
    %c0_114 = arith.constant 0 : index
    %c0_115 = arith.constant 0 : index
    %c0_116 = arith.constant 0 : index
    %120 = vector.load %arg3[%c6_113, %c0_114, %c0_115, %c0_116] : memref<9x8x13x13xf32, #tpu.memory_space<vmem>>, vector<1x8x13x13xf32>
    %121 = vector.shape_cast %120 : vector<1x8x13x13xf32> to vector<8x13x13xf32>
    %122 = vector.shape_cast %119 : vector<13x13xf32> to vector<1x13x13xf32>
    %123 = vector.broadcast %122 : vector<1x13x13xf32> to vector<8x13x13xf32>
    %124 = arith.mulf %121, %123 : vector<8x13x13xf32>
    %125 = arith.addf %117, %124 : vector<8x13x13xf32>
    %c0_117 = arith.constant 0 : index
    %c10_118 = arith.constant 10 : index
    %c0_119 = arith.constant 0 : index
    %c0_120 = arith.constant 0 : index
    %126 = vector.load %arg2[%c0_117, %c10_118, %c0_119, %c0_120] : memref<1x16x13x13xf32, #tpu.memory_space<vmem>>, vector<1x1x13x13xf32>
    %127 = vector.shape_cast %126 : vector<1x1x13x13xf32> to vector<13x13xf32>
    %c7_121 = arith.constant 7 : index
    %c0_122 = arith.constant 0 : index
    %c0_123 = arith.constant 0 : index
    %c0_124 = arith.constant 0 : index
    %128 = vector.load %arg3[%c7_121, %c0_122, %c0_123, %c0_124] : memref<9x8x13x13xf32, #tpu.memory_space<vmem>>, vector<1x8x13x13xf32>
    %129 = vector.shape_cast %128 : vector<1x8x13x13xf32> to vector<8x13x13xf32>
    %130 = vector.shape_cast %127 : vector<13x13xf32> to vector<1x13x13xf32>
    %131 = vector.broadcast %130 : vector<1x13x13xf32> to vector<8x13x13xf32>
    %132 = arith.mulf %129, %131 : vector<8x13x13xf32>
    %133 = arith.addf %125, %132 : vector<8x13x13xf32>
    %c0_125 = arith.constant 0 : index
    %c11 = arith.constant 11 : index
    %c0_126 = arith.constant 0 : index
    %c0_127 = arith.constant 0 : index
    %134 = vector.load %arg2[%c0_125, %c11, %c0_126, %c0_127] : memref<1x16x13x13xf32, #tpu.memory_space<vmem>>, vector<1x1x13x13xf32>
    %135 = vector.shape_cast %134 : vector<1x1x13x13xf32> to vector<13x13xf32>
    %c8_128 = arith.constant 8 : index
    %c0_129 = arith.constant 0 : index
    %c0_130 = arith.constant 0 : index
    %c0_131 = arith.constant 0 : index
    %136 = vector.load %arg3[%c8_128, %c0_129, %c0_130, %c0_131] : memref<9x8x13x13xf32, #tpu.memory_space<vmem>>, vector<1x8x13x13xf32>
    %137 = vector.shape_cast %136 : vector<1x8x13x13xf32> to vector<8x13x13xf32>
    %138 = vector.shape_cast %135 : vector<13x13xf32> to vector<1x13x13xf32>
    %139 = vector.broadcast %138 : vector<1x13x13xf32> to vector<8x13x13xf32>
    %140 = arith.mulf %137, %139 : vector<8x13x13xf32>
    %141 = arith.addf %133, %140 : vector<8x13x13xf32>
    %142 = arith.maximumf %70, %141 : vector<8x13x13xf32>
    %c0_132 = arith.constant 0 : index
    %c4_133 = arith.constant 4 : index
    %c0_134 = arith.constant 0 : index
    %c0_135 = arith.constant 0 : index
    %143 = vector.load %arg2[%c0_132, %c4_133, %c0_134, %c0_135] : memref<1x16x13x13xf32, #tpu.memory_space<vmem>>, vector<1x1x13x13xf32>
    %144 = vector.shape_cast %143 : vector<1x1x13x13xf32> to vector<13x13xf32>
    %c0_136 = arith.constant 0 : index
    %c0_137 = arith.constant 0 : index
    %c0_138 = arith.constant 0 : index
    %c0_139 = arith.constant 0 : index
    %145 = vector.load %arg3[%c0_136, %c0_137, %c0_138, %c0_139] : memref<9x8x13x13xf32, #tpu.memory_space<vmem>>, vector<1x8x13x13xf32>
    %146 = vector.shape_cast %145 : vector<1x8x13x13xf32> to vector<8x13x13xf32>
    %147 = vector.shape_cast %144 : vector<13x13xf32> to vector<1x13x13xf32>
    %148 = vector.broadcast %147 : vector<1x13x13xf32> to vector<8x13x13xf32>
    %149 = arith.mulf %146, %148 : vector<8x13x13xf32>
    %c0_140 = arith.constant 0 : index
    %c5_141 = arith.constant 5 : index
    %c0_142 = arith.constant 0 : index
    %c0_143 = arith.constant 0 : index
    %150 = vector.load %arg2[%c0_140, %c5_141, %c0_142, %c0_143] : memref<1x16x13x13xf32, #tpu.memory_space<vmem>>, vector<1x1x13x13xf32>
    %151 = vector.shape_cast %150 : vector<1x1x13x13xf32> to vector<13x13xf32>
    %c1_144 = arith.constant 1 : index
    %c0_145 = arith.constant 0 : index
    %c0_146 = arith.constant 0 : index
    %c0_147 = arith.constant 0 : index
    %152 = vector.load %arg3[%c1_144, %c0_145, %c0_146, %c0_147] : memref<9x8x13x13xf32, #tpu.memory_space<vmem>>, vector<1x8x13x13xf32>
    %153 = vector.shape_cast %152 : vector<1x8x13x13xf32> to vector<8x13x13xf32>
    %154 = vector.shape_cast %151 : vector<13x13xf32> to vector<1x13x13xf32>
    %155 = vector.broadcast %154 : vector<1x13x13xf32> to vector<8x13x13xf32>
    %156 = arith.mulf %153, %155 : vector<8x13x13xf32>
    %157 = arith.addf %149, %156 : vector<8x13x13xf32>
    %c0_148 = arith.constant 0 : index
    %c6_149 = arith.constant 6 : index
    %c0_150 = arith.constant 0 : index
    %c0_151 = arith.constant 0 : index
    %158 = vector.load %arg2[%c0_148, %c6_149, %c0_150, %c0_151] : memref<1x16x13x13xf32, #tpu.memory_space<vmem>>, vector<1x1x13x13xf32>
    %159 = vector.shape_cast %158 : vector<1x1x13x13xf32> to vector<13x13xf32>
    %c2_152 = arith.constant 2 : index
    %c0_153 = arith.constant 0 : index
    %c0_154 = arith.constant 0 : index
    %c0_155 = arith.constant 0 : index
    %160 = vector.load %arg3[%c2_152, %c0_153, %c0_154, %c0_155] : memref<9x8x13x13xf32, #tpu.memory_space<vmem>>, vector<1x8x13x13xf32>
    %161 = vector.shape_cast %160 : vector<1x8x13x13xf32> to vector<8x13x13xf32>
    %162 = vector.shape_cast %159 : vector<13x13xf32> to vector<1x13x13xf32>
    %163 = vector.broadcast %162 : vector<1x13x13xf32> to vector<8x13x13xf32>
    %164 = arith.mulf %161, %163 : vector<8x13x13xf32>
    %165 = arith.addf %157, %164 : vector<8x13x13xf32>
    %c0_156 = arith.constant 0 : index
    %c8_157 = arith.constant 8 : index
    %c0_158 = arith.constant 0 : index
    %c0_159 = arith.constant 0 : index
    %166 = vector.load %arg2[%c0_156, %c8_157, %c0_158, %c0_159] : memref<1x16x13x13xf32, #tpu.memory_space<vmem>>, vector<1x1x13x13xf32>
    %167 = vector.shape_cast %166 : vector<1x1x13x13xf32> to vector<13x13xf32>
    %c3_160 = arith.constant 3 : index
    %c0_161 = arith.constant 0 : index
    %c0_162 = arith.constant 0 : index
    %c0_163 = arith.constant 0 : index
    %168 = vector.load %arg3[%c3_160, %c0_161, %c0_162, %c0_163] : memref<9x8x13x13xf32, #tpu.memory_space<vmem>>, vector<1x8x13x13xf32>
    %169 = vector.shape_cast %168 : vector<1x8x13x13xf32> to vector<8x13x13xf32>
    %170 = vector.shape_cast %167 : vector<13x13xf32> to vector<1x13x13xf32>
    %171 = vector.broadcast %170 : vector<1x13x13xf32> to vector<8x13x13xf32>
    %172 = arith.mulf %169, %171 : vector<8x13x13xf32>
    %173 = arith.addf %165, %172 : vector<8x13x13xf32>
    %c0_164 = arith.constant 0 : index
    %c9_165 = arith.constant 9 : index
    %c0_166 = arith.constant 0 : index
    %c0_167 = arith.constant 0 : index
    %174 = vector.load %arg2[%c0_164, %c9_165, %c0_166, %c0_167] : memref<1x16x13x13xf32, #tpu.memory_space<vmem>>, vector<1x1x13x13xf32>
    %175 = vector.shape_cast %174 : vector<1x1x13x13xf32> to vector<13x13xf32>
    %c4_168 = arith.constant 4 : index
    %c0_169 = arith.constant 0 : index
    %c0_170 = arith.constant 0 : index
    %c0_171 = arith.constant 0 : index
    %176 = vector.load %arg3[%c4_168, %c0_169, %c0_170, %c0_171] : memref<9x8x13x13xf32, #tpu.memory_space<vmem>>, vector<1x8x13x13xf32>
    %177 = vector.shape_cast %176 : vector<1x8x13x13xf32> to vector<8x13x13xf32>
    %178 = vector.shape_cast %175 : vector<13x13xf32> to vector<1x13x13xf32>
    %179 = vector.broadcast %178 : vector<1x13x13xf32> to vector<8x13x13xf32>
    %180 = arith.mulf %177, %179 : vector<8x13x13xf32>
    %181 = arith.addf %173, %180 : vector<8x13x13xf32>
    %c0_172 = arith.constant 0 : index
    %c10_173 = arith.constant 10 : index
    %c0_174 = arith.constant 0 : index
    %c0_175 = arith.constant 0 : index
    %182 = vector.load %arg2[%c0_172, %c10_173, %c0_174, %c0_175] : memref<1x16x13x13xf32, #tpu.memory_space<vmem>>, vector<1x1x13x13xf32>
    %183 = vector.shape_cast %182 : vector<1x1x13x13xf32> to vector<13x13xf32>
    %c5_176 = arith.constant 5 : index
    %c0_177 = arith.constant 0 : index
    %c0_178 = arith.constant 0 : index
    %c0_179 = arith.constant 0 : index
    %184 = vector.load %arg3[%c5_176, %c0_177, %c0_178, %c0_179] : memref<9x8x13x13xf32, #tpu.memory_space<vmem>>, vector<1x8x13x13xf32>
    %185 = vector.shape_cast %184 : vector<1x8x13x13xf32> to vector<8x13x13xf32>
    %186 = vector.shape_cast %183 : vector<13x13xf32> to vector<1x13x13xf32>
    %187 = vector.broadcast %186 : vector<1x13x13xf32> to vector<8x13x13xf32>
    %188 = arith.mulf %185, %187 : vector<8x13x13xf32>
    %189 = arith.addf %181, %188 : vector<8x13x13xf32>
    %c0_180 = arith.constant 0 : index
    %c12 = arith.constant 12 : index
    %c0_181 = arith.constant 0 : index
    %c0_182 = arith.constant 0 : index
    %190 = vector.load %arg2[%c0_180, %c12, %c0_181, %c0_182] : memref<1x16x13x13xf32, #tpu.memory_space<vmem>>, vector<1x1x13x13xf32>
    %191 = vector.shape_cast %190 : vector<1x1x13x13xf32> to vector<13x13xf32>
    %c6_183 = arith.constant 6 : index
    %c0_184 = arith.constant 0 : index
    %c0_185 = arith.constant 0 : index
    %c0_186 = arith.constant 0 : index
    %192 = vector.load %arg3[%c6_183, %c0_184, %c0_185, %c0_186] : memref<9x8x13x13xf32, #tpu.memory_space<vmem>>, vector<1x8x13x13xf32>
    %193 = vector.shape_cast %192 : vector<1x8x13x13xf32> to vector<8x13x13xf32>
    %194 = vector.shape_cast %191 : vector<13x13xf32> to vector<1x13x13xf32>
    %195 = vector.broadcast %194 : vector<1x13x13xf32> to vector<8x13x13xf32>
    %196 = arith.mulf %193, %195 : vector<8x13x13xf32>
    %197 = arith.addf %189, %196 : vector<8x13x13xf32>
    %c0_187 = arith.constant 0 : index
    %c13 = arith.constant 13 : index
    %c0_188 = arith.constant 0 : index
    %c0_189 = arith.constant 0 : index
    %198 = vector.load %arg2[%c0_187, %c13, %c0_188, %c0_189] : memref<1x16x13x13xf32, #tpu.memory_space<vmem>>, vector<1x1x13x13xf32>
    %199 = vector.shape_cast %198 : vector<1x1x13x13xf32> to vector<13x13xf32>
    %c7_190 = arith.constant 7 : index
    %c0_191 = arith.constant 0 : index
    %c0_192 = arith.constant 0 : index
    %c0_193 = arith.constant 0 : index
    %200 = vector.load %arg3[%c7_190, %c0_191, %c0_192, %c0_193] : memref<9x8x13x13xf32, #tpu.memory_space<vmem>>, vector<1x8x13x13xf32>
    %201 = vector.shape_cast %200 : vector<1x8x13x13xf32> to vector<8x13x13xf32>
    %202 = vector.shape_cast %199 : vector<13x13xf32> to vector<1x13x13xf32>
    %203 = vector.broadcast %202 : vector<1x13x13xf32> to vector<8x13x13xf32>
    %204 = arith.mulf %201, %203 : vector<8x13x13xf32>
    %205 = arith.addf %197, %204 : vector<8x13x13xf32>
    %c0_194 = arith.constant 0 : index
    %c14 = arith.constant 14 : index
    %c0_195 = arith.constant 0 : index
    %c0_196 = arith.constant 0 : index
    %206 = vector.load %arg2[%c0_194, %c14, %c0_195, %c0_196] : memref<1x16x13x13xf32, #tpu.memory_space<vmem>>, vector<1x1x13x13xf32>
    %207 = vector.shape_cast %206 : vector<1x1x13x13xf32> to vector<13x13xf32>
    %c8_197 = arith.constant 8 : index
    %c0_198 = arith.constant 0 : index
    %c0_199 = arith.constant 0 : index
    %c0_200 = arith.constant 0 : index
    %208 = vector.load %arg3[%c8_197, %c0_198, %c0_199, %c0_200] : memref<9x8x13x13xf32, #tpu.memory_space<vmem>>, vector<1x8x13x13xf32>
    %209 = vector.shape_cast %208 : vector<1x8x13x13xf32> to vector<8x13x13xf32>
    %210 = vector.shape_cast %207 : vector<13x13xf32> to vector<1x13x13xf32>
    %211 = vector.broadcast %210 : vector<1x13x13xf32> to vector<8x13x13xf32>
    %212 = arith.mulf %209, %211 : vector<8x13x13xf32>
    %213 = arith.addf %205, %212 : vector<8x13x13xf32>
    %214 = arith.maximumf %142, %213 : vector<8x13x13xf32>
    %c0_201 = arith.constant 0 : index
    %c5_202 = arith.constant 5 : index
    %c0_203 = arith.constant 0 : index
    %c0_204 = arith.constant 0 : index
    %215 = vector.load %arg2[%c0_201, %c5_202, %c0_203, %c0_204] : memref<1x16x13x13xf32, #tpu.memory_space<vmem>>, vector<1x1x13x13xf32>
    %216 = vector.shape_cast %215 : vector<1x1x13x13xf32> to vector<13x13xf32>
    %c0_205 = arith.constant 0 : index
    %c0_206 = arith.constant 0 : index
    %c0_207 = arith.constant 0 : index
    %c0_208 = arith.constant 0 : index
    %217 = vector.load %arg3[%c0_205, %c0_206, %c0_207, %c0_208] : memref<9x8x13x13xf32, #tpu.memory_space<vmem>>, vector<1x8x13x13xf32>
    %218 = vector.shape_cast %217 : vector<1x8x13x13xf32> to vector<8x13x13xf32>
    %219 = vector.shape_cast %216 : vector<13x13xf32> to vector<1x13x13xf32>
    %220 = vector.broadcast %219 : vector<1x13x13xf32> to vector<8x13x13xf32>
    %221 = arith.mulf %218, %220 : vector<8x13x13xf32>
    %c0_209 = arith.constant 0 : index
    %c6_210 = arith.constant 6 : index
    %c0_211 = arith.constant 0 : index
    %c0_212 = arith.constant 0 : index
    %222 = vector.load %arg2[%c0_209, %c6_210, %c0_211, %c0_212] : memref<1x16x13x13xf32, #tpu.memory_space<vmem>>, vector<1x1x13x13xf32>
    %223 = vector.shape_cast %222 : vector<1x1x13x13xf32> to vector<13x13xf32>
    %c1_213 = arith.constant 1 : index
    %c0_214 = arith.constant 0 : index
    %c0_215 = arith.constant 0 : index
    %c0_216 = arith.constant 0 : index
    %224 = vector.load %arg3[%c1_213, %c0_214, %c0_215, %c0_216] : memref<9x8x13x13xf32, #tpu.memory_space<vmem>>, vector<1x8x13x13xf32>
    %225 = vector.shape_cast %224 : vector<1x8x13x13xf32> to vector<8x13x13xf32>
    %226 = vector.shape_cast %223 : vector<13x13xf32> to vector<1x13x13xf32>
    %227 = vector.broadcast %226 : vector<1x13x13xf32> to vector<8x13x13xf32>
    %228 = arith.mulf %225, %227 : vector<8x13x13xf32>
    %229 = arith.addf %221, %228 : vector<8x13x13xf32>
    %c0_217 = arith.constant 0 : index
    %c7_218 = arith.constant 7 : index
    %c0_219 = arith.constant 0 : index
    %c0_220 = arith.constant 0 : index
    %230 = vector.load %arg2[%c0_217, %c7_218, %c0_219, %c0_220] : memref<1x16x13x13xf32, #tpu.memory_space<vmem>>, vector<1x1x13x13xf32>
    %231 = vector.shape_cast %230 : vector<1x1x13x13xf32> to vector<13x13xf32>
    %c2_221 = arith.constant 2 : index
    %c0_222 = arith.constant 0 : index
    %c0_223 = arith.constant 0 : index
    %c0_224 = arith.constant 0 : index
    %232 = vector.load %arg3[%c2_221, %c0_222, %c0_223, %c0_224] : memref<9x8x13x13xf32, #tpu.memory_space<vmem>>, vector<1x8x13x13xf32>
    %233 = vector.shape_cast %232 : vector<1x8x13x13xf32> to vector<8x13x13xf32>
    %234 = vector.shape_cast %231 : vector<13x13xf32> to vector<1x13x13xf32>
    %235 = vector.broadcast %234 : vector<1x13x13xf32> to vector<8x13x13xf32>
    %236 = arith.mulf %233, %235 : vector<8x13x13xf32>
    %237 = arith.addf %229, %236 : vector<8x13x13xf32>
    %c0_225 = arith.constant 0 : index
    %c9_226 = arith.constant 9 : index
    %c0_227 = arith.constant 0 : index
    %c0_228 = arith.constant 0 : index
    %238 = vector.load %arg2[%c0_225, %c9_226, %c0_227, %c0_228] : memref<1x16x13x13xf32, #tpu.memory_space<vmem>>, vector<1x1x13x13xf32>
    %239 = vector.shape_cast %238 : vector<1x1x13x13xf32> to vector<13x13xf32>
    %c3_229 = arith.constant 3 : index
    %c0_230 = arith.constant 0 : index
    %c0_231 = arith.constant 0 : index
    %c0_232 = arith.constant 0 : index
    %240 = vector.load %arg3[%c3_229, %c0_230, %c0_231, %c0_232] : memref<9x8x13x13xf32, #tpu.memory_space<vmem>>, vector<1x8x13x13xf32>
    %241 = vector.shape_cast %240 : vector<1x8x13x13xf32> to vector<8x13x13xf32>
    %242 = vector.shape_cast %239 : vector<13x13xf32> to vector<1x13x13xf32>
    %243 = vector.broadcast %242 : vector<1x13x13xf32> to vector<8x13x13xf32>
    %244 = arith.mulf %241, %243 : vector<8x13x13xf32>
    %245 = arith.addf %237, %244 : vector<8x13x13xf32>
    %c0_233 = arith.constant 0 : index
    %c10_234 = arith.constant 10 : index
    %c0_235 = arith.constant 0 : index
    %c0_236 = arith.constant 0 : index
    %246 = vector.load %arg2[%c0_233, %c10_234, %c0_235, %c0_236] : memref<1x16x13x13xf32, #tpu.memory_space<vmem>>, vector<1x1x13x13xf32>
    %247 = vector.shape_cast %246 : vector<1x1x13x13xf32> to vector<13x13xf32>
    %c4_237 = arith.constant 4 : index
    %c0_238 = arith.constant 0 : index
    %c0_239 = arith.constant 0 : index
    %c0_240 = arith.constant 0 : index
    %248 = vector.load %arg3[%c4_237, %c0_238, %c0_239, %c0_240] : memref<9x8x13x13xf32, #tpu.memory_space<vmem>>, vector<1x8x13x13xf32>
    %249 = vector.shape_cast %248 : vector<1x8x13x13xf32> to vector<8x13x13xf32>
    %250 = vector.shape_cast %247 : vector<13x13xf32> to vector<1x13x13xf32>
    %251 = vector.broadcast %250 : vector<1x13x13xf32> to vector<8x13x13xf32>
    %252 = arith.mulf %249, %251 : vector<8x13x13xf32>
    %253 = arith.addf %245, %252 : vector<8x13x13xf32>
    %c0_241 = arith.constant 0 : index
    %c11_242 = arith.constant 11 : index
    %c0_243 = arith.constant 0 : index
    %c0_244 = arith.constant 0 : index
    %254 = vector.load %arg2[%c0_241, %c11_242, %c0_243, %c0_244] : memref<1x16x13x13xf32, #tpu.memory_space<vmem>>, vector<1x1x13x13xf32>
    %255 = vector.shape_cast %254 : vector<1x1x13x13xf32> to vector<13x13xf32>
    %c5_245 = arith.constant 5 : index
    %c0_246 = arith.constant 0 : index
    %c0_247 = arith.constant 0 : index
    %c0_248 = arith.constant 0 : index
    %256 = vector.load %arg3[%c5_245, %c0_246, %c0_247, %c0_248] : memref<9x8x13x13xf32, #tpu.memory_space<vmem>>, vector<1x8x13x13xf32>
    %257 = vector.shape_cast %256 : vector<1x8x13x13xf32> to vector<8x13x13xf32>
    %258 = vector.shape_cast %255 : vector<13x13xf32> to vector<1x13x13xf32>
    %259 = vector.broadcast %258 : vector<1x13x13xf32> to vector<8x13x13xf32>
    %260 = arith.mulf %257, %259 : vector<8x13x13xf32>
    %261 = arith.addf %253, %260 : vector<8x13x13xf32>
    %c0_249 = arith.constant 0 : index
    %c13_250 = arith.constant 13 : index
    %c0_251 = arith.constant 0 : index
    %c0_252 = arith.constant 0 : index
    %262 = vector.load %arg2[%c0_249, %c13_250, %c0_251, %c0_252] : memref<1x16x13x13xf32, #tpu.memory_space<vmem>>, vector<1x1x13x13xf32>
    %263 = vector.shape_cast %262 : vector<1x1x13x13xf32> to vector<13x13xf32>
    %c6_253 = arith.constant 6 : index
    %c0_254 = arith.constant 0 : index
    %c0_255 = arith.constant 0 : index
    %c0_256 = arith.constant 0 : index
    %264 = vector.load %arg3[%c6_253, %c0_254, %c0_255, %c0_256] : memref<9x8x13x13xf32, #tpu.memory_space<vmem>>, vector<1x8x13x13xf32>
    %265 = vector.shape_cast %264 : vector<1x8x13x13xf32> to vector<8x13x13xf32>
    %266 = vector.shape_cast %263 : vector<13x13xf32> to vector<1x13x13xf32>
    %267 = vector.broadcast %266 : vector<1x13x13xf32> to vector<8x13x13xf32>
    %268 = arith.mulf %265, %267 : vector<8x13x13xf32>
    %269 = arith.addf %261, %268 : vector<8x13x13xf32>
    %c0_257 = arith.constant 0 : index
    %c14_258 = arith.constant 14 : index
    %c0_259 = arith.constant 0 : index
    %c0_260 = arith.constant 0 : index
    %270 = vector.load %arg2[%c0_257, %c14_258, %c0_259, %c0_260] : memref<1x16x13x13xf32, #tpu.memory_space<vmem>>, vector<1x1x13x13xf32>
    %271 = vector.shape_cast %270 : vector<1x1x13x13xf32> to vector<13x13xf32>
    %c7_261 = arith.constant 7 : index
    %c0_262 = arith.constant 0 : index
    %c0_263 = arith.constant 0 : index
    %c0_264 = arith.constant 0 : index
    %272 = vector.load %arg3[%c7_261, %c0_262, %c0_263, %c0_264] : memref<9x8x13x13xf32, #tpu.memory_space<vmem>>, vector<1x8x13x13xf32>
    %273 = vector.shape_cast %272 : vector<1x8x13x13xf32> to vector<8x13x13xf32>
    %274 = vector.shape_cast %271 : vector<13x13xf32> to vector<1x13x13xf32>
    %275 = vector.broadcast %274 : vector<1x13x13xf32> to vector<8x13x13xf32>
    %276 = arith.mulf %273, %275 : vector<8x13x13xf32>
    %277 = arith.addf %269, %276 : vector<8x13x13xf32>
    %c0_265 = arith.constant 0 : index
    %c15 = arith.constant 15 : index
    %c0_266 = arith.constant 0 : index
    %c0_267 = arith.constant 0 : index
    %278 = vector.load %arg2[%c0_265, %c15, %c0_266, %c0_267] : memref<1x16x13x13xf32, #tpu.memory_space<vmem>>, vector<1x1x13x13xf32>
    %279 = vector.shape_cast %278 : vector<1x1x13x13xf32> to vector<13x13xf32>
    %c8_268 = arith.constant 8 : index
    %c0_269 = arith.constant 0 : index
    %c0_270 = arith.constant 0 : index
    %c0_271 = arith.constant 0 : index
    %280 = vector.load %arg3[%c8_268, %c0_269, %c0_270, %c0_271] : memref<9x8x13x13xf32, #tpu.memory_space<vmem>>, vector<1x8x13x13xf32>
    %281 = vector.shape_cast %280 : vector<1x8x13x13xf32> to vector<8x13x13xf32>
    %282 = vector.shape_cast %279 : vector<13x13xf32> to vector<1x13x13xf32>
    %283 = vector.broadcast %282 : vector<1x13x13xf32> to vector<8x13x13xf32>
    %284 = arith.mulf %281, %283 : vector<8x13x13xf32>
    %285 = arith.addf %277, %284 : vector<8x13x13xf32>
    %286 = arith.maximumf %214, %285 : vector<8x13x13xf32>
    %c0_272 = arith.constant 0 : index
    %c0_273 = arith.constant 0 : index
    %c0_274 = arith.constant 0 : index
    %287 = vector.load %arg4[%c0_272, %c0_273, %c0_274] : memref<8x13x13xf32, #tpu.memory_space<vmem>>, vector<8x13x13xf32>
    %288 = arith.addf %286, %287 : vector<8x13x13xf32>
    %cst = arith.constant 0.000000e+00 : f32
    %289 = vector.broadcast %cst : f32 to vector<8x13x13xf32>
    %290 = arith.maximumf %288, %289 : vector<8x13x13xf32>
    %c0_275 = arith.constant 0 : index
    %c0_276 = arith.constant 0 : index
    %c0_277 = arith.constant 0 : index
    %c0_278 = arith.constant 0 : index
    %291 = vector.load %arg5[%c0_275, %c0_276, %c0_277, %c0_278] : memref<1x8x13x13xf32, #tpu.memory_space<vmem>>, vector<1x8x13x13xf32>
    %292 = vector.shape_cast %291 : vector<1x8x13x13xf32> to vector<8x13x13xf32>
    %293 = vector.shape_cast %290 : vector<8x13x13xf32> to vector<1x8x13x13xf32>
    tpu.vector_store %arg5[%c0_275, %c0_276, %c0_277, %c0_278], %293 {strides = array<i32>} : memref<1x8x13x13xf32, #tpu.memory_space<vmem>>, vector<1x8x13x13xf32>,
    return
  }
  func.func @transform_0(%arg0: i32, %arg1: i32) -> (i32, i32, i32, i32) {
    %c0_i32 = arith.constant 0 : i32
    %c0_i32_0 = arith.constant 0 : i32
    %c0_i32_1 = arith.constant 0 : i32
    %c0_i32_2 = arith.constant 0 : i32
    return %arg0, %c0_i32, %c0_i32_0, %c0_i32_1 : i32, i32, i32, i32
  }
  func.func @transform_1(%arg0: i32, %arg1: i32) -> (i32, i32, i32, i32) {
    %c0_i32 = arith.constant 0 : i32
    %c0_i32_0 = arith.constant 0 : i32
    %c0_i32_1 = arith.constant 0 : i32
    %c0_i32_2 = arith.constant 0 : i32
    return %c0_i32, %arg1, %c0_i32_0, %c0_i32_1 : i32, i32, i32, i32
  }
  func.func @transform_2(%arg0: i32, %arg1: i32) -> (i32, i32, i32) {
    %c0_i32 = arith.constant 0 : i32
    %c0_i32_0 = arith.constant 0 : i32
    %c0_i32_1 = arith.constant 0 : i32
    return %arg1, %c0_i32, %c0_i32_0 : i32, i32, i32
  }
  func.func @transform_3(%arg0: i32, %arg1: i32) -> (i32, i32, i32, i32) {
    %c0_i32 = arith.constant 0 : i32
    %c0_i32_0 = arith.constant 0 : i32
    %c0_i32_1 = arith.constant 0 : i32
    return %arg0, %arg1, %c0_i32, %c0_i32_0 : i32, i32, i32, i32
  }
}

module attributes {stable_mosaic.version = 11 : i64} {
  func.func @_matmul_bias_act_kernel(%arg0: i32, %arg1: memref<242x288xbf16, #tpu.memory_space<vmem>>, %arg2: memref<288x64xbf16, #tpu.memory_space<vmem>>, %arg3: memref<1x64xf32, #tpu.memory_space<vmem>>, %arg4: memref<242x64xf32, #tpu.memory_space<vmem>>) attributes {dimension_semantics = [#tpu.dimension_semantics<parallel>], iteration_bounds = array<i64: 1>, scalar_prefetch = 0 : i64, scratch_operands = 0 : i64, tpu.core_type = #tpu.core_type<tc>, window_params = [{transform_indices = @transform_0, window_bounds = array<i64: 242, 288>}, {pipeline_mode = #tpu.pipeline_mode<synchronous>, transform_indices = @transform_1, window_bounds = array<i64: 288, 64>}, {pipeline_mode = #tpu.pipeline_mode<synchronous>, transform_indices = @transform_2, window_bounds = array<i64: 1, 64>}, {transform_indices = @transform_3, window_bounds = array<i64: 242, 64>}]} {
    %c0 = arith.constant 0 : index
    %c0_0 = arith.constant 0 : index
    %0 = vector.load %arg1[%c0, %c0_0] : memref<242x288xbf16, #tpu.memory_space<vmem>>, vector<242x288xbf16>
    %c0_1 = arith.constant 0 : index
    %c0_2 = arith.constant 0 : index
    %1 = vector.load %arg2[%c0_1, %c0_2] : memref<288x64xbf16, #tpu.memory_space<vmem>>, vector<288x64xbf16>
    %cst = arith.constant dense<0.000000e+00> : vector<242x64xf32>
    %2 = tpu.matmul %0, %1, %cst {dimension_numbers = #tpu.dot_dimension_numbers<[1], [0], [0], [1], [0, 0, 1, 1], [], []>} : vector<242x288xbf16>, vector<288x64xbf16>, vector<242x64xf32> -> vector<242x64xf32>
    %c0_3 = arith.constant 0 : index
    %c0_4 = arith.constant 0 : index
    %3 = vector.load %arg3[%c0_3, %c0_4] : memref<1x64xf32, #tpu.memory_space<vmem>>, vector<1x64xf32>
    %4 = vector.broadcast %3 : vector<1x64xf32> to vector<242x64xf32>
    %5 = arith.addf %2, %4 : vector<242x64xf32>
    %cst_5 = arith.constant 0.000000e+00 : f32
    %6 = vector.broadcast %cst_5 : f32 to vector<242x64xf32>
    %7 = arith.maximumf %5, %6 : vector<242x64xf32>
    %c0_6 = arith.constant 0 : index
    %c0_7 = arith.constant 0 : index
    %8 = vector.load %arg4[%c0_6, %c0_7] : memref<242x64xf32, #tpu.memory_space<vmem>>, vector<242x64xf32>
    tpu.vector_store %arg4[%c0_6, %c0_7], %7 {strides = array<i32>} : memref<242x64xf32, #tpu.memory_space<vmem>>, vector<242x64xf32>,
    return
  }
  func.func @transform_0(%arg0: i32) -> (i32, i32) {
    %c0_i32 = arith.constant 0 : i32
    %c0_i32_0 = arith.constant 0 : i32
    return %arg0, %c0_i32 : i32, i32
  }
  func.func @transform_1(%arg0: i32) -> (i32, i32) {
    %c0_i32 = arith.constant 0 : i32
    %c0_i32_0 = arith.constant 0 : i32
    %c0_i32_1 = arith.constant 0 : i32
    return %c0_i32, %c0_i32_0 : i32, i32
  }
  func.func @transform_2(%arg0: i32) -> (i32, i32) {
    %c0_i32 = arith.constant 0 : i32
    %c0_i32_0 = arith.constant 0 : i32
    %c0_i32_1 = arith.constant 0 : i32
    return %c0_i32, %c0_i32_0 : i32, i32
  }
  func.func @transform_3(%arg0: i32) -> (i32, i32) {
    %c0_i32 = arith.constant 0 : i32
    %c0_i32_0 = arith.constant 0 : i32
    return %arg0, %c0_i32 : i32, i32
  }
}

module attributes {stable_mosaic.version = 11 : i64} {
  func.func @_pool_fc_head_kernel(%arg0: i32, %arg1: memref<2x1600xf32, #tpu.memory_space<vmem>>, %arg2: memref<2x1600xf32, #tpu.memory_space<vmem>>, %arg3: memref<2x1600xf32, #tpu.memory_space<vmem>>, %arg4: memref<2x1600xf32, #tpu.memory_space<vmem>>, %arg5: memref<1600x128xbf16, #tpu.memory_space<vmem>>, %arg6: memref<1x128xf32, #tpu.memory_space<vmem>>, %arg7: memref<128x10xbf16, #tpu.memory_space<vmem>>, %arg8: memref<1x10xf32, #tpu.memory_space<vmem>>, %arg9: memref<2x10xf32, #tpu.memory_space<vmem>>) attributes {dimension_semantics = [#tpu.dimension_semantics<parallel>], iteration_bounds = array<i64: 1>, scalar_prefetch = 0 : i64, scratch_operands = 0 : i64, tpu.core_type = #tpu.core_type<tc>, window_params = [{transform_indices = @transform_0, window_bounds = array<i64: 2, 1600>}, {transform_indices = @transform_1, window_bounds = array<i64: 2, 1600>}, {transform_indices = @transform_2, window_bounds = array<i64: 2, 1600>}, {transform_indices = @transform_3, window_bounds = array<i64: 2, 1600>}, {pipeline_mode = #tpu.pipeline_mode<synchronous>, transform_indices = @transform_4, window_bounds = array<i64: 1600, 128>}, {pipeline_mode = #tpu.pipeline_mode<synchronous>, transform_indices = @transform_5, window_bounds = array<i64: 1, 128>}, {pipeline_mode = #tpu.pipeline_mode<synchronous>, transform_indices = @transform_6, window_bounds = array<i64: 128, 10>}, {pipeline_mode = #tpu.pipeline_mode<synchronous>, transform_indices = @transform_7, window_bounds = array<i64: 1, 10>}, {transform_indices = @transform_8, window_bounds = array<i64: 2, 10>}]} {
    %c0 = arith.constant 0 : index
    %c0_0 = arith.constant 0 : index
    %0 = vector.load %arg1[%c0, %c0_0] : memref<2x1600xf32, #tpu.memory_space<vmem>>, vector<2x1600xf32>
    %c0_1 = arith.constant 0 : index
    %c0_2 = arith.constant 0 : index
    %1 = vector.load %arg2[%c0_1, %c0_2] : memref<2x1600xf32, #tpu.memory_space<vmem>>, vector<2x1600xf32>
    %2 = arith.maximumf %0, %1 : vector<2x1600xf32>
    %c0_3 = arith.constant 0 : index
    %c0_4 = arith.constant 0 : index
    %3 = vector.load %arg3[%c0_3, %c0_4] : memref<2x1600xf32, #tpu.memory_space<vmem>>, vector<2x1600xf32>
    %c0_5 = arith.constant 0 : index
    %c0_6 = arith.constant 0 : index
    %4 = vector.load %arg4[%c0_5, %c0_6] : memref<2x1600xf32, #tpu.memory_space<vmem>>, vector<2x1600xf32>
    %5 = arith.maximumf %3, %4 : vector<2x1600xf32>
    %6 = arith.maximumf %2, %5 : vector<2x1600xf32>
    %7 = arith.truncf %6 : vector<2x1600xf32> to vector<2x1600xbf16>
    %c0_7 = arith.constant 0 : index
    %c0_8 = arith.constant 0 : index
    %8 = vector.load %arg5[%c0_7, %c0_8] : memref<1600x128xbf16, #tpu.memory_space<vmem>>, vector<1600x128xbf16>
    %cst = arith.constant dense<0.000000e+00> : vector<2x128xf32>
    %9 = tpu.matmul %7, %8, %cst {dimension_numbers = #tpu.dot_dimension_numbers<[1], [0], [0], [1], [0, 0, 1, 1], [], []>} : vector<2x1600xbf16>, vector<1600x128xbf16>, vector<2x128xf32> -> vector<2x128xf32>
    %c0_9 = arith.constant 0 : index
    %c0_10 = arith.constant 0 : index
    %10 = vector.load %arg6[%c0_9, %c0_10] : memref<1x128xf32, #tpu.memory_space<vmem>>, vector<1x128xf32>
    %11 = vector.broadcast %10 : vector<1x128xf32> to vector<2x128xf32>
    %12 = arith.addf %9, %11 : vector<2x128xf32>
    %cst_11 = arith.constant 0.000000e+00 : f32
    %13 = vector.broadcast %cst_11 : f32 to vector<2x128xf32>
    %14 = arith.maximumf %12, %13 : vector<2x128xf32>
    %15 = arith.truncf %14 : vector<2x128xf32> to vector<2x128xbf16>
    %c0_12 = arith.constant 0 : index
    %c0_13 = arith.constant 0 : index
    %16 = vector.load %arg7[%c0_12, %c0_13] : memref<128x10xbf16, #tpu.memory_space<vmem>>, vector<128x10xbf16>
    %cst_14 = arith.constant dense<0.000000e+00> : vector<2x10xf32>
    %17 = tpu.matmul %15, %16, %cst_14 {dimension_numbers = #tpu.dot_dimension_numbers<[1], [0], [0], [1], [0, 0, 1, 1], [], []>} : vector<2x128xbf16>, vector<128x10xbf16>, vector<2x10xf32> -> vector<2x10xf32>
    %c0_15 = arith.constant 0 : index
    %c0_16 = arith.constant 0 : index
    %18 = vector.load %arg8[%c0_15, %c0_16] : memref<1x10xf32, #tpu.memory_space<vmem>>, vector<1x10xf32>
    %19 = vector.broadcast %18 : vector<1x10xf32> to vector<2x10xf32>
    %20 = arith.addf %17, %19 : vector<2x10xf32>
    %c0_17 = arith.constant 0 : index
    %c0_18 = arith.constant 0 : index
    %21 = vector.load %arg9[%c0_17, %c0_18] : memref<2x10xf32, #tpu.memory_space<vmem>>, vector<2x10xf32>
    tpu.vector_store %arg9[%c0_17, %c0_18], %20 {strides = array<i32>} : memref<2x10xf32, #tpu.memory_space<vmem>>, vector<2x10xf32>,
    return
  }
  func.func @transform_0(%arg0: i32) -> (i32, i32) {
    %c0_i32 = arith.constant 0 : i32
    %c0_i32_0 = arith.constant 0 : i32
    return %arg0, %c0_i32 : i32, i32
  }
  func.func @transform_1(%arg0: i32) -> (i32, i32) {
    %c0_i32 = arith.constant 0 : i32
    %c0_i32_0 = arith.constant 0 : i32
    return %arg0, %c0_i32 : i32, i32
  }
  func.func @transform_2(%arg0: i32) -> (i32, i32) {
    %c0_i32 = arith.constant 0 : i32
    %c0_i32_0 = arith.constant 0 : i32
    return %arg0, %c0_i32 : i32, i32
  }
  func.func @transform_3(%arg0: i32) -> (i32, i32) {
    %c0_i32 = arith.constant 0 : i32
    %c0_i32_0 = arith.constant 0 : i32
    return %arg0, %c0_i32 : i32, i32
  }
  func.func @transform_4(%arg0: i32) -> (i32, i32) {
    %c0_i32 = arith.constant 0 : i32
    %c0_i32_0 = arith.constant 0 : i32
    %c0_i32_1 = arith.constant 0 : i32
    return %c0_i32, %c0_i32_0 : i32, i32
  }
  func.func @transform_5(%arg0: i32) -> (i32, i32) {
    %c0_i32 = arith.constant 0 : i32
    %c0_i32_0 = arith.constant 0 : i32
    %c0_i32_1 = arith.constant 0 : i32
    return %c0_i32, %c0_i32_0 : i32, i32
  }
  func.func @transform_6(%arg0: i32) -> (i32, i32) {
    %c0_i32 = arith.constant 0 : i32
    %c0_i32_0 = arith.constant 0 : i32
    %c0_i32_1 = arith.constant 0 : i32
    return %c0_i32, %c0_i32_0 : i32, i32
  }
  func.func @transform_7(%arg0: i32) -> (i32, i32) {
    %c0_i32 = arith.constant 0 : i32
    %c0_i32_0 = arith.constant 0 : i32
    %c0_i32_1 = arith.constant 0 : i32
    return %c0_i32, %c0_i32_0 : i32, i32
  }
  func.func @transform_8(%arg0: i32) -> (i32, i32) {
    %c0_i32 = arith.constant 0 : i32
    %c0_i32_0 = arith.constant 0 : i32
    return %arg0, %c0_i32 : i32, i32
  }
}

</mosaic_0001>

<llo_original>
// kernel: net_forward.3
$region0: #{net_forward.3}
  #allocation0 [shape = 'u32[]', space=smem, size = 0x4, offset = 0x4, fixed_abs, tag = 'smem constant byte address 0x4 - core index']
  #allocation1 [shape = 'u32[144,128]{1,0:T(1,128)}', space=vmem, size = 0x12000, scoped, tag = 'internal scratch']
  %s0 = inlined_call_operand.vmem [shape: f32[2,16,13,13], index: 0, kind: input, shape index: {}]
  %s1 = inlined_call_operand.vmem [shape: f32[9,32,13,13], index: 1, kind: input, shape index: {}]
  %s2 = inlined_call_operand.vmem [shape: f32[32,13,13], index: 2, kind: input, shape index: {}]
  %s3 = inlined_call_operand.vmem [shape: f32[2,32,13,13], index: 3, kind: output, shape index: {}]
  %s4 = sld [smem:[#allocation0]]
  $region83: #{net_forward.3} parent=0
    _
  %s6 = ssub.s32 1, %s4
  %s7 = scalar_select 0, %s6, %s4
  $region1: #{net_forward.3} parent=0
    #allocation2 [shape = 'u8[1179648]{0}', space=vmem, size = 0x120000, scoped, tag = 'input window, operand 1']
    loop: start=0, step=1, limit=10
    $region2: #{net_forward.3} parent=1 // loop_pre_header
      _
    $region3: #{net_forward.3} parent=1 // loop_header
      %s9 = sphi 0, %s13
      %p10 = scmp.ge.s32.totalorder %s9, 10
      %s16 = sphi 0, %s28
      %s17 = sphi 0, %s24
      %s18 = sphi 0, %s16
      %s19 = sphi 0, %s17
      %s20 = sphi 0, %s18
      %s21 = sphi 0, %s19
      %s31 = sphi 0, %s33
      %s34 = sphi 0, %s31
      %s35 = sphi 0, %s34
      %s51 = sphi 0, %s35
      %s57 = sphi 0, %s59
      %s60 = sphi 0, %s57
      %s61 = sphi 0, %s60
      %s77 = sphi 0, %s61
      %s83 = sphi 0, %s85
      %s86 = sphi 0, %s83
      %s87 = sphi 0, %s86
      %s103 = sphi 0, %s87
      %s111 = sphi 0, %s113
      %s114 = sphi 0, %s111
      %s115 = sphi 0, %s114
      %s131 = sphi 0, %s115
    $region4: #{net_forward.3} parent=1 // loop_header_branch
      %12 = sbr.rel (%p10) target = $region8
    $region5: #{net_forward.3} parent=1 // loop_body
      %s14 = ssub.s32 %s9, 1
      %s15 = ssub.s32 %s9, 2
      %s22 = sadd.s32 1, %s17
      %p23 = scmp.ge.s32.totalorder %s22, 4
      %s24 = scalar_select %p23, 0, %s22
      %s25 = sadd.s32 1, %s16
      %s26 = scalar_select %p23, %s25, %s16
      %p27 = scmp.ge.s32.totalorder %s26, 2
      %s28 = scalar_select %p27, 0, %s26
      %s29 = ssub.s32 %s16, %s28
      %p30 = scmp.eq.s32.totalorder %s29, 0
      %s32 = sadd.s32 %s31, 1
      %s33 = scalar_select %p30, %s31, %s32
      %p36 = pneg %p30
      %p37 = scmp.eq.s32.totalorder %s9, 7
      %p38 = por %p36, %p37
      %p39 = scmp.ne.s32.totalorder %s31, %s34
      %p40 = scmp.eq.s32.totalorder %s9, 0
      %p41 = por %p39, %p40
      %p42 = scmp.ne.s32.totalorder %s31, %s34
      %p43 = scmp.eq.s32.totalorder %s14, 7
      %p44 = por %p42, %p43
      %p45 = scmp.ne.s32.totalorder %s34, %s35
      %p46 = scmp.eq.s32.totalorder %s14, 0
      %p47 = por %p45, %p46
      %p48 = scmp.ne.s32.totalorder %s34, %s35
      %p49 = scmp.eq.s32.totalorder %s15, 7
      %p50 = por %p48, %p49
      %p52 = scmp.ne.s32.totalorder %s35, %s51
      %p53 = scmp.eq.s32.totalorder %s15, 0
      %p54 = por %p52, %p53
      %s55 = ssub.s32 %s17, %s24
      %p56 = scmp.eq.s32.totalorder %s55, 0
      %s58 = sadd.s32 %s57, 1
      %s59 = scalar_select %p56, %s57, %s58
      %p62 = pneg %p56
      %p63 = scmp.eq.s32.totalorder %s9, 7
      %p64 = por %p62, %p63
      %p65 = scmp.ne.s32.totalorder %s57, %s60
      %p66 = scmp.eq.s32.totalorder %s9, 0
      %p67 = por %p65, %p66
      %p68 = scmp.ne.s32.totalorder %s57, %s60
      %p69 = scmp.eq.s32.totalorder %s14, 7
      %p70 = por %p68, %p69
      %p71 = scmp.ne.s32.totalorder %s60, %s61
      %p72 = scmp.eq.s32.totalorder %s14, 0
      %p73 = por %p71, %p72
      %p74 = scmp.ne.s32.totalorder %s60, %s61
      %p75 = scmp.eq.s32.totalorder %s15, 7
      %p76 = por %p74, %p75
      %p78 = scmp.ne.s32.totalorder %s61, %s77
      %p79 = scmp.eq.s32.totalorder %s15, 0
      %p80 = por %p78, %p79
      %s81 = ssub.s32 %s17, %s24
      %p82 = scmp.eq.s32.totalorder %s81, 0
      %s84 = sadd.s32 %s83, 1
      %s85 = scalar_select %p82, %s83, %s84
      %p88 = pneg %p82
      %p89 = scmp.eq.s32.totalorder %s9, 7
      %p90 = por %p88, %p89
      %p91 = scmp.ne.s32.totalorder %s83, %s86
      %p92 = scmp.eq.s32.totalorder %s9, 0
      %p93 = por %p91, %p92
      %p94 = scmp.ne.s32.totalorder %s83, %s86
      %p95 = scmp.eq.s32.totalorder %s14, 7
      %p96 = por %p94, %p95
      %p97 = scmp.ne.s32.totalorder %s86, %s87
      %p98 = scmp.eq.s32.totalorder %s14, 0
      %p99 = por %p97, %p98
      %p100 = scmp.ne.s32.totalorder %s86, %s87
      %p101 = scmp.eq.s32.totalorder %s15, 7
      %p102 = por %p100, %p101
      %p104 = scmp.ne.s32.totalorder %s87, %s103
      %p105 = scmp.eq.s32.totalorder %s15, 0
      %p106 = por %p104, %p105
      %s107 = ssub.s32 %s16, %s28
      %s108 = ssub.s32 %s17, %s24
      %s109 = sor.u32 %s107, %s108
      %p110 = scmp.eq.s32.totalorder %s109, 0
      %s112 = sadd.s32 %s111, 1
      %s113 = scalar_select %p110, %s111, %s112
      %p116 = pneg %p110
      %p117 = scmp.eq.s32.totalorder %s9, 7
      %p118 = por %p116, %p117
      %p119 = scmp.ne.s32.totalorder %s111, %s114
      %p120 = scmp.eq.s32.totalorder %s9, 0
      %p121 = por %p119, %p120
      %p122 = scmp.ne.s32.totalorder %s111, %s114
      %p123 = scmp.eq.s32.totalorder %s14, 7
      %p124 = por %p122, %p123
      %p125 = scmp.ne.s32.totalorder %s114, %s115
      %p126 = scmp.eq.s32.totalorder %s14, 0
      %p127 = por %p125, %p126
      %p128 = scmp.ne.s32.totalorder %s114, %s115
      %p129 = scmp.eq.s32.totalorder %s15, 7
      %p130 = por %p128, %p129
      %p132 = scmp.ne.s32.totalorder %s115, %s131
      %p133 = scmp.eq.s32.totalorder %s15, 0
      %p134 = por %p132, %p133
      %p135 = scmp.le.s32.totalorder 1, %s9
      %p136 = scmp.lt.s32.totalorder %s9, 9
      %p137 = pnand %p135, %p136
      %p138 = pneg %p137
      // Predicated region
      $region9: #{net_forward.3} parent=5 // pred_check
        _
      $region10: #{net_forward.3} parent=5 // pred_check_branch
        %140 = sbr.rel (%p137) target = $region12
      $region11: #{net_forward.3} parent=5 // pred_region
        %s141 = ssub.s32 %s9, 1
      $region12: #{net_forward.3} parent=5 // pred_fallthru
        _
      %p142 = scmp.lt.s32.totalorder %s9, 8
      // Predicated region
      $region13: #{net_forward.3} parent=5 // pred_check
        %p143 = pneg %p142
      $region14: #{net_forward.3} parent=5 // pred_check_branch
        %145 = sbr.rel (%p143) target = $region16
      $region15: #{net_forward.3} parent=5 // pred_region
        // Predicated region
        $region17: #{net_forward.3} parent=15 // pred_check
          %p146 = pneg %p41
        $region18: #{net_forward.3} parent=15 // pred_check_branch
          %148 = sbr.rel (%p146) target = $region20
        $region19: #{net_forward.3} parent=15 // pred_region
          %p149 = scmp.lt.s32.totalorder %s16, 1
          %s150 = scalar_select %p149, %s16, 1
          %s151 = smul.addr %s150, 32
          %s152 = smul.addr %s151, 8
          %s153 = scalar_lea.vmem %s0, %s152
        $region20: #{net_forward.3} parent=15 // pred_fallthru
          _
        // Predicated region
        $region21: #{net_forward.3} parent=15 // pred_check
          %p154 = pneg %p67
        $region22: #{net_forward.3} parent=15 // pred_check_branch
          %156 = sbr.rel (%p154) target = $region24
        $region23: #{net_forward.3} parent=15 // pred_region
          %s157 = sand.u32 %s57, 1
          %s158 = sand.u32 %s57, 1
          %s159 = smul.addr %s158, 1152
          %s160 = scalar_lea.vmem [#allocation2], %s159
          %s161 = smul.u32 8, %s17
          %s162 = smul.addr %s161, 2
          %s163 = smul.addr %s162, 8
          %s164 = scalar_lea.vmem %s1, %s163
          // Predicated region
          $region25: #{net_forward.3} parent=23 // pred_check
            _
          $region26: #{net_forward.3} parent=23 // pred_check_branch
            %166 = sbr.rel (0) target = $region28
          $region27: #{net_forward.3} parent=23 // pred_region
            // Predicated region
            $region29: #{net_forward.3} parent=27 // pred_check
              _
            $region30: #{net_forward.3} parent=27 // pred_check_branch
              %168 = sbr.rel (0) target = $region32
            $region31: #{net_forward.3} parent=27 // pred_region
              // Predicated region
              $region44: #{net_forward.3} parent=31 // pred_check
                _
              $region45: #{net_forward.3} parent=31 // pred_check_branch
                %469 = sbr.rel (0) target = $region47
              $region46: #{net_forward.3} parent=31 // pred_region
                loop: start=0, step=1, limit=1
                $region48: #{net_forward.3} parent=46 // loop_pre_header
                  _
                $region49: #{net_forward.3} parent=46 // loop_header
                  %s471 = sphi 0, %s475
                  %p472 = scmp.ge.s32.totalorder %s471, 1
                  %s476 = sphi %s164, %s164
                  %s477 = sphi %s160, %s160
                $region50: #{net_forward.3} parent=46 // loop_header_branch
                  %474 = sbr.rel (%p472) target = $region54
                $region51: #{net_forward.3} parent=46 // loop_body
                  %v478 = vld [vmem:[%s476] sm:$0xff]
                  %479 = vst [vmem:[%s477] sm:$0xff] %v478
                  %v480 = vld [vmem:[%s476 + $0x8] sm:$0xff]
                  %481 = vst [vmem:[%s477 + $0x8] sm:$0xff] %v480
                  %v482 = vld [vmem:[%s476 + $0x10] sm:$0xff]
                  %483 = vst [vmem:[%s477 + $0x10] sm:$0xff] %v482
                  %v484 = vld [vmem:[%s476 + $0x18] sm:$0xff]
                  %485 = vst [vmem:[%s477 + $0x18] sm:$0xff] %v484
                  %v486 = vld [vmem:[%s476 + $0x20] sm:$0xff]
                  %487 = vst [vmem:[%s477 + $0x20] sm:$0xff] %v486
                  %v488 = vld [vmem:[%s476 + $0x28] sm:$0xff]
                  %489 = vst [vmem:[%s477 + $0x28] sm:$0xff] %v488
                  %v490 = vld [vmem:[%s476 + $0x30] sm:$0xff]
                  %491 = vst [vmem:[%s477 + $0x30] sm:$0xff] %v490
                  %v492 = vld [vmem:[%s476 + $0x38] sm:$0xff]
                  %493 = vst [vmem:[%s477 + $0x38] sm:$0xff] %v492
                  %v494 = vld [vmem:[%s476 + $0x40] sm:$0xff]
                  %495 = vst [vmem:[%s477 + $0x40] sm:$0xff] %v494
                  %v496 = vld [vmem:[%s476 + $0x48] sm:$0xff]
                  %497 = vst [vmem:[%s477 + $0x48] sm:$0xff] %v496
                  %v498 = vld [vmem:[%s476 + $0x50] sm:$0xff]
                  %499 = vst [vmem:[%s477 + $0x50] sm:$0xff] %v498
                  %v500 = vld [vmem:[%s476 + $0x58] sm:$0xff]
                  %501 = vst [vmem:[%s477 + $0x58] sm:$0xff] %v500
                  %v502 = vld [vmem:[%s476 + $0x60] sm:$0xff]
                  %503 = vst [vmem:[%s477 + $0x60] sm:$0xff] %v502
                  %v504 = vld [vmem:[%s476 + $0x68] sm:$0xff]
                  %505 = vst [vmem:[%s477 + $0x68] sm:$0xff] %v504
                  %v506 = vld [vmem:[%s476 + $0x70] sm:$0xff]
                  %507 = vst [vmem:[%s477 + $0x70] sm:$0xff] %v506
                  %v508 = vld [vmem:[%s476 + $0x78] sm:$0xff]
                  %509 = vst [vmem:[%s477 + $0x78] sm:$0xff] %v508
                  %v510 = vld [vmem:[%s476 + $0x200] sm:$0xff]
                  %511 = vst [vmem:[%s477 + $0x80] sm:$0xff] %v510
                  %v512 = vld [vmem:[%s476 + $0x208] sm:$0xff]
                  %513 = vst [vmem:[%s477 + $0x88] sm:$0xff] %v512
                  %v514 = vld [vmem:[%s476 + $0x210] sm:$0xff]
                  %515 = vst [vmem:[%s477 + $0x90] sm:$0xff] %v514
                  %v516 = vld [vmem:[%s476 + $0x218] sm:$0xff]
                  %517 = vst [vmem:[%s477 + $0x98] sm:$0xff] %v516
                  %v518 = vld [vmem:[%s476 + $0x220] sm:$0xff]
                  %519 = vst [vmem:[%s477 + $0xa0] sm:$0xff] %v518
                  %v520 = vld [vmem:[%s476 + $0x228] sm:$0xff]
                  %521 = vst [vmem:[%s477 + $0xa8] sm:$0xff] %v520
                  %v522 = vld [vmem:[%s476 + $0x230] sm:$0xff]
                  %523 = vst [vmem:[%s477 + $0xb0] sm:$0xff] %v522
                  %v524 = vld [vmem:[%s476 + $0x238] sm:$0xff]
                  %525 = vst [vmem:[%s477 + $0xb8] sm:$0xff] %v524
                  %v526 = vld [vmem:[%s476 + $0x240] sm:$0xff]
                  %527 = vst [vmem:[%s477 + $0xc0] sm:$0xff] %v526
                  %v528 = vld [vmem:[%s476 + $0x248] sm:$0xff]
                  %529 = vst [vmem:[%s477 + $0xc8] sm:$0xff] %v528
                  %v530 = vld [vmem:[%s476 + $0x250] sm:$0xff]
                  %531 = vst [vmem:[%s477 + $0xd0] sm:$0xff] %v530
                  %v532 = vld [vmem:[%s476 + $0x258] sm:$0xff]
                  %533 = vst [vmem:[%s477 + $0xd8] sm:$0xff] %v532
                  %v534 = vld [vmem:[%s476 + $0x260] sm:$0xff]
                  %535 = vst [vmem:[%s477 + $0xe0] sm:$0xff] %v534
                  %v536 = vld [vmem:[%s476 + $0x268] sm:$0xff]
                  %537 = vst [vmem:[%s477 + $0xe8] sm:$0xff] %v536
                  %v538 = vld [vmem:[%s476 + $0x270] sm:$0xff]
                  %539 = vst [vmem:[%s477 + $0xf0] sm:$0xff] %v538
                  %v540 = vld [vmem:[%s476 + $0x278] sm:$0xff]
                  %541 = vst [vmem:[%s477 + $0xf8] sm:$0xff] %v540
                  %v542 = vld [vmem:[%s476 + $0x400] sm:$0xff]
                  %543 = vst [vmem:[%s477 + $0x100] sm:$0xff] %v542
                  %v544 = vld [vmem:[%s476 + $0x408] sm:$0xff]
                  %545 = vst [vmem:[%s477 + $0x108] sm:$0xff] %v544
                  %v546 = vld [vmem:[%s476 + $0x410] sm:$0xff]
                  %547 = vst [vmem:[%s477 + $0x110] sm:$0xff] %v546
                  %v548 = vld [vmem:[%s476 + $0x418] sm:$0xff]
                  %549 = vst [vmem:[%s477 + $0x118] sm:$0xff] %v548
                  %v550 = vld [vmem:[%s476 + $0x420] sm:$0xff]
                  %551 = vst [vmem:[%s477 + $0x120] sm:$0xff] %v550
                  %v552 = vld [vmem:[%s476 + $0x428] sm:$0xff]
                  %553 = vst [vmem:[%s477 + $0x128] sm:$0xff] %v552
                  %v554 = vld [vmem:[%s476 + $0x430] sm:$0xff]
                  %555 = vst [vmem:[%s477 + $0x130] sm:$0xff] %v554
                  %v556 = vld [vmem:[%s476 + $0x438] sm:$0xff]
                  %557 = vst [vmem:[%s477 + $0x138] sm:$0xff] %v556
                  %v558 = vld [vmem:[%s476 + $0x440] sm:$0xff]
                  %559 = vst [vmem:[%s477 + $0x140] sm:$0xff] %v558
                  %v560 = vld [vmem:[%s476 + $0x448] sm:$0xff]
                  %561 = vst [vmem:[%s477 + $0x148] sm:$0xff] %v560
                  %v562 = vld [vmem:[%s476 + $0x450] sm:$0xff]
                  %563 = vst [vmem:[%s477 + $0x150] sm:$0xff] %v562
                  %v564 = vld [vmem:[%s476 + $0x458] sm:$0xff]
                  %565 = vst [vmem:[%s477 + $0x158] sm:$0xff] %v564
                  %v566 = vld [vmem:[%s476 + $0x460] sm:$0xff]
                  %567 = vst [vmem:[%s477 + $0x160] sm:$0xff] %v566
                  %v568 = vld [vmem:[%s476 + $0x468] sm:$0xff]
                  %569 = vst [vmem:[%s477 + $0x168] sm:$0xff] %v568
                  %v570 = vld [vmem:[%s476 + $0x470] sm:$0xff]
                  %571 = vst [vmem:[%s477 + $0x170] sm:$0xff] %v570
                  %v572 = vld [vmem:[%s476 + $0x478] sm:$0xff]
                  %573 = vst [vmem:[%s477 + $0x178] sm:$0xff] %v572
                  %v574 = vld [vmem:[%s476 + $0x600] sm:$0xff]
                  %575 = vst [vmem:[%s477 + $0x180] sm:$0xff] %v574
                  %v576 = vld [vmem:[%s476 + $0x608] sm:$0xff]
                  %577 = vst [vmem:[%s477 + $0x188] sm:$0xff] %v576
                  %v578 = vld [vmem:[%s476 + $0x610] sm:$0xff]
                  %579 = vst [vmem:[%s477 + $0x190] sm:$0xff] %v578
                  %v580 = vld [vmem:[%s476 + $0x618] sm:$0xff]
                  %581 = vst [vmem:[%s477 + $0x198] sm:$0xff] %v580
                  %v582 = vld [vmem:[%s476 + $0x620] sm:$0xff]
                  %583 = vst [vmem:[%s477 + $0x1a0] sm:$0xff] %v582
                  %v584 = vld [vmem:[%s476 + $0x628] sm:$0xff]
                  %585 = vst [vmem:[%s477 + $0x1a8] sm:$0xff] %v584
                  %v586 = vld [vmem:[%s476 + $0x630] sm:$0xff]
                  %587 = vst [vmem:[%s477 + $0x1b0] sm:$0xff] %v586
                  %v588 = vld [vmem:[%s476 + $0x638] sm:$0xff]
                  %589 = vst [vmem:[%s477 + $0x1b8] sm:$0xff] %v588
                  %v590 = vld [vmem:[%s476 + $0x640] sm:$0xff]
                  %591 = vst [vmem:[%s477 + $0x1c0] sm:$0xff] %v590
                  %v592 = vld [vmem:[%s476 + $0x648] sm:$0xff]
                  %593 = vst [vmem:[%s477 + $0x1c8] sm:$0xff] %v592
                  %v594 = vld [vmem:[%s476 + $0x650] sm:$0xff]
                  %595 = vst [vmem:[%s477 + $0x1d0] sm:$0xff] %v594
                  %v596 = vld [vmem:[%s476 + $0x658] sm:$0xff]
                  %597 = vst [vmem:[%s477 + $0x1d8] sm:$0xff] %v596
                  %v598 = vld [vmem:[%s476 + $0x660] sm:$0xff]
                  %599 = vst [vmem:[%s477 + $0x1e0] sm:$0xff] %v598
                  %v600 = vld [vmem:[%s476 + $0x668] sm:$0xff]
                  %601 = vst [vmem:[%s477 + $0x1e8] sm:$0xff] %v600
                  %v602 = vld [vmem:[%s476 + $0x670] sm:$0xff]
                  %603 = vst [vmem:[%s477 + $0x1f0] sm:$0xff] %v602
                  %v604 = vld [vmem:[%s476 + $0x678] sm:$0xff]
                  %605 = vst [vmem:[%s477 + $0x1f8] sm:$0xff] %v604
                  %v606 = vld [vmem:[%s476 + $0x800] sm:$0xff]
                  %607 = vst [vmem:[%s477 + $0x200] sm:$0xff] %v606
                  %v608 = vld [vmem:[%s476 + $0x808] sm:$0xff]
                  %609 = vst [vmem:[%s477 + $0x208] sm:$0xff] %v608
                  %v610 = vld [vmem:[%s476 + $0x810] sm:$0xff]
                  %611 = vst [vmem:[%s477 + $0x210] sm:$0xff] %v610
                  %v612 = vld [vmem:[%s476 + $0x818] sm:$0xff]
                  %613 = vst [vmem:[%s477 + $0x218] sm:$0xff] %v612
                  %v614 = vld [vmem:[%s476 + $0x820] sm:$0xff]
                  %615 = vst [vmem:[%s477 + $0x220] sm:$0xff] %v614
                  %v616 = vld [vmem:[%s476 + $0x828] sm:$0xff]
                  %617 = vst [vmem:[%s477 + $0x228] sm:$0xff] %v616
                  %v618 = vld [vmem:[%s476 + $0x830] sm:$0xff]
                  %619 = vst [vmem:[%s477 + $0x230] sm:$0xff] %v618
                  %v620 = vld [vmem:[%s476 + $0x838] sm:$0xff]
                  %621 = vst [vmem:[%s477 + $0x238] sm:$0xff] %v620
                  %v622 = vld [vmem:[%s476 + $0x840] sm:$0xff]
                  %623 = vst [vmem:[%s477 + $0x240] sm:$0xff] %v622
                  %v624 = vld [vmem:[%s476 + $0x848] sm:$0xff]
                  %625 = vst [vmem:[%s477 + $0x248] sm:$0xff] %v624
                  %v626 = vld [vmem:[%s476 + $0x850] sm:$0xff]
                  %627 = vst [vmem:[%s477 + $0x250] sm:$0xff] %v626
                  %v628 = vld [vmem:[%s476 + $0x858] sm:$0xff]
                  %629 = vst [vmem:[%s477 + $0x258] sm:$0xff] %v628
                  %v630 = vld [vmem:[%s476 + $0x860] sm:$0xff]
                  %631 = vst [vmem:[%s477 + $0x260] sm:$0xff] %v630
                  %v632 = vld [vmem:[%s476 + $0x868] sm:$0xff]
                  %633 = vst [vmem:[%s477 + $0x268] sm:$0xff] %v632
                  %v634 = vld [vmem:[%s476 + $0x870] sm:$0xff]
                  %635 = vst [vmem:[%s477 + $0x270] sm:$0xff] %v634
                  %v636 = vld [vmem:[%s476 + $0x878] sm:$0xff]
                  %637 = vst [vmem:[%s477 + $0x278] sm:$0xff] %v636
                  %v638 = vld [vmem:[%s476 + $0xa00] sm:$0xff]
                  %639 = vst [vmem:[%s477 + $0x280] sm:$0xff] %v638
                  %v640 = vld [vmem:[%s476 + $0xa08] sm:$0xff]
                  %641 = vst [vmem:[%s477 + $0x288] sm:$0xff] %v640
                  %v642 = vld [vmem:[%s476 + $0xa10] sm:$0xff]
                  %643 = vst [vmem:[%s477 + $0x290] sm:$0xff] %v642
                  %v644 = vld [vmem:[%s476 + $0xa18] sm:$0xff]
                  %645 = vst [vmem:[%s477 + $0x298] sm:$0xff] %v644
                  %v646 = vld [vmem:[%s476 + $0xa20] sm:$0xff]
                  %647 = vst [vmem:[%s477 + $0x2a0] sm:$0xff] %v646
                  %v648 = vld [vmem:[%s476 + $0xa28] sm:$0xff]
                  %649 = vst [vmem:[%s477 + $0x2a8] sm:$0xff] %v648
                  %v650 = vld [vmem:[%s476 + $0xa30] sm:$0xff]
                  %651 = vst [vmem:[%s477 + $0x2b0] sm:$0xff] %v650
                  %v652 = vld [vmem:[%s476 + $0xa38] sm:$0xff]
                  %653 = vst [vmem:[%s477 + $0x2b8] sm:$0xff] %v652
                  %v654 = vld [vmem:[%s476 + $0xa40] sm:$0xff]
                  %655 = vst [vmem:[%s477 + $0x2c0] sm:$0xff] %v654
                  %v656 = vld [vmem:[%s476 + $0xa48] sm:$0xff]
                  %657 = vst [vmem:[%s477 + $0x2c8] sm:$0xff] %v656
                  %v658 = vld [vmem:[%s476 + $0xa50] sm:$0xff]
                  %659 = vst [vmem:[%s477 + $0x2d0] sm:$0xff] %v658
                  %v660 = vld [vmem:[%s476 + $0xa58] sm:$0xff]
                  %661 = vst [vmem:[%s477 + $0x2d8] sm:$0xff] %v660
                  %v662 = vld [vmem:[%s476 + $0xa60] sm:$0xff]
                  %663 = vst [vmem:[%s477 + $0x2e0] sm:$0xff] %v662
                  %v664 = vld [vmem:[%s476 + $0xa68] sm:$0xff]
                  %665 = vst [vmem:[%s477 + $0x2e8] sm:$0xff] %v664
                  %v666 = vld [vmem:[%s476 + $0xa70] sm:$0xff]
                  %667 = vst [vmem:[%s477 + $0x2f0] sm:$0xff] %v666
                  %v668 = vld [vmem:[%s476 + $0xa78] sm:$0xff]
                  %669 = vst [vmem:[%s477 + $0x2f8] sm:$0xff] %v668
                  %v670 = vld [vmem:[%s476 + $0xc00] sm:$0xff]
                  %671 = vst [vmem:[%s477 + $0x300] sm:$0xff] %v670
                  %v672 = vld [vmem:[%s476 + $0xc08] sm:$0xff]
                  %673 = vst [vmem:[%s477 + $0x308] sm:$0xff] %v672
                  %v674 = vld [vmem:[%s476 + $0xc10] sm:$0xff]
                  %675 = vst [vmem:[%s477 + $0x310] sm:$0xff] %v674
                  %v676 = vld [vmem:[%s476 + $0xc18] sm:$0xff]
                  %677 = vst [vmem:[%s477 + $0x318] sm:$0xff] %v676
                  %v678 = vld [vmem:[%s476 + $0xc20] sm:$0xff]
                  %679 = vst [vmem:[%s477 + $0x320] sm:$0xff] %v678
                  %v680 = vld [vmem:[%s476 + $0xc28] sm:$0xff]
                  %681 = vst [vmem:[%s477 + $0x328] sm:$0xff] %v680
                  %v682 = vld [vmem:[%s476 + $0xc30] sm:$0xff]
                  %683 = vst [vmem:[%s477 + $0x330] sm:$0xff] %v682
                  %v684 = vld [vmem:[%s476 + $0xc38] sm:$0xff]
                  %685 = vst [vmem:[%s477 + $0x338] sm:$0xff] %v684
                  %v686 = vld [vmem:[%s476 + $0xc40] sm:$0xff]
                  %687 = vst [vmem:[%s477 + $0x340] sm:$0xff] %v686
                  %v688 = vld [vmem:[%s476 + $0xc48] sm:$0xff]
                  %689 = vst [vmem:[%s477 + $0x348] sm:$0xff] %v688
                  %v690 = vld [vmem:[%s476 + $0xc50] sm:$0xff]
                  %691 = vst [vmem:[%s477 + $0x350] sm:$0xff] %v690
                  %v692 = vld [vmem:[%s476 + $0xc58] sm:$0xff]
                  %693 = vst [vmem:[%s477 + $0x358] sm:$0xff] %v692
                  %v694 = vld [vmem:[%s476 + $0xc60] sm:$0xff]
                  %695 = vst [vmem:[%s477 + $0x360] sm:$0xff] %v694
                  %v696 = vld [vmem:[%s476 + $0xc68] sm:$0xff]
                  %697 = vst [vmem:[%s477 + $0x368] sm:$0xff] %v696
                  %v698 = vld [vmem:[%s476 + $0xc70] sm:$0xff]
                  %699 = vst [vmem:[%s477 + $0x370] sm:$0xff] %v698
                  %v700 = vld [vmem:[%s476 + $0xc78] sm:$0xff]
                  %701 = vst [vmem:[%s477 + $0x378] sm:$0xff] %v700
                  %v702 = vld [vmem:[%s476 + $0xe00] sm:$0xff]
                  %703 = vst [vmem:[%s477 + $0x380] sm:$0xff] %v702
                  %v704 = vld [vmem:[%s476 + $0xe08] sm:$0xff]
                  %705 = vst [vmem:[%s477 + $0x388] sm:$0xff] %v704
                  %v706 = vld [vmem:[%s476 + $0xe10] sm:$0xff]
                  %707 = vst [vmem:[%s477 + $0x390] sm:$0xff] %v706
                  %v708 = vld [vmem:[%s476 + $0xe18] sm:$0xff]
                  %709 = vst [vmem:[%s477 + $0x398] sm:$0xff] %v708
                  %v710 = vld [vmem:[%s476 + $0xe20] sm:$0xff]
                  %711 = vst [vmem:[%s477 + $0x3a0] sm:$0xff] %v710
                  %v712 = vld [vmem:[%s476 + $0xe28] sm:$0xff]
                  %713 = vst [vmem:[%s477 + $0x3a8] sm:$0xff] %v712
                  %v714 = vld [vmem:[%s476 + $0xe30] sm:$0xff]
                  %715 = vst [vmem:[%s477 + $0x3b0] sm:$0xff] %v714
                  %v716 = vld [vmem:[%s476 + $0xe38] sm:$0xff]
                  %717 = vst [vmem:[%s477 + $0x3b8] sm:$0xff] %v716
                  %v718 = vld [vmem:[%s476 + $0xe40] sm:$0xff]
                  %719 = vst [vmem:[%s477 + $0x3c0] sm:$0xff] %v718
                  %v720 = vld [vmem:[%s476 + $0xe48] sm:$0xff]
                  %721 = vst [vmem:[%s477 + $0x3c8] sm:$0xff] %v720
                  %v722 = vld [vmem:[%s476 + $0xe50] sm:$0xff]
                  %723 = vst [vmem:[%s477 + $0x3d0] sm:$0xff] %v722
                  %v724 = vld [vmem:[%s476 + $0xe58] sm:$0xff]
                  %725 = vst [vmem:[%s477 + $0x3d8] sm:$0xff] %v724
                  %v726 = vld [vmem:[%s476 + $0xe60] sm:$0xff]
                  %727 = vst [vmem:[%s477 + $0x3e0] sm:$0xff] %v726
                  %v728 = vld [vmem:[%s476 + $0xe68] sm:$0xff]
                  %729 = vst [vmem:[%s477 + $0x3e8] sm:$0xff] %v728
                  %v730 = vld [vmem:[%s476 + $0xe70] sm:$0xff]
                  %731 = vst [vmem:[%s477 + $0x3f0] sm:$0xff] %v730
                  %v732 = vld [vmem:[%s476 + $0xe78] sm:$0xff]
                  %733 = vst [vmem:[%s477 + $0x3f8] sm:$0xff] %v732
                  %v734 = vld [vmem:[%s476 + $0x1000] sm:$0xff]
                  %735 = vst [vmem:[%s477 + $0x400] sm:$0xff] %v734
                  %v736 = vld [vmem:[%s476 + $0x1008] sm:$0xff]
                  %737 = vst [vmem:[%s477 + $0x408] sm:$0xff] %v736
                  %v738 = vld [vmem:[%s476 + $0x1010] sm:$0xff]
                  %739 = vst [vmem:[%s477 + $0x410] sm:$0xff] %v738
                  %v740 = vld [vmem:[%s476 + $0x1018] sm:$0xff]
                  %741 = vst [vmem:[%s477 + $0x418] sm:$0xff] %v740
                  %v742 = vld [vmem:[%s476 + $0x1020] sm:$0xff]
                  %743 = vst [vmem:[%s477 + $0x420] sm:$0xff] %v742
                  %v744 = vld [vmem:[%s476 + $0x1028] sm:$0xff]
                  %745 = vst [vmem:[%s477 + $0x428] sm:$0xff] %v744
                  %v746 = vld [vmem:[%s476 + $0x1030] sm:$0xff]
                  %747 = vst [vmem:[%s477 + $0x430] sm:$0xff] %v746
                  %v748 = vld [vmem:[%s476 + $0x1038] sm:$0xff]
                  %749 = vst [vmem:[%s477 + $0x438] sm:$0xff] %v748
                  %v750 = vld [vmem:[%s476 + $0x1040] sm:$0xff]
                  %751 = vst [vmem:[%s477 + $0x440] sm:$0xff] %v750
                  %v752 = vld [vmem:[%s476 + $0x1048] sm:$0xff]
                  %753 = vst [vmem:[%s477 + $0x448] sm:$0xff] %v752
                  %v754 = vld [vmem:[%s476 + $0x1050] sm:$0xff]
                  %755 = vst [vmem:[%s477 + $0x450] sm:$0xff] %v754
                  %v756 = vld [vmem:[%s476 + $0x1058] sm:$0xff]
                  %757 = vst [vmem:[%s477 + $0x458] sm:$0xff] %v756
                  %v758 = vld [vmem:[%s476 + $0x1060] sm:$0xff]
                  %759 = vst [vmem:[%s477 + $0x460] sm:$0xff] %v758
                  %v760 = vld [vmem:[%s476 + $0x1068] sm:$0xff]
                  %761 = vst [vmem:[%s477 + $0x468] sm:$0xff] %v760
                  %v762 = vld [vmem:[%s476 + $0x1070] sm:$0xff]
                  %763 = vst [vmem:[%s477 + $0x470] sm:$0xff] %v762
                  %v764 = vld [vmem:[%s476 + $0x1078] sm:$0xff]
                  %765 = vst [vmem:[%s477 + $0x478] sm:$0xff] %v764
                $region52: #{net_forward.3} parent=46 // loop_footer
                  %s475 = sadd.s32 1, %s471
                $region53: #{net_forward.3} parent=46 // loop_footer_branch
                  %470 = sbr.rel target = $region49
                $region54: #{net_forward.3} parent=46 // loop_exit
                  _
              $region47: #{net_forward.3} parent=31 // pred_fallthru
                _
              // Predicated region
              $region55: #{net_forward.3} parent=31 // pred_check
                _
              $region56: #{net_forward.3} parent=31 // pred_check_branch
                %767 = sbr.rel target = $region58
              $region57: #{net_forward.3} parent=31 // pred_region
                _
              $region58: #{net_forward.3} parent=31 // pred_fallthru
                _
            $region32: #{net_forward.3} parent=27 // pred_fallthru
              _
            // Predicated region
            $region33: #{net_forward.3} parent=27 // pred_check
              _
            $region34: #{net_forward.3} parent=27 // pred_check_branch
              %170 = sbr.rel target = $region36
            $region35: #{net_forward.3} parent=27 // pred_region
              loop: start=0, step=1, limit=1
              $region37: #{net_forward.3} parent=35 // loop_pre_header
                _
              $region38: #{net_forward.3} parent=35 // loop_header
                %s173 = sphi 0, %s177
                %p174 = scmp.ge.s32.totalorder %s173, 1
                %s178 = sphi %s164, %s164
                %s179 = sphi %s160, %s160
              $region39: #{net_forward.3} parent=35 // loop_header_branch
                %176 = sbr.rel (%p174) target = $region43
              $region40: #{net_forward.3} parent=35 // loop_body
                %v180 = vld [vmem:[%s178] sm:$0xff]
                %181 = vst [vmem:[%s179] sm:$0xff] %v180
                %v182 = vld [vmem:[%s178 + $0x8] sm:$0xff]
                %183 = vst [vmem:[%s179 + $0x8] sm:$0xff] %v182
                %v184 = vld [vmem:[%s178 + $0x10] sm:$0xff]
                %185 = vst [vmem:[%s179 + $0x10] sm:$0xff] %v184
                %v186 = vld [vmem:[%s178 + $0x18] sm:$0xff]
                %187 = vst [vmem:[%s179 + $0x18] sm:$0xff] %v186
                %v188 = vld [vmem:[%s178 + $0x20] sm:$0xff]
                %189 = vst [vmem:[%s179 + $0x20] sm:$0xff] %v188
                %v190 = vld [vmem:[%s178 + $0x28] sm:$0xff]
                %191 = vst [vmem:[%s179 + $0x28] sm:$0xff] %v190
                %v192 = vld [vmem:[%s178 + $0x30] sm:$0xff]
                %193 = vst [vmem:[%s179 + $0x30] sm:$0xff] %v192
                %v194 = vld [vmem:[%s178 + $0x38] sm:$0xff]
                %195 = vst [vmem:[%s179 + $0x38] sm:$0xff] %v194
                %v196 = vld [vmem:[%s178 + $0x40] sm:$0xff]
                %197 = vst [vmem:[%s179 + $0x40] sm:$0xff] %v196
                %v198 = vld [vmem:[%s178 + $0x48] sm:$0xff]
                %199 = vst [vmem:[%s179 + $0x48] sm:$0xff] %v198
                %v200 = vld [vmem:[%s178 + $0x50] sm:$0xff]
                %201 = vst [vmem:[%s179 + $0x50] sm:$0xff] %v200
                %v202 = vld [vmem:[%s178 + $0x58] sm:$0xff]
                %203 = vst [vmem:[%s179 + $0x58] sm:$0xff] %v202
                %v204 = vld [vmem:[%s178 + $0x60] sm:$0xff]
                %205 = vst [vmem:[%s179 + $0x60] sm:$0xff] %v204
                %v206 = vld [vmem:[%s178 + $0x68] sm:$0xff]
                %207 = vst [vmem:[%s179 + $0x68] sm:$0xff] %v206
                %v208 = vld [vmem:[%s178 + $0x70] sm:$0xff]
                %209 = vst [vmem:[%s179 + $0x70] sm:$0xff] %v208
                %v210 = vld [vmem:[%s178 + $0x78] sm:$0xff]
                %211 = vst [vmem:[%s179 + $0x78] sm:$0xff] %v210
                %v212 = vld [vmem:[%s178 + $0x200] sm:$0xff]
                %213 = vst [vmem:[%s179 + $0x80] sm:$0xff] %v212
                %v214 = vld [vmem:[%s178 + $0x208] sm:$0xff]
                %215 = vst [vmem:[%s179 + $0x88] sm:$0xff] %v214
                %v216 = vld [vmem:[%s178 + $0x210] sm:$0xff]
                %217 = vst [vmem:[%s179 + $0x90] sm:$0xff] %v216
                %v218 = vld [vmem:[%s178 + $0x218] sm:$0xff]
                %219 = vst [vmem:[%s179 + $0x98] sm:$0xff] %v218
                %v220 = vld [vmem:[%s178 + $0x220] sm:$0xff]
                %221 = vst [vmem:[%s179 + $0xa0] sm:$0xff] %v220
                %v222 = vld [vmem:[%s178 + $0x228] sm:$0xff]
                %223 = vst [vmem:[%s179 + $0xa8] sm:$0xff] %v222
                %v224 = vld [vmem:[%s178 + $0x230] sm:$0xff]
                %225 = vst [vmem:[%s179 + $0xb0] sm:$0xff] %v224
                %v226 = vld [vmem:[%s178 + $0x238] sm:$0xff]
                %227 = vst [vmem:[%s179 + $0xb8] sm:$0xff] %v226
                %v228 = vld [vmem:[%s178 + $0x240] sm:$0xff]
                %229 = vst [vmem:[%s179 + $0xc0] sm:$0xff] %v228
                %v230 = vld [vmem:[%s178 + $0x248] sm:$0xff]
                %231 = vst [vmem:[%s179 + $0xc8] sm:$0xff] %v230
                %v232 = vld [vmem:[%s178 + $0x250] sm:$0xff]
                %233 = vst [vmem:[%s179 + $0xd0] sm:$0xff] %v232
                %v234 = vld [vmem:[%s178 + $0x258] sm:$0xff]
                %235 = vst [vmem:[%s179 + $0xd8] sm:$0xff] %v234
                %v236 = vld [vmem:[%s178 + $0x260] sm:$0xff]
                %237 = vst [vmem:[%s179 + $0xe0] sm:$0xff] %v236
                %v238 = vld [vmem:[%s178 + $0x268] sm:$0xff]
                %239 = vst [vmem:[%s179 + $0xe8] sm:$0xff] %v238
                %v240 = vld [vmem:[%s178 + $0x270] sm:$0xff]
                %241 = vst [vmem:[%s179 + $0xf0] sm:$0xff] %v240
                %v242 = vld [vmem:[%s178 + $0x278] sm:$0xff]
                %243 = vst [vmem:[%s179 + $0xf8] sm:$0xff] %v242
                %v244 = vld [vmem:[%s178 + $0x400] sm:$0xff]
                %245 = vst [vmem:[%s179 + $0x100] sm:$0xff] %v244
                %v246 = vld [vmem:[%s178 + $0x408] sm:$0xff]
                %247 = vst [vmem:[%s179 + $0x108] sm:$0xff] %v246
                %v248 = vld [vmem:[%s178 + $0x410] sm:$0xff]
                %249 = vst [vmem:[%s179 + $0x110] sm:$0xff] %v248
                %v250 = vld [vmem:[%s178 + $0x418] sm:$0xff]
                %251 = vst [vmem:[%s179 + $0x118] sm:$0xff] %v250
                %v252 = vld [vmem:[%s178 + $0x420] sm:$0xff]
                %253 = vst [vmem:[%s179 + $0x120] sm:$0xff] %v252
                %v254 = vld [vmem:[%s178 + $0x428] sm:$0xff]
                %255 = vst [vmem:[%s179 + $0x128] sm:$0xff] %v254
                %v256 = vld [vmem:[%s178 + $0x430] sm:$0xff]
                %257 = vst [vmem:[%s179 + $0x130] sm:$0xff] %v256
                %v258 = vld [vmem:[%s178 + $0x438] sm:$0xff]
                %259 = vst [vmem:[%s179 + $0x138] sm:$0xff] %v258
                %v260 = vld [vmem:[%s178 + $0x440] sm:$0xff]
                %261 = vst [vmem:[%s179 + $0x140] sm:$0xff] %v260
                %v262 = vld [vmem:[%s178 + $0x448] sm:$0xff]
                %263 = vst [vmem:[%s179 + $0x148] sm:$0xff] %v262
                %v264 = vld [vmem:[%s178 + $0x450] sm:$0xff]
                %265 = vst [vmem:[%s179 + $0x150] sm:$0xff] %v264
                %v266 = vld [vmem:[%s178 + $0x458] sm:$0xff]
                %267 = vst [vmem:[%s179 + $0x158] sm:$0xff] %v266
                %v268 = vld [vmem:[%s178 + $0x460] sm:$0xff]
                %269 = vst [vmem:[%s179 + $0x160] sm:$0xff] %v268
                %v270 = vld [vmem:[%s178 + $0x468] sm:$0xff]
                %271 = vst [vmem:[%s179 + $0x168] sm:$0xff] %v270
                %v272 = vld [vmem:[%s178 + $0x470] sm:$0xff]
                %273 = vst [vmem:[%s179 + $0x170] sm:$0xff] %v272
                %v274 = vld [vmem:[%s178 + $0x478] sm:$0xff]
                %275 = vst [vmem:[%s179 + $0x178] sm:$0xff] %v274
                %v276 = vld [vmem:[%s178 + $0x600] sm:$0xff]
                %277 = vst [vmem:[%s179 + $0x180] sm:$0xff] %v276
                %v278 = vld [vmem:[%s178 + $0x608] sm:$0xff]
                %279 = vst [vmem:[%s179 + $0x188] sm:$0xff] %v278
                %v280 = vld [vmem:[%s178 + $0x610] sm:$0xff]
                %281 = vst [vmem:[%s179 + $0x190] sm:$0xff] %v280
                %v282 = vld [vmem:[%s178 + $0x618] sm:$0xff]
                %283 = vst [vmem:[%s179 + $0x198] sm:$0xff] %v282
                %v284 = vld [vmem:[%s178 + $0x620] sm:$0xff]
                %285 = vst [vmem:[%s179 + $0x1a0] sm:$0xff] %v284
                %v286 = vld [vmem:[%s178 + $0x628] sm:$0xff]
                %287 = vst [vmem:[%s179 + $0x1a8] sm:$0xff] %v286
                %v288 = vld [vmem:[%s178 + $0x630] sm:$0xff]
                %289 = vst [vmem:[%s179 + $0x1b0] sm:$0xff] %v288
                %v290 = vld [vmem:[%s178 + $0x638] sm:$0xff]
                %291 = vst [vmem:[%s179 + $0x1b8] sm:$0xff] %v290
                %v292 = vld [vmem:[%s178 + $0x640] sm:$0xff]
                %293 = vst [vmem:[%s179 + $0x1c0] sm:$0xff] %v292
                %v294 = vld [vmem:[%s178 + $0x648] sm:$0xff]
                %295 = vst [vmem:[%s179 + $0x1c8] sm:$0xff] %v294
                %v296 = vld [vmem:[%s178 + $0x650] sm:$0xff]
                %297 = vst [vmem:[%s179 + $0x1d0] sm:$0xff] %v296
                %v298 = vld [vmem:[%s178 + $0x658] sm:$0xff]
                %299 = vst [vmem:[%s179 + $0x1d8] sm:$0xff] %v298
                %v300 = vld [vmem:[%s178 + $0x660] sm:$0xff]
                %301 = vst [vmem:[%s179 + $0x1e0] sm:$0xff] %v300
                %v302 = vld [vmem:[%s178 + $0x668] sm:$0xff]
                %303 = vst [vmem:[%s179 + $0x1e8] sm:$0xff] %v302
                %v304 = vld [vmem:[%s178 + $0x670] sm:$0xff]
                %305 = vst [vmem:[%s179 + $0x1f0] sm:$0xff] %v304
                %v306 = vld [vmem:[%s178 + $0x678] sm:$0xff]
                %307 = vst [vmem:[%s179 + $0x1f8] sm:$0xff] %v306
                %v308 = vld [vmem:[%s178 + $0x800] sm:$0xff]
                %309 = vst [vmem:[%s179 + $0x200] sm:$0xff] %v308
                %v310 = vld [vmem:[%s178 + $0x808] sm:$0xff]
                %311 = vst [vmem:[%s179 + $0x208] sm:$0xff] %v310
                %v312 = vld [vmem:[%s178 + $0x810] sm:$0xff]
                %313 = vst [vmem:[%s179 + $0x210] sm:$0xff] %v312
                %v314 = vld [vmem:[%s178 + $0x818] sm:$0xff]
                %315 = vst [vmem:[%s179 + $0x218] sm:$0xff] %v314
                %v316 = vld [vmem:[%s178 + $0x820] sm:$0xff]
                %317 = vst [vmem:[%s179 + $0x220] sm:$0xff] %v316
                %v318 = vld [vmem:[%s178 + $0x828] sm:$0xff]
                %319 = vst [vmem:[%s179 + $0x228] sm:$0xff] %v318
                %v320 = vld [vmem:[%s178 + $0x830] sm:$0xff]
                %321 = vst [vmem:[%s179 + $0x230] sm:$0xff] %v320
                %v322 = vld [vmem:[%s178 + $0x838] sm:$0xff]
                %323 = vst [vmem:[%s179 + $0x238] sm:$0xff] %v322
                %v324 = vld [vmem:[%s178 + $0x840] sm:$0xff]
                %325 = vst [vmem:[%s179 + $0x240] sm:$0xff] %v324
                %v326 = vld [vmem:[%s178 + $0x848] sm:$0xff]
                %327 = vst [vmem:[%s179 + $0x248] sm:$0xff] %v326
                %v328 = vld [vmem:[%s178 + $0x850] sm:$0xff]
                %329 = vst [vmem:[%s179 + $0x250] sm:$0xff] %v328
                %v330 = vld [vmem:[%s178 + $0x858] sm:$0xff]
                %331 = vst [vmem:[%s179 + $0x258] sm:$0xff] %v330
                %v332 = vld [vmem:[%s178 + $0x860] sm:$0xff]
                %333 = vst [vmem:[%s179 + $0x260] sm:$0xff] %v332
                %v334 = vld [vmem:[%s178 + $0x868] sm:$0xff]
                %335 = vst [vmem:[%s179 + $0x268] sm:$0xff] %v334
                %v336 = vld [vmem:[%s178 + $0x870] sm:$0xff]
                %337 = vst [vmem:[%s179 + $0x270] sm:$0xff] %v336
                %v338 = vld [vmem:[%s178 + $0x878] sm:$0xff]
                %339 = vst [vmem:[%s179 + $0x278] sm:$0xff] %v338
                %v340 = vld [vmem:[%s178 + $0xa00] sm:$0xff]
                %341 = vst [vmem:[%s179 + $0x280] sm:$0xff] %v340
                %v342 = vld [vmem:[%s178 + $0xa08] sm:$0xff]
                %343 = vst [vmem:[%s179 + $0x288] sm:$0xff] %v342
                %v344 = vld [vmem:[%s178 + $0xa10] sm:$0xff]
                %345 = vst [vmem:[%s179 + $0x290] sm:$0xff] %v344
                %v346 = vld [vmem:[%s178 + $0xa18] sm:$0xff]
                %347 = vst [vmem:[%s179 + $0x298] sm:$0xff] %v346
                %v348 = vld [vmem:[%s178 + $0xa20] sm:$0xff]
                %349 = vst [vmem:[%s179 + $0x2a0] sm:$0xff] %v348
                %v350 = vld [vmem:[%s178 + $0xa28] sm:$0xff]
                %351 = vst [vmem:[%s179 + $0x2a8] sm:$0xff] %v350
                %v352 = vld [vmem:[%s178 + $0xa30] sm:$0xff]
                %353 = vst [vmem:[%s179 + $0x2b0] sm:$0xff] %v352
                %v354 = vld [vmem:[%s178 + $0xa38] sm:$0xff]
                %355 = vst [vmem:[%s179 + $0x2b8] sm:$0xff] %v354
                %v356 = vld [vmem:[%s178 + $0xa40] sm:$0xff]
                %357 = vst [vmem:[%s179 + $0x2c0] sm:$0xff] %v356
                %v358 = vld [vmem:[%s178 + $0xa48] sm:$0xff]
                %359 = vst [vmem:[%s179 + $0x2c8] sm:$0xff] %v358
                %v360 = vld [vmem:[%s178 + $0xa50] sm:$0xff]
                %361 = vst [vmem:[%s179 + $0x2d0] sm:$0xff] %v360
                %v362 = vld [vmem:[%s178 + $0xa58] sm:$0xff]
                %363 = vst [vmem:[%s179 + $0x2d8] sm:$0xff] %v362
                %v364 = vld [vmem:[%s178 + $0xa60] sm:$0xff]
                %365 = vst [vmem:[%s179 + $0x2e0] sm:$0xff] %v364
                %v366 = vld [vmem:[%s178 + $0xa68] sm:$0xff]
                %367 = vst [vmem:[%s179 + $0x2e8] sm:$0xff] %v366
                %v368 = vld [vmem:[%s178 + $0xa70] sm:$0xff]
                %369 = vst [vmem:[%s179 + $0x2f0] sm:$0xff] %v368
                %v370 = vld [vmem:[%s178 + $0xa78] sm:$0xff]
                %371 = vst [vmem:[%s179 + $0x2f8] sm:$0xff] %v370
                %v372 = vld [vmem:[%s178 + $0xc00] sm:$0xff]
                %373 = vst [vmem:[%s179 + $0x300] sm:$0xff] %v372
                %v374 = vld [vmem:[%s178 + $0xc08] sm:$0xff]
                %375 = vst [vmem:[%s179 + $0x308] sm:$0xff] %v374
                %v376 = vld [vmem:[%s178 + $0xc10] sm:$0xff]
                %377 = vst [vmem:[%s179 + $0x310] sm:$0xff] %v376
                %v378 = vld [vmem:[%s178 + $0xc18] sm:$0xff]
                %379 = vst [vmem:[%s179 + $0x318] sm:$0xff] %v378
                %v380 = vld [vmem:[%s178 + $0xc20] sm:$0xff]
                %381 = vst [vmem:[%s179 + $0x320] sm:$0xff] %v380
                %v382 = vld [vmem:[%s178 + $0xc28] sm:$0xff]
                %383 = vst [vmem:[%s179 + $0x328] sm:$0xff] %v382
                %v384 = vld [vmem:[%s178 + $0xc30] sm:$0xff]
                %385 = vst [vmem:[%s179 + $0x330] sm:$0xff] %v384
                %v386 = vld [vmem:[%s178 + $0xc38] sm:$0xff]
                %387 = vst [vmem:[%s179 + $0x338] sm:$0xff] %v386
                %v388 = vld [vmem:[%s178 + $0xc40] sm:$0xff]
                %389 = vst [vmem:[%s179 + $0x340] sm:$0xff] %v388
                %v390 = vld [vmem:[%s178 + $0xc48] sm:$0xff]
                %391 = vst [vmem:[%s179 + $0x348] sm:$0xff] %v390
                %v392 = vld [vmem:[%s178 + $0xc50] sm:$0xff]
                %393 = vst [vmem:[%s179 + $0x350] sm:$0xff] %v392
                %v394 = vld [vmem:[%s178 + $0xc58] sm:$0xff]
                %395 = vst [vmem:[%s179 + $0x358] sm:$0xff] %v394
                %v396 = vld [vmem:[%s178 + $0xc60] sm:$0xff]
                %397 = vst [vmem:[%s179 + $0x360] sm:$0xff] %v396
                %v398 = vld [vmem:[%s178 + $0xc68] sm:$0xff]
                %399 = vst [vmem:[%s179 + $0x368] sm:$0xff] %v398
                %v400 = vld [vmem:[%s178 + $0xc70] sm:$0xff]
                %401 = vst [vmem:[%s179 + $0x370] sm:$0xff] %v400
                %v402 = vld [vmem:[%s178 + $0xc78] sm:$0xff]
                %403 = vst [vmem:[%s179 + $0x378] sm:$0xff] %v402
                %v404 = vld [vmem:[%s178 + $0xe00] sm:$0xff]
                %405 = vst [vmem:[%s179 + $0x380] sm:$0xff] %v404
                %v406 = vld [vmem:[%s178 + $0xe08] sm:$0xff]
                %407 = vst [vmem:[%s179 + $0x388] sm:$0xff] %v406
                %v408 = vld [vmem:[%s178 + $0xe10] sm:$0xff]
                %409 = vst [vmem:[%s179 + $0x390] sm:$0xff] %v408
                %v410 = vld [vmem:[%s178 + $0xe18] sm:$0xff]
                %411 = vst [vmem:[%s179 + $0x398] sm:$0xff] %v410
                %v412 = vld [vmem:[%s178 + $0xe20] sm:$0xff]
                %413 = vst [vmem:[%s179 + $0x3a0] sm:$0xff] %v412
                %v414 = vld [vmem:[%s178 + $0xe28] sm:$0xff]
                %415 = vst [vmem:[%s179 + $0x3a8] sm:$0xff] %v414
                %v416 = vld [vmem:[%s178 + $0xe30] sm:$0xff]
                %417 = vst [vmem:[%s179 + $0x3b0] sm:$0xff] %v416
                %v418 = vld [vmem:[%s178 + $0xe38] sm:$0xff]
                %419 = vst [vmem:[%s179 + $0x3b8] sm:$0xff] %v418
                %v420 = vld [vmem:[%s178 + $0xe40] sm:$0xff]
                %421 = vst [vmem:[%s179 + $0x3c0] sm:$0xff] %v420
                %v422 = vld [vmem:[%s178 + $0xe48] sm:$0xff]
                %423 = vst [vmem:[%s179 + $0x3c8] sm:$0xff] %v422
                %v424 = vld [vmem:[%s178 + $0xe50] sm:$0xff]
                %425 = vst [vmem:[%s179 + $0x3d0] sm:$0xff] %v424
                %v426 = vld [vmem:[%s178 + $0xe58] sm:$0xff]
                %427 = vst [vmem:[%s179 + $0x3d8] sm:$0xff] %v426
                %v428 = vld [vmem:[%s178 + $0xe60] sm:$0xff]
                %429 = vst [vmem:[%s179 + $0x3e0] sm:$0xff] %v428
                %v430 = vld [vmem:[%s178 + $0xe68] sm:$0xff]
                %431 = vst [vmem:[%s179 + $0x3e8] sm:$0xff] %v430
                %v432 = vld [vmem:[%s178 + $0xe70] sm:$0xff]
                %433 = vst [vmem:[%s179 + $0x3f0] sm:$0xff] %v432
                %v434 = vld [vmem:[%s178 + $0xe78] sm:$0xff]
                %435 = vst [vmem:[%s179 + $0x3f8] sm:$0xff] %v434
                %v436 = vld [vmem:[%s178 + $0x1000] sm:$0xff]
                %437 = vst [vmem:[%s179 + $0x400] sm:$0xff] %v436
                %v438 = vld [vmem:[%s178 + $0x1008] sm:$0xff]
                %439 = vst [vmem:[%s179 + $0x408] sm:$0xff] %v438
                %v440 = vld [vmem:[%s178 + $0x1010] sm:$0xff]
                %441 = vst [vmem:[%s179 + $0x410] sm:$0xff] %v440
                %v442 = vld [vmem:[%s178 + $0x1018] sm:$0xff]
                %443 = vst [vmem:[%s179 + $0x418] sm:$0xff] %v442
                %v444 = vld [vmem:[%s178 + $0x1020] sm:$0xff]
                %445 = vst [vmem:[%s179 + $0x420] sm:$0xff] %v444
                %v446 = vld [vmem:[%s178 + $0x1028] sm:$0xff]
                %447 = vst [vmem:[%s179 + $0x428] sm:$0xff] %v446
                %v448 = vld [vmem:[%s178 + $0x1030] sm:$0xff]
                %449 = vst [vmem:[%s179 + $0x430] sm:$0xff] %v448
                %v450 = vld [vmem:[%s178 + $0x1038] sm:$0xff]
                %451 = vst [vmem:[%s179 + $0x438] sm:$0xff] %v450
                %v452 = vld [vmem:[%s178 + $0x1040] sm:$0xff]
                %453 = vst [vmem:[%s179 + $0x440] sm:$0xff] %v452
                %v454 = vld [vmem:[%s178 + $0x1048] sm:$0xff]
                %455 = vst [vmem:[%s179 + $0x448] sm:$0xff] %v454
                %v456 = vld [vmem:[%s178 + $0x1050] sm:$0xff]
                %457 = vst [vmem:[%s179 + $0x450] sm:$0xff] %v456
                %v458 = vld [vmem:[%s178 + $0x1058] sm:$0xff]
                %459 = vst [vmem:[%s179 + $0x458] sm:$0xff] %v458
                %v460 = vld [vmem:[%s178 + $0x1060] sm:$0xff]
                %461 = vst [vmem:[%s179 + $0x460] sm:$0xff] %v460
                %v462 = vld [vmem:[%s178 + $0x1068] sm:$0xff]
                %463 = vst [vmem:[%s179 + $0x468] sm:$0xff] %v462
                %v464 = vld [vmem:[%s178 + $0x1070] sm:$0xff]
                %465 = vst [vmem:[%s179 + $0x470] sm:$0xff] %v464
                %v466 = vld [vmem:[%s178 + $0x1078] sm:$0xff]
                %467 = vst [vmem:[%s179 + $0x478] sm:$0xff] %v466
              $region41: #{net_forward.3} parent=35 // loop_footer
                %s177 = sadd.s32 1, %s173
              $region42: #{net_forward.3} parent=35 // loop_footer_branch
                %172 = sbr.rel target = $region38
              $region43: #{net_forward.3} parent=35 // loop_exit
                _
            $region36: #{net_forward.3} parent=27 // pred_fallthru
              _
          $region28: #{net_forward.3} parent=23 // pred_fallthru
            _
          %768 = vnop
        $region24: #{net_forward.3} parent=15 // pred_fallthru
          _
        // Predicated region
        $region59: #{net_forward.3} parent=15 // pred_check
          %p769 = pneg %p93
        $region60: #{net_forward.3} parent=15 // pred_check_branch
          %771 = sbr.rel (%p769) target = $region62
        $region61: #{net_forward.3} parent=15 // pred_region
          %s772 = smul.u32 8, %s17
          %p773 = scmp.lt.s32.totalorder %s772, 31
          %s774 = scalar_select %p773, %s772, 31
          %s775 = smul.addr %s774, 2
          %s776 = smul.addr %s775, 8
          %s777 = scalar_lea.vmem %s2, %s776
          %s778 = smul.u32 8, %s17
        $region62: #{net_forward.3} parent=15 // pred_fallthru
          _
      $region16: #{net_forward.3} parent=5 // pred_fallthru
        _
      %p779 = scmp.le.s32.totalorder 1, %s9
      %p780 = scmp.lt.s32.totalorder %s9, 9
      %p781 = pnand %p779, %p780
      %p782 = pneg %p781
      // Predicated region
      $region63: #{net_forward.3} parent=5 // pred_check
        _
      $region64: #{net_forward.3} parent=5 // pred_check_branch
        %784 = sbr.rel (%p781) target = $region66
      $region65: #{net_forward.3} parent=5 // pred_region
        %s785 = ssub.s32 %s9, 1
        %s786 = sand.u32 %s60, 1
        %s787 = sand.u32 %s60, 1
        %s788 = smul.addr %s787, 1152
        %s789 = scalar_lea.vmem [#allocation2], %s788
        // Predicated region
        $region67: #{net_forward.3} parent=65 // pred_check
          %p790 = pneg %p73
        $region68: #{net_forward.3} parent=65 // pred_check_branch
          %792 = sbr.rel (%p790) target = $region70
        $region69: #{net_forward.3} parent=65 // pred_region
          _
        $region70: #{net_forward.3} parent=65 // pred_fallthru
          _
        %p793 = scmp.lt.s32.totalorder %s18, 1
        %s794 = scalar_select %p793, %s18, 1
        %s795 = smul.addr %s794, 32
        %s796 = smul.addr %s795, 8
        %s797 = scalar_lea.vmem %s0, %s796
        %p798 = pneg %p47
        %p799 = pneg %p44
        %s800 = sand.u32 %s60, 1
        %s801 = sand.u32 %s60, 1
        %s802 = smul.addr %s801, 1152
        %s803 = scalar_lea.vmem [#allocation2], %s802
        %p804 = pneg %p73
        %p805 = pneg %p70
        %s806 = smul.u32 8, %s19
        %p807 = scmp.lt.s32.totalorder %s806, 31
        %s808 = scalar_select %p807, %s806, 31
        %s809 = smul.addr %s808, 2
        %s810 = smul.addr %s809, 8
        %s811 = scalar_lea.vmem %s2, %s810
        %p812 = pneg %p99
        %p813 = pneg %p96
        %p814 = pneg %p127
        %p815 = pneg %p124
        %s816 = smul.u32 8, %s19
        %p817 = scmp.lt.s32.totalorder %s18, 1
        %s818 = scalar_select %p817, %s18, 1
        %p819 = scmp.lt.s32.totalorder %s816, 31
        %s820 = scalar_select %p819, %s816, 31
        %s821 = smul.addr %s820, 2
        %s822 = smul.addr %s818, 64
        %s823 = sadd.s32 %s821, %s822
        %s824 = smul.addr %s823, 8
        %s825 = scalar_lea.vmem %s3, %s824
        %p826 = scmp.lt.s32.totalorder %s18, 1
        %s827 = scalar_select %p826, %s18, 1
        %s828 = smul.addr %s827, 32
        %s829 = smul.addr %s828, 8
        %s830 = scalar_lea.vmem %s0, %s829
        %s831 = smul.u32 8, %s19
        %s832 = smul.u32 8, %s19
        %p833 = scmp.lt.s32.totalorder %s832, 31
        %s834 = scalar_select %p833, %s832, 31
        %s835 = smul.addr %s834, 2
        %s836 = smul.addr %s835, 8
        %s837 = scalar_lea.vmem %s2, %s836
        %s838 = smul.u32 8, %s19
        %s839 = smul.u32 8, %s19
        %p840 = scmp.lt.s32.totalorder %s18, 1
        %s841 = scalar_select %p840, %s18, 1
        %p842 = scmp.lt.s32.totalorder %s839, 31
        %s843 = scalar_select %p842, %s839, 31
        %s844 = smul.addr %s843, 2
        %s845 = smul.addr %s841, 64
        %s846 = sadd.s32 %s844, %s845
        %s847 = smul.addr %s846, 8
        %s848 = scalar_lea.vmem %s3, %s847
        %s849 = smul.u32 8, %s19
        %v850 = vld [vmem:[%s830] sm:$0xff]
        %v851 = vld [vmem:[%s830 + $0x8] sm:$0x1f]
        %v852 = vld [vmem:[%s789] sm:$0xff]
        %v853 = vld [vmem:[%s789 + $0x8] sm:$0x1f]
        %v854 = vld [vmem:[%s789 + $0x10] sm:$0xff]
        %v855 = vld [vmem:[%s789 + $0x18] sm:$0x1f]
        %v856 = vld [vmem:[%s789 + $0x20] sm:$0xff]
        %v857 = vld [vmem:[%s789 + $0x28] sm:$0x1f]
        %v858 = vld [vmem:[%s789 + $0x30] sm:$0xff]
        %v859 = vld [vmem:[%s789 + $0x38] sm:$0x1f]
        %v860 = vld [vmem:[%s789 + $0x40] sm:$0xff]
        %v861 = vld [vmem:[%s789 + $0x48] sm:$0x1f]
        %v862 = vld [vmem:[%s789 + $0x50] sm:$0xff]
        %v863 = vld [vmem:[%s789 + $0x58] sm:$0x1f]
        %v864 = vld [vmem:[%s789 + $0x60] sm:$0xff]
        %v865 = vld [vmem:[%s789 + $0x68] sm:$0x1f]
        %v866 = vld [vmem:[%s789 + $0x70] sm:$0xff]
        %v867 = vld [vmem:[%s789 + $0x78] sm:$0x1f]
        %v868 = vmul.f32 %v852, %v850
        %v869 = vmul.f32 %v853, %v851
        %v870 = vmul.f32 %v854, %v850
        %v871 = vmul.f32 %v855, %v851
        %v872 = vmul.f32 %v856, %v850
        %v873 = vmul.f32 %v857, %v851
        %v874 = vmul.f32 %v858, %v850
        %v875 = vmul.f32 %v859, %v851
        %v876 = vmul.f32 %v860, %v850
        %v877 = vmul.f32 %v861, %v851
        %v878 = vmul.f32 %v862, %v850
        %v879 = vmul.f32 %v863, %v851
        %v880 = vmul.f32 %v864, %v850
        %v881 = vmul.f32 %v865, %v851
        %v882 = vmul.f32 %v866, %v850
        %v883 = vmul.f32 %v867, %v851
        %s884 = scalar_lea.vmem %s830, 16
        %v885 = vld [vmem:[%s884] sm:$0xff]
        %v886 = vld [vmem:[%s884 + $0x8] sm:$0x1f]
        %s887 = scalar_lea.vmem %s789, 128 [#allocation2]
        %v888 = vld [vmem:[%s887] sm:$0xff]
        %v889 = vld [vmem:[%s887 + $0x8] sm:$0x1f]
        %v890 = vld [vmem:[%s887 + $0x10] sm:$0xff]
        %v891 = vld [vmem:[%s887 + $0x18] sm:$0x1f]
        %v892 = vld [vmem:[%s887 + $0x20] sm:$0xff]
        %v893 = vld [vmem:[%s887 + $0x28] sm:$0x1f]
        %v894 = vld [vmem:[%s887 + $0x30] sm:$0xff]
        %v895 = vld [vmem:[%s887 + $0x38] sm:$0x1f]
        %v896 = vld [vmem:[%s887 + $0x40] sm:$0xff]
        %v897 = vld [vmem:[%s887 + $0x48] sm:$0x1f]
        %v898 = vld [vmem:[%s887 + $0x50] sm:$0xff]
        %v899 = vld [vmem:[%s887 + $0x58] sm:$0x1f]
        %v900 = vld [vmem:[%s887 + $0x60] sm:$0xff]
        %v901 = vld [vmem:[%s887 + $0x68] sm:$0x1f]
        %v902 = vld [vmem:[%s887 + $0x70] sm:$0xff]
        %v903 = vld [vmem:[%s887 + $0x78] sm:$0x1f]
        %v904 = vmul.f32 %v888, %v885
        %v905 = vmul.f32 %v889, %v886
        %v906 = vmul.f32 %v890, %v885
        %v907 = vmul.f32 %v891, %v886
        %v908 = vmul.f32 %v892, %v885
        %v909 = vmul.f32 %v893, %v886
        %v910 = vmul.f32 %v894, %v885
        %v911 = vmul.f32 %v895, %v886
        %v912 = vmul.f32 %v896, %v885
        %v913 = vmul.f32 %v897, %v886
        %v914 = vmul.f32 %v898, %v885
        %v915 = vmul.f32 %v899, %v886
        %v916 = vmul.f32 %v900, %v885
        %v917 = vmul.f32 %v901, %v886
        %v918 = vmul.f32 %v902, %v885
        %v919 = vmul.f32 %v903, %v886
        %v920 = vadd.f32 %v868, %v904
        %v921 = vadd.f32 %v869, %v905
        %v922 = vadd.f32 %v870, %v906
        %v923 = vadd.f32 %v871, %v907
        %v924 = vadd.f32 %v872, %v908
        %v925 = vadd.f32 %v873, %v909
        %v926 = vadd.f32 %v874, %v910
        %v927 = vadd.f32 %v875, %v911
        %v928 = vadd.f32 %v876, %v912
        %v929 = vadd.f32 %v877, %v913
        %v930 = vadd.f32 %v878, %v914
        %v931 = vadd.f32 %v879, %v915
        %v932 = vadd.f32 %v880, %v916
        %v933 = vadd.f32 %v881, %v917
        %v934 = vadd.f32 %v882, %v918
        %v935 = vadd.f32 %v883, %v919
        %s936 = scalar_lea.vmem %s830, 32
        %v937 = vld [vmem:[%s936] sm:$0xff]
        %v938 = vld [vmem:[%s936 + $0x8] sm:$0x1f]
        %s939 = scalar_lea.vmem %s789, 256 [#allocation2]
        %v940 = vld [vmem:[%s939] sm:$0xff]
        %v941 = vld [vmem:[%s939 + $0x8] sm:$0x1f]
        %v942 = vld [vmem:[%s939 + $0x10] sm:$0xff]
        %v943 = vld [vmem:[%s939 + $0x18] sm:$0x1f]
        %v944 = vld [vmem:[%s939 + $0x20] sm:$0xff]
        %v945 = vld [vmem:[%s939 + $0x28] sm:$0x1f]
        %v946 = vld [vmem:[%s939 + $0x30] sm:$0xff]
        %v947 = vld [vmem:[%s939 + $0x38] sm:$0x1f]
        %v948 = vld [vmem:[%s939 + $0x40] sm:$0xff]
        %v949 = vld [vmem:[%s939 + $0x48] sm:$0x1f]
        %v950 = vld [vmem:[%s939 + $0x50] sm:$0xff]
        %v951 = vld [vmem:[%s939 + $0x58] sm:$0x1f]
        %v952 = vld [vmem:[%s939 + $0x60] sm:$0xff]
        %v953 = vld [vmem:[%s939 + $0x68] sm:$0x1f]
        %v954 = vld [vmem:[%s939 + $0x70] sm:$0xff]
        %v955 = vld [vmem:[%s939 + $0x78] sm:$0x1f]
        %v956 = vmul.f32 %v940, %v937
        %v957 = vmul.f32 %v941, %v938
        %v958 = vmul.f32 %v942, %v937
        %v959 = vmul.f32 %v943, %v938
        %v960 = vmul.f32 %v944, %v937
        %v961 = vmul.f32 %v945, %v938
        %v962 = vmul.f32 %v946, %v937
        %v963 = vmul.f32 %v947, %v938
        %v964 = vmul.f32 %v948, %v937
        %v965 = vmul.f32 %v949, %v938
        %v966 = vmul.f32 %v950, %v937
        %v967 = vmul.f32 %v951, %v938
        %v968 = vmul.f32 %v952, %v937
        %v969 = vmul.f32 %v953, %v938
        %v970 = vmul.f32 %v954, %v937
        %v971 = vmul.f32 %v955, %v938
        %v972 = vadd.f32 %v920, %v956
        %v973 = vadd.f32 %v921, %v957
        %v974 = vadd.f32 %v922, %v958
        %v975 = vadd.f32 %v923, %v959
        %v976 = vadd.f32 %v924, %v960
        %v977 = vadd.f32 %v925, %v961
        %v978 = vadd.f32 %v926, %v962
        %v979 = vadd.f32 %v927, %v963
        %v980 = vadd.f32 %v928, %v964
        %v981 = vadd.f32 %v929, %v965
        %v982 = vadd.f32 %v930, %v966
        %v983 = vadd.f32 %v931, %v967
        %v984 = vadd.f32 %v932, %v968
        %v985 = vadd.f32 %v933, %v969
        %v986 = vadd.f32 %v934, %v970
        %v987 = vadd.f32 %v935, %v971
        %s988 = scalar_lea.vmem %s830, 64
        %v989 = vld [vmem:[%s988] sm:$0xff]
        %v990 = vld [vmem:[%s988 + $0x8] sm:$0x1f]
        %s991 = scalar_lea.vmem %s789, 384 [#allocation2]
        %v992 = vld [vmem:[%s991] sm:$0xff]
        %v993 = vld [vmem:[%s991 + $0x8] sm:$0x1f]
        %v994 = vld [vmem:[%s991 + $0x10] sm:$0xff]
        %v995 = vld [vmem:[%s991 + $0x18] sm:$0x1f]
        %v996 = vld [vmem:[%s991 + $0x20] sm:$0xff]
        %v997 = vld [vmem:[%s991 + $0x28] sm:$0x1f]
        %v998 = vld [vmem:[%s991 + $0x30] sm:$0xff]
        %v999 = vld [vmem:[%s991 + $0x38] sm:$0x1f]
        %v1000 = vld [vmem:[%s991 + $0x40] sm:$0xff]
        %v1001 = vld [vmem:[%s991 + $0x48] sm:$0x1f]
        %v1002 = vld [vmem:[%s991 + $0x50] sm:$0xff]
        %v1003 = vld [vmem:[%s991 + $0x58] sm:$0x1f]
        %v1004 = vld [vmem:[%s991 + $0x60] sm:$0xff]
        %v1005 = vld [vmem:[%s991 + $0x68] sm:$0x1f]
        %v1006 = vld [vmem:[%s991 + $0x70] sm:$0xff]
        %v1007 = vld [vmem:[%s991 + $0x78] sm:$0x1f]
        %v1008 = vmul.f32 %v992, %v989
        %v1009 = vmul.f32 %v993, %v990
        %v1010 = vmul.f32 %v994, %v989
        %v1011 = vmul.f32 %v995, %v990
        %v1012 = vmul.f32 %v996, %v989
        %v1013 = vmul.f32 %v997, %v990
        %v1014 = vmul.f32 %v998, %v989
        %v1015 = vmul.f32 %v999, %v990
        %v1016 = vmul.f32 %v1000, %v989
        %v1017 = vmul.f32 %v1001, %v990
        %v1018 = vmul.f32 %v1002, %v989
        %v1019 = vmul.f32 %v1003, %v990
        %v1020 = vmul.f32 %v1004, %v989
        %v1021 = vmul.f32 %v1005, %v990
        %v1022 = vmul.f32 %v1006, %v989
        %v1023 = vmul.f32 %v1007, %v990
        %v1024 = vadd.f32 %v972, %v1008
        %v1025 = vadd.f32 %v973, %v1009
        %v1026 = vadd.f32 %v974, %v1010
        %v1027 = vadd.f32 %v975, %v1011
        %v1028 = vadd.f32 %v976, %v1012
        %v1029 = vadd.f32 %v977, %v1013
        %v1030 = vadd.f32 %v978, %v1014
        %v1031 = vadd.f32 %v979, %v1015
        %v1032 = vadd.f32 %v980, %v1016
        %v1033 = vadd.f32 %v981, %v1017
        %v1034 = vadd.f32 %v982, %v1018
        %v1035 = vadd.f32 %v983, %v1019
        %v1036 = vadd.f32 %v984, %v1020
        %v1037 = vadd.f32 %v985, %v1021
        %v1038 = vadd.f32 %v986, %v1022
        %v1039 = vadd.f32 %v987, %v1023
        %s1040 = scalar_lea.vmem %s830, 80
        %v1041 = vld [vmem:[%s1040] sm:$0xff]
        %v1042 = vld [vmem:[%s1040 + $0x8] sm:$0x1f]
        %s1043 = scalar_lea.vmem %s789, 512 [#allocation2]
        %v1044 = vld [vmem:[%s1043] sm:$0xff]
        %v1045 = vld [vmem:[%s1043 + $0x8] sm:$0x1f]
        %v1046 = vld [vmem:[%s1043 + $0x10] sm:$0xff]
        %v1047 = vld [vmem:[%s1043 + $0x18] sm:$0x1f]
        %v1048 = vld [vmem:[%s1043 + $0x20] sm:$0xff]
        %v1049 = vld [vmem:[%s1043 + $0x28] sm:$0x1f]
        %v1050 = vld [vmem:[%s1043 + $0x30] sm:$0xff]
        %v1051 = vld [vmem:[%s1043 + $0x38] sm:$0x1f]
        %v1052 = vld [vmem:[%s1043 + $0x40] sm:$0xff]
        %v1053 = vld [vmem:[%s1043 + $0x48] sm:$0x1f]
        %v1054 = vld [vmem:[%s1043 + $0x50] sm:$0xff]
        %v1055 = vld [vmem:[%s1043 + $0x58] sm:$0x1f]
        %v1056 = vld [vmem:[%s1043 + $0x60] sm:$0xff]
        %v1057 = vld [vmem:[%s1043 + $0x68] sm:$0x1f]
        %v1058 = vld [vmem:[%s1043 + $0x70] sm:$0xff]
        %v1059 = vld [vmem:[%s1043 + $0x78] sm:$0x1f]
        %v1060 = vmul.f32 %v1044, %v1041
        %v1061 = vmul.f32 %v1045, %v1042
        %v1062 = vmul.f32 %v1046, %v1041
        %v1063 = vmul.f32 %v1047, %v1042
        %v1064 = vmul.f32 %v1048, %v1041
        %v1065 = vmul.f32 %v1049, %v1042
        %v1066 = vmul.f32 %v1050, %v1041
        %v1067 = vmul.f32 %v1051, %v1042
        %v1068 = vmul.f32 %v1052, %v1041
        %v1069 = vmul.f32 %v1053, %v1042
        %v1070 = vmul.f32 %v1054, %v1041
        %v1071 = vmul.f32 %v1055, %v1042
        %v1072 = vmul.f32 %v1056, %v1041
        %v1073 = vmul.f32 %v1057, %v1042
        %v1074 = vmul.f32 %v1058, %v1041
        %v1075 = vmul.f32 %v1059, %v1042
        %v1076 = vadd.f32 %v1024, %v1060
        %v1077 = vadd.f32 %v1025, %v1061
        %v1078 = vadd.f32 %v1026, %v1062
        %v1079 = vadd.f32 %v1027, %v1063
        %v1080 = vadd.f32 %v1028, %v1064
        %v1081 = vadd.f32 %v1029, %v1065
        %v1082 = vadd.f32 %v1030, %v1066
        %v1083 = vadd.f32 %v1031, %v1067
        %v1084 = vadd.f32 %v1032, %v1068
        %v1085 = vadd.f32 %v1033, %v1069
        %v1086 = vadd.f32 %v1034, %v1070
        %v1087 = vadd.f32 %v1035, %v1071
        %v1088 = vadd.f32 %v1036, %v1072
        %v1089 = vadd.f32 %v1037, %v1073
        %v1090 = vadd.f32 %v1038, %v1074
        %v1091 = vadd.f32 %v1039, %v1075
        %s1092 = scalar_lea.vmem %s830, 96
        %v1093 = vld [vmem:[%s1092] sm:$0xff]
        %v1094 = vld [vmem:[%s1092 + $0x8] sm:$0x1f]
        %s1095 = scalar_lea.vmem %s789, 640 [#allocation2]
        %v1096 = vld [vmem:[%s1095] sm:$0xff]
        %v1097 = vld [vmem:[%s1095 + $0x8] sm:$0x1f]
        %v1098 = vld [vmem:[%s1095 + $0x10] sm:$0xff]
        %v1099 = vld [vmem:[%s1095 + $0x18] sm:$0x1f]
        %v1100 = vld [vmem:[%s1095 + $0x20] sm:$0xff]
        %v1101 = vld [vmem:[%s1095 + $0x28] sm:$0x1f]
        %v1102 = vld [vmem:[%s1095 + $0x30] sm:$0xff]
        %v1103 = vld [vmem:[%s1095 + $0x38] sm:$0x1f]
        %v1104 = vld [vmem:[%s1095 + $0x40] sm:$0xff]
        %v1105 = vld [vmem:[%s1095 + $0x48] sm:$0x1f]
        %v1106 = vld [vmem:[%s1095 + $0x50] sm:$0xff]
        %v1107 = vld [vmem:[%s1095 + $0x58] sm:$0x1f]
        %v1108 = vld [vmem:[%s1095 + $0x60] sm:$0xff]
        %v1109 = vld [vmem:[%s1095 + $0x68] sm:$0x1f]
        %v1110 = vld [vmem:[%s1095 + $0x70] sm:$0xff]
        %v1111 = vld [vmem:[%s1095 + $0x78] sm:$0x1f]
        %v1112 = vmul.f32 %v1096, %v1093
        %v1113 = vmul.f32 %v1097, %v1094
        %v1114 = vmul.f32 %v1098, %v1093
        %v1115 = vmul.f32 %v1099, %v1094
        %v1116 = vmul.f32 %v1100, %v1093
        %v1117 = vmul.f32 %v1101, %v1094
        %v1118 = vmul.f32 %v1102, %v1093
        %v1119 = vmul.f32 %v1103, %v1094
        %v1120 = vmul.f32 %v1104, %v1093
        %v1121 = vmul.f32 %v1105, %v1094
        %v1122 = vmul.f32 %v1106, %v1093
        %v1123 = vmul.f32 %v1107, %v1094
        %v1124 = vmul.f32 %v1108, %v1093
        %v1125 = vmul.f32 %v1109, %v1094
        %v1126 = vmul.f32 %v1110, %v1093
        %v1127 = vmul.f32 %v1111, %v1094
        %v1128 = vadd.f32 %v1076, %v1112
        %v1129 = vadd.f32 %v1077, %v1113
        %v1130 = vadd.f32 %v1078, %v1114
        %v1131 = vadd.f32 %v1079, %v1115
        %v1132 = vadd.f32 %v1080, %v1116
        %v1133 = vadd.f32 %v1081, %v1117
        %v1134 = vadd.f32 %v1082, %v1118
        %v1135 = vadd.f32 %v1083, %v1119
        %v1136 = vadd.f32 %v1084, %v1120
        %v1137 = vadd.f32 %v1085, %v1121
        %v1138 = vadd.f32 %v1086, %v1122
        %v1139 = vadd.f32 %v1087, %v1123
        %v1140 = vadd.f32 %v1088, %v1124
        %v1141 = vadd.f32 %v1089, %v1125
        %v1142 = vadd.f32 %v1090, %v1126
        %v1143 = vadd.f32 %v1091, %v1127
        %s1144 = scalar_lea.vmem %s830, 128
        %v1145 = vld [vmem:[%s1144] sm:$0xff]
        %v1146 = vld [vmem:[%s1144 + $0x8] sm:$0x1f]
        %s1147 = scalar_lea.vmem %s789, 768 [#allocation2]
        %v1148 = vld [vmem:[%s1147] sm:$0xff]
        %v1149 = vld [vmem:[%s1147 + $0x8] sm:$0x1f]
        %v1150 = vld [vmem:[%s1147 + $0x10] sm:$0xff]
        %v1151 = vld [vmem:[%s1147 + $0x18] sm:$0x1f]
        %v1152 = vld [vmem:[%s1147 + $0x20] sm:$0xff]
        %v1153 = vld [vmem:[%s1147 + $0x28] sm:$0x1f]
        %v1154 = vld [vmem:[%s1147 + $0x30] sm:$0xff]
        %v1155 = vld [vmem:[%s1147 + $0x38] sm:$0x1f]
        %v1156 = vld [vmem:[%s1147 + $0x40] sm:$0xff]
        %v1157 = vld [vmem:[%s1147 + $0x48] sm:$0x1f]
        %v1158 = vld [vmem:[%s1147 + $0x50] sm:$0xff]
        %v1159 = vld [vmem:[%s1147 + $0x58] sm:$0x1f]
        %v1160 = vld [vmem:[%s1147 + $0x60] sm:$0xff]
        %v1161 = vld [vmem:[%s1147 + $0x68] sm:$0x1f]
        %v1162 = vld [vmem:[%s1147 + $0x70] sm:$0xff]
        %v1163 = vld [vmem:[%s1147 + $0x78] sm:$0x1f]
        %v1164 = vmul.f32 %v1148, %v1145
        %v1165 = vmul.f32 %v1149, %v1146
        %v1166 = vmul.f32 %v1150, %v1145
        %v1167 = vmul.f32 %v1151, %v1146
        %v1168 = vmul.f32 %v1152, %v1145
        %v1169 = vmul.f32 %v1153, %v1146
        %v1170 = vmul.f32 %v1154, %v1145
        %v1171 = vmul.f32 %v1155, %v1146
        %v1172 = vmul.f32 %v1156, %v1145
        %v1173 = vmul.f32 %v1157, %v1146
        %v1174 = vmul.f32 %v1158, %v1145
        %v1175 = vmul.f32 %v1159, %v1146
        %v1176 = vmul.f32 %v1160, %v1145
        %v1177 = vmul.f32 %v1161, %v1146
        %v1178 = vmul.f32 %v1162, %v1145
        %v1179 = vmul.f32 %v1163, %v1146
        %v1180 = vadd.f32 %v1128, %v1164
        %v1181 = vadd.f32 %v1129, %v1165
        %v1182 = vadd.f32 %v1130, %v1166
        %v1183 = vadd.f32 %v1131, %v1167
        %v1184 = vadd.f32 %v1132, %v1168
        %v1185 = vadd.f32 %v1133, %v1169
        %v1186 = vadd.f32 %v1134, %v1170
        %v1187 = vadd.f32 %v1135, %v1171
        %v1188 = vadd.f32 %v1136, %v1172
        %v1189 = vadd.f32 %v1137, %v1173
        %v1190 = vadd.f32 %v1138, %v1174
        %v1191 = vadd.f32 %v1139, %v1175
        %v1192 = vadd.f32 %v1140, %v1176
        %v1193 = vadd.f32 %v1141, %v1177
        %v1194 = vadd.f32 %v1142, %v1178
        %v1195 = vadd.f32 %v1143, %v1179
        %s1196 = scalar_lea.vmem %s830, 144
        %v1197 = vld [vmem:[%s1196] sm:$0xff]
        %v1198 = vld [vmem:[%s1196 + $0x8] sm:$0x1f]
        %s1199 = scalar_lea.vmem %s789, 896 [#allocation2]
        %v1200 = vld [vmem:[%s1199] sm:$0xff]
        %v1201 = vld [vmem:[%s1199 + $0x8] sm:$0x1f]
        %v1202 = vld [vmem:[%s1199 + $0x10] sm:$0xff]
        %v1203 = vld [vmem:[%s1199 + $0x18] sm:$0x1f]
        %v1204 = vld [vmem:[%s1199 + $0x20] sm:$0xff]
        %v1205 = vld [vmem:[%s1199 + $0x28] sm:$0x1f]
        %v1206 = vld [vmem:[%s1199 + $0x30] sm:$0xff]
        %v1207 = vld [vmem:[%s1199 + $0x38] sm:$0x1f]
        %v1208 = vld [vmem:[%s1199 + $0x40] sm:$0xff]
        %v1209 = vld [vmem:[%s1199 + $0x48] sm:$0x1f]
        %v1210 = vld [vmem:[%s1199 + $0x50] sm:$0xff]
        %v1211 = vld [vmem:[%s1199 + $0x58] sm:$0x1f]
        %v1212 = vld [vmem:[%s1199 + $0x60] sm:$0xff]
        %v1213 = vld [vmem:[%s1199 + $0x68] sm:$0x1f]
        %v1214 = vld [vmem:[%s1199 + $0x70] sm:$0xff]
        %v1215 = vld [vmem:[%s1199 + $0x78] sm:$0x1f]
        %v1216 = vmul.f32 %v1200, %v1197
        %v1217 = vmul.f32 %v1201, %v1198
        %v1218 = vmul.f32 %v1202, %v1197
        %v1219 = vmul.f32 %v1203, %v1198
        %v1220 = vmul.f32 %v1204, %v1197
        %v1221 = vmul.f32 %v1205, %v1198
        %v1222 = vmul.f32 %v1206, %v1197
        %v1223 = vmul.f32 %v1207, %v1198
        %v1224 = vmul.f32 %v1208, %v1197
        %v1225 = vmul.f32 %v1209, %v1198
        %v1226 = vmul.f32 %v1210, %v1197
        %v1227 = vmul.f32 %v1211, %v1198
        %v1228 = vmul.f32 %v1212, %v1197
        %v1229 = vmul.f32 %v1213, %v1198
        %v1230 = vmul.f32 %v1214, %v1197
        %v1231 = vmul.f32 %v1215, %v1198
        %v1232 = vadd.f32 %v1180, %v1216
        %v1233 = vadd.f32 %v1181, %v1217
        %v1234 = vadd.f32 %v1182, %v1218
        %v1235 = vadd.f32 %v1183, %v1219
        %v1236 = vadd.f32 %v1184, %v1220
        %v1237 = vadd.f32 %v1185, %v1221
        %v1238 = vadd.f32 %v1186, %v1222
        %v1239 = vadd.f32 %v1187, %v1223
        %v1240 = vadd.f32 %v1188, %v1224
        %v1241 = vadd.f32 %v1189, %v1225
        %v1242 = vadd.f32 %v1190, %v1226
        %v1243 = vadd.f32 %v1191, %v1227
        %v1244 = vadd.f32 %v1192, %v1228
        %v1245 = vadd.f32 %v1193, %v1229
        %v1246 = vadd.f32 %v1194, %v1230
        %v1247 = vadd.f32 %v1195, %v1231
        %s1248 = scalar_lea.vmem %s830, 160
        %v1249 = vld [vmem:[%s1248] sm:$0xff]
        %v1250 = vld [vmem:[%s1248 + $0x8] sm:$0x1f]
        %s1251 = scalar_lea.vmem %s789, 1024 [#allocation2]
        %v1252 = vld [vmem:[%s1251] sm:$0xff]
        %v1253 = vld [vmem:[%s1251 + $0x8] sm:$0x1f]
        %v1254 = vld [vmem:[%s1251 + $0x10] sm:$0xff]
        %v1255 = vld [vmem:[%s1251 + $0x18] sm:$0x1f]
        %v1256 = vld [vmem:[%s1251 + $0x20] sm:$0xff]
        %v1257 = vld [vmem:[%s1251 + $0x28] sm:$0x1f]
        %v1258 = vld [vmem:[%s1251 + $0x30] sm:$0xff]
        %v1259 = vld [vmem:[%s1251 + $0x38] sm:$0x1f]
        %v1260 = vld [vmem:[%s1251 + $0x40] sm:$0xff]
        %v1261 = vld [vmem:[%s1251 + $0x48] sm:$0x1f]
        %v1262 = vld [vmem:[%s1251 + $0x50] sm:$0xff]
        %v1263 = vld [vmem:[%s1251 + $0x58] sm:$0x1f]
        %v1264 = vld [vmem:[%s1251 + $0x60] sm:$0xff]
        %v1265 = vld [vmem:[%s1251 + $0x68] sm:$0x1f]
        %v1266 = vld [vmem:[%s1251 + $0x70] sm:$0xff]
        %v1267 = vld [vmem:[%s1251 + $0x78] sm:$0x1f]
        %v1268 = vmul.f32 %v1252, %v1249
        %v1269 = vmul.f32 %v1253, %v1250
        %v1270 = vmul.f32 %v1254, %v1249
        %v1271 = vmul.f32 %v1255, %v1250
        %v1272 = vmul.f32 %v1256, %v1249
        %v1273 = vmul.f32 %v1257, %v1250
        %v1274 = vmul.f32 %v1258, %v1249
        %v1275 = vmul.f32 %v1259, %v1250
        %v1276 = vmul.f32 %v1260, %v1249
        %v1277 = vmul.f32 %v1261, %v1250
        %v1278 = vmul.f32 %v1262, %v1249
        %v1279 = vmul.f32 %v1263, %v1250
        %v1280 = vmul.f32 %v1264, %v1249
        %v1281 = vmul.f32 %v1265, %v1250
        %v1282 = vmul.f32 %v1266, %v1249
        %v1283 = vmul.f32 %v1267, %v1250
        %v1284 = vadd.f32 %v1232, %v1268
        %v1285 = vadd.f32 %v1233, %v1269
        %v1286 = vadd.f32 %v1234, %v1270
        %v1287 = vadd.f32 %v1235, %v1271
        %v1288 = vadd.f32 %v1236, %v1272
        %v1289 = vadd.f32 %v1237, %v1273
        %v1290 = vadd.f32 %v1238, %v1274
        %v1291 = vadd.f32 %v1239, %v1275
        %v1292 = vadd.f32 %v1240, %v1276
        %v1293 = vadd.f32 %v1241, %v1277
        %v1294 = vadd.f32 %v1242, %v1278
        %v1295 = vadd.f32 %v1243, %v1279
        %v1296 = vadd.f32 %v1244, %v1280
        %v1297 = vadd.f32 %v1245, %v1281
        %v1298 = vadd.f32 %v1246, %v1282
        %v1299 = vadd.f32 %v1247, %v1283
        %v1300 = vmul.f32 %v852, %v885
        %v1301 = vmul.f32 %v853, %v886
        %v1302 = vmul.f32 %v854, %v885
        %v1303 = vmul.f32 %v855, %v886
        %v1304 = vmul.f32 %v856, %v885
        %v1305 = vmul.f32 %v857, %v886
        %v1306 = vmul.f32 %v858, %v885
        %v1307 = vmul.f32 %v859, %v886
        %v1308 = vmul.f32 %v860, %v885
        %v1309 = vmul.f32 %v861, %v886
        %v1310 = vmul.f32 %v862, %v885
        %v1311 = vmul.f32 %v863, %v886
        %v1312 = vmul.f32 %v864, %v885
        %v1313 = vmul.f32 %v865, %v886
        %v1314 = vmul.f32 %v866, %v885
        %v1315 = vmul.f32 %v867, %v886
        %v1316 = vmul.f32 %v888, %v937
        %v1317 = vmul.f32 %v889, %v938
        %v1318 = vmul.f32 %v890, %v937
        %v1319 = vmul.f32 %v891, %v938
        %v1320 = vmul.f32 %v892, %v937
        %v1321 = vmul.f32 %v893, %v938
        %v1322 = vmul.f32 %v894, %v937
        %v1323 = vmul.f32 %v895, %v938
        %v1324 = vmul.f32 %v896, %v937
        %v1325 = vmul.f32 %v897, %v938
        %v1326 = vmul.f32 %v898, %v937
        %v1327 = vmul.f32 %v899, %v938
        %v1328 = vmul.f32 %v900, %v937
        %v1329 = vmul.f32 %v901, %v938
        %v1330 = vmul.f32 %v902, %v937
        %v1331 = vmul.f32 %v903, %v938
        %v1332 = vadd.f32 %v1300, %v1316
        %v1333 = vadd.f32 %v1301, %v1317
        %v1334 = vadd.f32 %v1302, %v1318
        %v1335 = vadd.f32 %v1303, %v1319
        %v1336 = vadd.f32 %v1304, %v1320
        %v1337 = vadd.f32 %v1305, %v1321
        %v1338 = vadd.f32 %v1306, %v1322
        %v1339 = vadd.f32 %v1307, %v1323
        %v1340 = vadd.f32 %v1308, %v1324
        %v1341 = vadd.f32 %v1309, %v1325
        %v1342 = vadd.f32 %v1310, %v1326
        %v1343 = vadd.f32 %v1311, %v1327
        %v1344 = vadd.f32 %v1312, %v1328
        %v1345 = vadd.f32 %v1313, %v1329
        %v1346 = vadd.f32 %v1314, %v1330
        %v1347 = vadd.f32 %v1315, %v1331
        %s1348 = scalar_lea.vmem %s830, 48
        %v1349 = vld [vmem:[%s1348] sm:$0xff]
        %v1350 = vld [vmem:[%s1348 + $0x8] sm:$0x1f]
        %v1351 = vmul.f32 %v940, %v1349
        %v1352 = vmul.f32 %v941, %v1350
        %v1353 = vmul.f32 %v942, %v1349
        %v1354 = vmul.f32 %v943, %v1350
        %v1355 = vmul.f32 %v944, %v1349
        %v1356 = vmul.f32 %v945, %v1350
        %v1357 = vmul.f32 %v946, %v1349
        %v1358 = vmul.f32 %v947, %v1350
        %v1359 = vmul.f32 %v948, %v1349
        %v1360 = vmul.f32 %v949, %v1350
        %v1361 = vmul.f32 %v950, %v1349
        %v1362 = vmul.f32 %v951, %v1350
        %v1363 = vmul.f32 %v952, %v1349
        %v1364 = vmul.f32 %v953, %v1350
        %v1365 = vmul.f32 %v954, %v1349
        %v1366 = vmul.f32 %v955, %v1350
        %v1367 = vadd.f32 %v1332, %v1351
        %v1368 = vadd.f32 %v1333, %v1352
        %v1369 = vadd.f32 %v1334, %v1353
        %v1370 = vadd.f32 %v1335, %v1354
        %v1371 = vadd.f32 %v1336, %v1355
        %v1372 = vadd.f32 %v1337, %v1356
        %v1373 = vadd.f32 %v1338, %v1357
        %v1374 = vadd.f32 %v1339, %v1358
        %v1375 = vadd.f32 %v1340, %v1359
        %v1376 = vadd.f32 %v1341, %v1360
        %v1377 = vadd.f32 %v1342, %v1361
        %v1378 = vadd.f32 %v1343, %v1362
        %v1379 = vadd.f32 %v1344, %v1363
        %v1380 = vadd.f32 %v1345, %v1364
        %v1381 = vadd.f32 %v1346, %v1365
        %v1382 = vadd.f32 %v1347, %v1366
        %v1383 = vmul.f32 %v992, %v1041
        %v1384 = vmul.f32 %v993, %v1042
        %v1385 = vmul.f32 %v994, %v1041
        %v1386 = vmul.f32 %v995, %v1042
        %v1387 = vmul.f32 %v996, %v1041
        %v1388 = vmul.f32 %v997, %v1042
        %v1389 = vmul.f32 %v998, %v1041
        %v1390 = vmul.f32 %v999, %v1042
        %v1391 = vmul.f32 %v1000, %v1041
        %v1392 = vmul.f32 %v1001, %v1042
        %v1393 = vmul.f32 %v1002, %v1041
        %v1394 = vmul.f32 %v1003, %v1042
        %v1395 = vmul.f32 %v1004, %v1041
        %v1396 = vmul.f32 %v1005, %v1042
        %v1397 = vmul.f32 %v1006, %v1041
        %v1398 = vmul.f32 %v1007, %v1042
        %v1399 = vadd.f32 %v1367, %v1383
        %v1400 = vadd.f32 %v1368, %v1384
        %v1401 = vadd.f32 %v1369, %v1385
        %v1402 = vadd.f32 %v1370, %v1386
        %v1403 = vadd.f32 %v1371, %v1387
        %v1404 = vadd.f32 %v1372, %v1388
        %v1405 = vadd.f32 %v1373, %v1389
        %v1406 = vadd.f32 %v1374, %v1390
        %v1407 = vadd.f32 %v1375, %v1391
        %v1408 = vadd.f32 %v1376, %v1392
        %v1409 = vadd.f32 %v1377, %v1393
        %v1410 = vadd.f32 %v1378, %v1394
        %v1411 = vadd.f32 %v1379, %v1395
        %v1412 = vadd.f32 %v1380, %v1396
        %v1413 = vadd.f32 %v1381, %v1397
        %v1414 = vadd.f32 %v1382, %v1398
        %v1415 = vmul.f32 %v1044, %v1093
        %v1416 = vmul.f32 %v1045, %v1094
        %v1417 = vmul.f32 %v1046, %v1093
        %v1418 = vmul.f32 %v1047, %v1094
        %v1419 = vmul.f32 %v1048, %v1093
        %v1420 = vmul.f32 %v1049, %v1094
        %v1421 = vmul.f32 %v1050, %v1093
        %v1422 = vmul.f32 %v1051, %v1094
        %v1423 = vmul.f32 %v1052, %v1093
        %v1424 = vmul.f32 %v1053, %v1094
        %v1425 = vmul.f32 %v1054, %v1093
        %v1426 = vmul.f32 %v1055, %v1094
        %v1427 = vmul.f32 %v1056, %v1093
        %v1428 = vmul.f32 %v1057, %v1094
        %v1429 = vmul.f32 %v1058, %v1093
        %v1430 = vmul.f32 %v1059, %v1094
        %v1431 = vadd.f32 %v1399, %v1415
        %v1432 = vadd.f32 %v1400, %v1416
        %v1433 = vadd.f32 %v1401, %v1417
        %v1434 = vadd.f32 %v1402, %v1418
        %v1435 = vadd.f32 %v1403, %v1419
        %v1436 = vadd.f32 %v1404, %v1420
        %v1437 = vadd.f32 %v1405, %v1421
        %v1438 = vadd.f32 %v1406, %v1422
        %v1439 = vadd.f32 %v1407, %v1423
        %v1440 = vadd.f32 %v1408, %v1424
        %v1441 = vadd.f32 %v1409, %v1425
        %v1442 = vadd.f32 %v1410, %v1426
        %v1443 = vadd.f32 %v1411, %v1427
        %v1444 = vadd.f32 %v1412, %v1428
        %v1445 = vadd.f32 %v1413, %v1429
        %v1446 = vadd.f32 %v1414, %v1430
        %s1447 = scalar_lea.vmem %s830, 112
        %v1448 = vld [vmem:[%s1447] sm:$0xff]
        %v1449 = vld [vmem:[%s1447 + $0x8] sm:$0x1f]
        %v1450 = vmul.f32 %v1096, %v1448
        %v1451 = vmul.f32 %v1097, %v1449
        %v1452 = vmul.f32 %v1098, %v1448
        %v1453 = vmul.f32 %v1099, %v1449
        %v1454 = vmul.f32 %v1100, %v1448
        %v1455 = vmul.f32 %v1101, %v1449
        %v1456 = vmul.f32 %v1102, %v1448
        %v1457 = vmul.f32 %v1103, %v1449
        %v1458 = vmul.f32 %v1104, %v1448
        %v1459 = vmul.f32 %v1105, %v1449
        %v1460 = vmul.f32 %v1106, %v1448
        %v1461 = vmul.f32 %v1107, %v1449
        %v1462 = vmul.f32 %v1108, %v1448
        %v1463 = vmul.f32 %v1109, %v1449
        %v1464 = vmul.f32 %v1110, %v1448
        %v1465 = vmul.f32 %v1111, %v1449
        %v1466 = vadd.f32 %v1431, %v1450
        %v1467 = vadd.f32 %v1432, %v1451
        %v1468 = vadd.f32 %v1433, %v1452
        %v1469 = vadd.f32 %v1434, %v1453
        %v1470 = vadd.f32 %v1435, %v1454
        %v1471 = vadd.f32 %v1436, %v1455
        %v1472 = vadd.f32 %v1437, %v1456
        %v1473 = vadd.f32 %v1438, %v1457
        %v1474 = vadd.f32 %v1439, %v1458
        %v1475 = vadd.f32 %v1440, %v1459
        %v1476 = vadd.f32 %v1441, %v1460
        %v1477 = vadd.f32 %v1442, %v1461
        %v1478 = vadd.f32 %v1443, %v1462
        %v1479 = vadd.f32 %v1444, %v1463
        %v1480 = vadd.f32 %v1445, %v1464
        %v1481 = vadd.f32 %v1446, %v1465
        %v1482 = vmul.f32 %v1148, %v1197
        %v1483 = vmul.f32 %v1149, %v1198
        %v1484 = vmul.f32 %v1150, %v1197
        %v1485 = vmul.f32 %v1151, %v1198
        %v1486 = vmul.f32 %v1152, %v1197
        %v1487 = vmul.f32 %v1153, %v1198
        %v1488 = vmul.f32 %v1154, %v1197
        %v1489 = vmul.f32 %v1155, %v1198
        %v1490 = vmul.f32 %v1156, %v1197
        %v1491 = vmul.f32 %v1157, %v1198
        %v1492 = vmul.f32 %v1158, %v1197
        %v1493 = vmul.f32 %v1159, %v1198
        %v1494 = vmul.f32 %v1160, %v1197
        %v1495 = vmul.f32 %v1161, %v1198
        %v1496 = vmul.f32 %v1162, %v1197
        %v1497 = vmul.f32 %v1163, %v1198
        %v1498 = vadd.f32 %v1466, %v1482
        %v1499 = vadd.f32 %v1467, %v1483
        %v1500 = vadd.f32 %v1468, %v1484
        %v1501 = vadd.f32 %v1469, %v1485
        %v1502 = vadd.f32 %v1470, %v1486
        %v1503 = vadd.f32 %v1471, %v1487
        %v1504 = vadd.f32 %v1472, %v1488
        %v1505 = vadd.f32 %v1473, %v1489
        %v1506 = vadd.f32 %v1474, %v1490
        %v1507 = vadd.f32 %v1475, %v1491
        %v1508 = vadd.f32 %v1476, %v1492
        %v1509 = vadd.f32 %v1477, %v1493
        %v1510 = vadd.f32 %v1478, %v1494
        %v1511 = vadd.f32 %v1479, %v1495
        %v1512 = vadd.f32 %v1480, %v1496
        %v1513 = vadd.f32 %v1481, %v1497
        %v1514 = vmul.f32 %v1200, %v1249
        %v1515 = vmul.f32 %v1201, %v1250
        %v1516 = vmul.f32 %v1202, %v1249
        %v1517 = vmul.f32 %v1203, %v1250
        %v1518 = vmul.f32 %v1204, %v1249
        %v1519 = vmul.f32 %v1205, %v1250
        %v1520 = vmul.f32 %v1206, %v1249
        %v1521 = vmul.f32 %v1207, %v1250
        %v1522 = vmul.f32 %v1208, %v1249
        %v1523 = vmul.f32 %v1209, %v1250
        %v1524 = vmul.f32 %v1210, %v1249
        %v1525 = vmul.f32 %v1211, %v1250
        %v1526 = vmul.f32 %v1212, %v1249
        %v1527 = vmul.f32 %v1213, %v1250
        %v1528 = vmul.f32 %v1214, %v1249
        %v1529 = vmul.f32 %v1215, %v1250
        %v1530 = vadd.f32 %v1498, %v1514
        %v1531 = vadd.f32 %v1499, %v1515
        %v1532 = vadd.f32 %v1500, %v1516
        %v1533 = vadd.f32 %v1501, %v1517
        %v1534 = vadd.f32 %v1502, %v1518
        %v1535 = vadd.f32 %v1503, %v1519
        %v1536 = vadd.f32 %v1504, %v1520
        %v1537 = vadd.f32 %v1505, %v1521
        %v1538 = vadd.f32 %v1506, %v1522
        %v1539 = vadd.f32 %v1507, %v1523
        %v1540 = vadd.f32 %v1508, %v1524
        %v1541 = vadd.f32 %v1509, %v1525
        %v1542 = vadd.f32 %v1510, %v1526
        %v1543 = vadd.f32 %v1511, %v1527
        %v1544 = vadd.f32 %v1512, %v1528
        %v1545 = vadd.f32 %v1513, %v1529
        %s1546 = scalar_lea.vmem %s830, 176
        %v1547 = vld [vmem:[%s1546] sm:$0xff]
        %v1548 = vld [vmem:[%s1546 + $0x8] sm:$0x1f]
        %v1549 = vmul.f32 %v1252, %v1547
        %v1550 = vmul.f32 %v1253, %v1548
        %v1551 = vmul.f32 %v1254, %v1547
        %v1552 = vmul.f32 %v1255, %v1548
        %v1553 = vmul.f32 %v1256, %v1547
        %v1554 = vmul.f32 %v1257, %v1548
        %v1555 = vmul.f32 %v1258, %v1547
        %v1556 = vmul.f32 %v1259, %v1548
        %v1557 = vmul.f32 %v1260, %v1547
        %v1558 = vmul.f32 %v1261, %v1548
        %v1559 = vmul.f32 %v1262, %v1547
        %v1560 = vmul.f32 %v1263, %v1548
        %v1561 = vmul.f32 %v1264, %v1547
        %v1562 = vmul.f32 %v1265, %v1548
        %v1563 = vmul.f32 %v1266, %v1547
        %v1564 = vmul.f32 %v1267, %v1548
        %v1565 = vadd.f32 %v1530, %v1549
        %v1566 = vadd.f32 %v1531, %v1550
        %v1567 = vadd.f32 %v1532, %v1551
        %v1568 = vadd.f32 %v1533, %v1552
        %v1569 = vadd.f32 %v1534, %v1553
        %v1570 = vadd.f32 %v1535, %v1554
        %v1571 = vadd.f32 %v1536, %v1555
        %v1572 = vadd.f32 %v1537, %v1556
        %v1573 = vadd.f32 %v1538, %v1557
        %v1574 = vadd.f32 %v1539, %v1558
        %v1575 = vadd.f32 %v1540, %v1559
        %v1576 = vadd.f32 %v1541, %v1560
        %v1577 = vadd.f32 %v1542, %v1561
        %v1578 = vadd.f32 %v1543, %v1562
        %v1579 = vadd.f32 %v1544, %v1563
        %v1580 = vadd.f32 %v1545, %v1564
        %v1581 = vmax.f32 %v1284, %v1565
        %v1582 = vmax.f32 %v1285, %v1566
        %v1583 = vmax.f32 %v1286, %v1567
        %v1584 = vmax.f32 %v1287, %v1568
        %v1585 = vmax.f32 %v1288, %v1569
        %v1586 = vmax.f32 %v1289, %v1570
        %v1587 = vmax.f32 %v1290, %v1571
        %v1588 = vmax.f32 %v1291, %v1572
        %v1589 = vmax.f32 %v1292, %v1573
        %v1590 = vmax.f32 %v1293, %v1574
        %v1591 = vmax.f32 %v1294, %v1575
        %v1592 = vmax.f32 %v1295, %v1576
        %v1593 = vmax.f32 %v1296, %v1577
        %v1594 = vmax.f32 %v1297, %v1578
        %v1595 = vmax.f32 %v1298, %v1579
        %v1596 = vmax.f32 %v1299, %v1580
        %v1597 = vmul.f32 %v852, %v989
        %v1598 = vmul.f32 %v853, %v990
        %v1599 = vmul.f32 %v854, %v989
        %v1600 = vmul.f32 %v855, %v990
        %v1601 = vmul.f32 %v856, %v989
        %v1602 = vmul.f32 %v857, %v990
        %v1603 = vmul.f32 %v858, %v989
        %v1604 = vmul.f32 %v859, %v990
        %v1605 = vmul.f32 %v860, %v989
        %v1606 = vmul.f32 %v861, %v990
        %v1607 = vmul.f32 %v862, %v989
        %v1608 = vmul.f32 %v863, %v990
        %v1609 = vmul.f32 %v864, %v989
        %v1610 = vmul.f32 %v865, %v990
        %v1611 = vmul.f32 %v866, %v989
        %v1612 = vmul.f32 %v867, %v990
        %v1613 = vmul.f32 %v888, %v1041
        %v1614 = vmul.f32 %v889, %v1042
        %v1615 = vmul.f32 %v890, %v1041
        %v1616 = vmul.f32 %v891, %v1042
        %v1617 = vmul.f32 %v892, %v1041
        %v1618 = vmul.f32 %v893, %v1042
        %v1619 = vmul.f32 %v894, %v1041
        %v1620 = vmul.f32 %v895, %v1042
        %v1621 = vmul.f32 %v896, %v1041
        %v1622 = vmul.f32 %v897, %v1042
        %v1623 = vmul.f32 %v898, %v1041
        %v1624 = vmul.f32 %v899, %v1042
        %v1625 = vmul.f32 %v900, %v1041
        %v1626 = vmul.f32 %v901, %v1042
        %v1627 = vmul.f32 %v902, %v1041
        %v1628 = vmul.f32 %v903, %v1042
        %v1629 = vadd.f32 %v1597, %v1613
        %v1630 = vadd.f32 %v1598, %v1614
        %v1631 = vadd.f32 %v1599, %v1615
        %v1632 = vadd.f32 %v1600, %v1616
        %v1633 = vadd.f32 %v1601, %v1617
        %v1634 = vadd.f32 %v1602, %v1618
        %v1635 = vadd.f32 %v1603, %v1619
        %v1636 = vadd.f32 %v1604, %v1620
        %v1637 = vadd.f32 %v1605, %v1621
        %v1638 = vadd.f32 %v1606, %v1622
        %v1639 = vadd.f32 %v1607, %v1623
        %v1640 = vadd.f32 %v1608, %v1624
        %v1641 = vadd.f32 %v1609, %v1625
        %v1642 = vadd.f32 %v1610, %v1626
        %v1643 = vadd.f32 %v1611, %v1627
        %v1644 = vadd.f32 %v1612, %v1628
        %v1645 = vmul.f32 %v940, %v1093
        %v1646 = vmul.f32 %v941, %v1094
        %v1647 = vmul.f32 %v942, %v1093
        %v1648 = vmul.f32 %v943, %v1094
        %v1649 = vmul.f32 %v944, %v1093
        %v1650 = vmul.f32 %v945, %v1094
        %v1651 = vmul.f32 %v946, %v1093
        %v1652 = vmul.f32 %v947, %v1094
        %v1653 = vmul.f32 %v948, %v1093
        %v1654 = vmul.f32 %v949, %v1094
        %v1655 = vmul.f32 %v950, %v1093
        %v1656 = vmul.f32 %v951, %v1094
        %v1657 = vmul.f32 %v952, %v1093
        %v1658 = vmul.f32 %v953, %v1094
        %v1659 = vmul.f32 %v954, %v1093
        %v1660 = vmul.f32 %v955, %v1094
        %v1661 = vadd.f32 %v1629, %v1645
        %v1662 = vadd.f32 %v1630, %v1646
        %v1663 = vadd.f32 %v1631, %v1647
        %v1664 = vadd.f32 %v1632, %v1648
        %v1665 = vadd.f32 %v1633, %v1649
        %v1666 = vadd.f32 %v1634, %v1650
        %v1667 = vadd.f32 %v1635, %v1651
        %v1668 = vadd.f32 %v1636, %v1652
        %v1669 = vadd.f32 %v1637, %v1653
        %v1670 = vadd.f32 %v1638, %v1654
        %v1671 = vadd.f32 %v1639, %v1655
        %v1672 = vadd.f32 %v1640, %v1656
        %v1673 = vadd.f32 %v1641, %v1657
        %v1674 = vadd.f32 %v1642, %v1658
        %v1675 = vadd.f32 %v1643, %v1659
        %v1676 = vadd.f32 %v1644, %v1660
        %v1677 = vmul.f32 %v992, %v1145
        %v1678 = vmul.f32 %v993, %v1146
        %v1679 = vmul.f32 %v994, %v1145
        %v1680 = vmul.f32 %v995, %v1146
        %v1681 = vmul.f32 %v996, %v1145
        %v1682 = vmul.f32 %v997, %v1146
        %v1683 = vmul.f32 %v998, %v1145
        %v1684 = vmul.f32 %v999, %v1146
        %v1685 = vmul.f32 %v1000, %v1145
        %v1686 = vmul.f32 %v1001, %v1146
        %v1687 = vmul.f32 %v1002, %v1145
        %v1688 = vmul.f32 %v1003, %v1146
        %v1689 = vmul.f32 %v1004, %v1145
        %v1690 = vmul.f32 %v1005, %v1146
        %v1691 = vmul.f32 %v1006, %v1145
        %v1692 = vmul.f32 %v1007, %v1146
        %v1693 = vadd.f32 %v1661, %v1677
        %v1694 = vadd.f32 %v1662, %v1678
        %v1695 = vadd.f32 %v1663, %v1679
        %v1696 = vadd.f32 %v1664, %v1680
        %v1697 = vadd.f32 %v1665, %v1681
        %v1698 = vadd.f32 %v1666, %v1682
        %v1699 = vadd.f32 %v1667, %v1683
        %v1700 = vadd.f32 %v1668, %v1684
        %v1701 = vadd.f32 %v1669, %v1685
        %v1702 = vadd.f32 %v1670, %v1686
        %v1703 = vadd.f32 %v1671, %v1687
        %v1704 = vadd.f32 %v1672, %v1688
        %v1705 = vadd.f32 %v1673, %v1689
        %v1706 = vadd.f32 %v1674, %v1690
        %v1707 = vadd.f32 %v1675, %v1691
        %v1708 = vadd.f32 %v1676, %v1692
        %v1709 = vmul.f32 %v1044, %v1197
        %v1710 = vmul.f32 %v1045, %v1198
        %v1711 = vmul.f32 %v1046, %v1197
        %v1712 = vmul.f32 %v1047, %v1198
        %v1713 = vmul.f32 %v1048, %v1197
        %v1714 = vmul.f32 %v1049, %v1198
        %v1715 = vmul.f32 %v1050, %v1197
        %v1716 = vmul.f32 %v1051, %v1198
        %v1717 = vmul.f32 %v1052, %v1197
        %v1718 = vmul.f32 %v1053, %v1198
        %v1719 = vmul.f32 %v1054, %v1197
        %v1720 = vmul.f32 %v1055, %v1198
        %v1721 = vmul.f32 %v1056, %v1197
        %v1722 = vmul.f32 %v1057, %v1198
        %v1723 = vmul.f32 %v1058, %v1197
        %v1724 = vmul.f32 %v1059, %v1198
        %v1725 = vadd.f32 %v1693, %v1709
        %v1726 = vadd.f32 %v1694, %v1710
        %v1727 = vadd.f32 %v1695, %v1711
        %v1728 = vadd.f32 %v1696, %v1712
        %v1729 = vadd.f32 %v1697, %v1713
        %v1730 = vadd.f32 %v1698, %v1714
        %v1731 = vadd.f32 %v1699, %v1715
        %v1732 = vadd.f32 %v1700, %v1716
        %v1733 = vadd.f32 %v1701, %v1717
        %v1734 = vadd.f32 %v1702, %v1718
        %v1735 = vadd.f32 %v1703, %v1719
        %v1736 = vadd.f32 %v1704, %v1720
        %v1737 = vadd.f32 %v1705, %v1721
        %v1738 = vadd.f32 %v1706, %v1722
        %v1739 = vadd.f32 %v1707, %v1723
        %v1740 = vadd.f32 %v1708, %v1724
        %v1741 = vmul.f32 %v1096, %v1249
        %v1742 = vmul.f32 %v1097, %v1250
        %v1743 = vmul.f32 %v1098, %v1249
        %v1744 = vmul.f32 %v1099, %v1250
        %v1745 = vmul.f32 %v1100, %v1249
        %v1746 = vmul.f32 %v1101, %v1250
        %v1747 = vmul.f32 %v1102, %v1249
        %v1748 = vmul.f32 %v1103, %v1250
        %v1749 = vmul.f32 %v1104, %v1249
        %v1750 = vmul.f32 %v1105, %v1250
        %v1751 = vmul.f32 %v1106, %v1249
        %v1752 = vmul.f32 %v1107, %v1250
        %v1753 = vmul.f32 %v1108, %v1249
        %v1754 = vmul.f32 %v1109, %v1250
        %v1755 = vmul.f32 %v1110, %v1249
        %v1756 = vmul.f32 %v1111, %v1250
        %v1757 = vadd.f32 %v1725, %v1741
        %v1758 = vadd.f32 %v1726, %v1742
        %v1759 = vadd.f32 %v1727, %v1743
        %v1760 = vadd.f32 %v1728, %v1744
        %v1761 = vadd.f32 %v1729, %v1745
        %v1762 = vadd.f32 %v1730, %v1746
        %v1763 = vadd.f32 %v1731, %v1747
        %v1764 = vadd.f32 %v1732, %v1748
        %v1765 = vadd.f32 %v1733, %v1749
        %v1766 = vadd.f32 %v1734, %v1750
        %v1767 = vadd.f32 %v1735, %v1751
        %v1768 = vadd.f32 %v1736, %v1752
        %v1769 = vadd.f32 %v1737, %v1753
        %v1770 = vadd.f32 %v1738, %v1754
        %v1771 = vadd.f32 %v1739, %v1755
        %v1772 = vadd.f32 %v1740, %v1756
        %s1773 = scalar_lea.vmem %s830, 192
        %v1774 = vld [vmem:[%s1773] sm:$0xff]
        %v1775 = vld [vmem:[%s1773 + $0x8] sm:$0x1f]
        %v1776 = vmul.f32 %v1148, %v1774
        %v1777 = vmul.f32 %v1149, %v1775
        %v1778 = vmul.f32 %v1150, %v1774
        %v1779 = vmul.f32 %v1151, %v1775
        %v1780 = vmul.f32 %v1152, %v1774
        %v1781 = vmul.f32 %v1153, %v1775
        %v1782 = vmul.f32 %v1154, %v1774
        %v1783 = vmul.f32 %v1155, %v1775
        %v1784 = vmul.f32 %v1156, %v1774
        %v1785 = vmul.f32 %v1157, %v1775
        %v1786 = vmul.f32 %v1158, %v1774
        %v1787 = vmul.f32 %v1159, %v1775
        %v1788 = vmul.f32 %v1160, %v1774
        %v1789 = vmul.f32 %v1161, %v1775
        %v1790 = vmul.f32 %v1162, %v1774
        %v1791 = vmul.f32 %v1163, %v1775
        %v1792 = vadd.f32 %v1757, %v1776
        %v1793 = vadd.f32 %v1758, %v1777
        %v1794 = vadd.f32 %v1759, %v1778
        %v1795 = vadd.f32 %v1760, %v1779
        %v1796 = vadd.f32 %v1761, %v1780
        %v1797 = vadd.f32 %v1762, %v1781
        %v1798 = vadd.f32 %v1763, %v1782
        %v1799 = vadd.f32 %v1764, %v1783
        %v1800 = vadd.f32 %v1765, %v1784
        %v1801 = vadd.f32 %v1766, %v1785
        %v1802 = vadd.f32 %v1767, %v1786
        %v1803 = vadd.f32 %v1768, %v1787
        %v1804 = vadd.f32 %v1769, %v1788
        %v1805 = vadd.f32 %v1770, %v1789
        %v1806 = vadd.f32 %v1771, %v1790
        %v1807 = vadd.f32 %v1772, %v1791
        %s1808 = scalar_lea.vmem %s830, 208
        %v1809 = vld [vmem:[%s1808] sm:$0xff]
        %v1810 = vld [vmem:[%s1808 + $0x8] sm:$0x1f]
        %v1811 = vmul.f32 %v1200, %v1809
        %v1812 = vmul.f32 %v1201, %v1810
        %v1813 = vmul.f32 %v1202, %v1809
        %v1814 = vmul.f32 %v1203, %v1810
        %v1815 = vmul.f32 %v1204, %v1809
        %v1816 = vmul.f32 %v1205, %v1810
        %v1817 = vmul.f32 %v1206, %v1809
        %v1818 = vmul.f32 %v1207, %v1810
        %v1819 = vmul.f32 %v1208, %v1809
        %v1820 = vmul.f32 %v1209, %v1810
        %v1821 = vmul.f32 %v1210, %v1809
        %v1822 = vmul.f32 %v1211, %v1810
        %v1823 = vmul.f32 %v1212, %v1809
        %v1824 = vmul.f32 %v1213, %v1810
        %v1825 = vmul.f32 %v1214, %v1809
        %v1826 = vmul.f32 %v1215, %v1810
        %v1827 = vadd.f32 %v1792, %v1811
        %v1828 = vadd.f32 %v1793, %v1812
        %v1829 = vadd.f32 %v1794, %v1813
        %v1830 = vadd.f32 %v1795, %v1814
        %v1831 = vadd.f32 %v1796, %v1815
        %v1832 = vadd.f32 %v1797, %v1816
        %v1833 = vadd.f32 %v1798, %v1817
        %v1834 = vadd.f32 %v1799, %v1818
        %v1835 = vadd.f32 %v1800, %v1819
        %v1836 = vadd.f32 %v1801, %v1820
        %v1837 = vadd.f32 %v1802, %v1821
        %v1838 = vadd.f32 %v1803, %v1822
        %v1839 = vadd.f32 %v1804, %v1823
        %v1840 = vadd.f32 %v1805, %v1824
        %v1841 = vadd.f32 %v1806, %v1825
        %v1842 = vadd.f32 %v1807, %v1826
        %s1843 = scalar_lea.vmem %s830, 224
        %v1844 = vld [vmem:[%s1843] sm:$0xff]
        %v1845 = vld [vmem:[%s1843 + $0x8] sm:$0x1f]
        %v1846 = vmul.f32 %v1252, %v1844
        %v1847 = vmul.f32 %v1253, %v1845
        %v1848 = vmul.f32 %v1254, %v1844
        %v1849 = vmul.f32 %v1255, %v1845
        %v1850 = vmul.f32 %v1256, %v1844
        %v1851 = vmul.f32 %v1257, %v1845
        %v1852 = vmul.f32 %v1258, %v1844
        %v1853 = vmul.f32 %v1259, %v1845
        %v1854 = vmul.f32 %v1260, %v1844
        %v1855 = vmul.f32 %v1261, %v1845
        %v1856 = vmul.f32 %v1262, %v1844
        %v1857 = vmul.f32 %v1263, %v1845
        %v1858 = vmul.f32 %v1264, %v1844
        %v1859 = vmul.f32 %v1265, %v1845
        %v1860 = vmul.f32 %v1266, %v1844
        %v1861 = vmul.f32 %v1267, %v1845
        %v1862 = vadd.f32 %v1827, %v1846
        %v1863 = vadd.f32 %v1828, %v1847
        %v1864 = vadd.f32 %v1829, %v1848
        %v1865 = vadd.f32 %v1830, %v1849
        %v1866 = vadd.f32 %v1831, %v1850
        %v1867 = vadd.f32 %v1832, %v1851
        %v1868 = vadd.f32 %v1833, %v1852
        %v1869 = vadd.f32 %v1834, %v1853
        %v1870 = vadd.f32 %v1835, %v1854
        %v1871 = vadd.f32 %v1836, %v1855
        %v1872 = vadd.f32 %v1837, %v1856
        %v1873 = vadd.f32 %v1838, %v1857
        %v1874 = vadd.f32 %v1839, %v1858
        %v1875 = vadd.f32 %v1840, %v1859
        %v1876 = vadd.f32 %v1841, %v1860
        %v1877 = vadd.f32 %v1842, %v1861
        %v1878 = vmax.f32 %v1581, %v1862
        %v1879 = vmax.f32 %v1582, %v1863
        %v1880 = vmax.f32 %v1583, %v1864
        %v1881 = vmax.f32 %v1584, %v1865
        %v1882 = vmax.f32 %v1585, %v1866
        %v1883 = vmax.f32 %v1586, %v1867
        %v1884 = vmax.f32 %v1587, %v1868
        %v1885 = vmax.f32 %v1588, %v1869
        %v1886 = vmax.f32 %v1589, %v1870
        %v1887 = vmax.f32 %v1590, %v1871
        %v1888 = vmax.f32 %v1591, %v1872
        %v1889 = vmax.f32 %v1592, %v1873
        %v1890 = vmax.f32 %v1593, %v1874
        %v1891 = vmax.f32 %v1594, %v1875
        %v1892 = vmax.f32 %v1595, %v1876
        %v1893 = vmax.f32 %v1596, %v1877
        %v1894 = vmul.f32 %v852, %v1041
        %v1895 = vmul.f32 %v853, %v1042
        %v1896 = vmul.f32 %v854, %v1041
        %v1897 = vmul.f32 %v855, %v1042
        %v1898 = vmul.f32 %v856, %v1041
        %v1899 = vmul.f32 %v857, %v1042
        %v1900 = vmul.f32 %v858, %v1041
        %v1901 = vmul.f32 %v859, %v1042
        %v1902 = vmul.f32 %v860, %v1041
        %v1903 = vmul.f32 %v861, %v1042
        %v1904 = vmul.f32 %v862, %v1041
        %v1905 = vmul.f32 %v863, %v1042
        %v1906 = vmul.f32 %v864, %v1041
        %v1907 = vmul.f32 %v865, %v1042
        %v1908 = vmul.f32 %v866, %v1041
        %v1909 = vmul.f32 %v867, %v1042
        %v1910 = vmul.f32 %v888, %v1093
        %v1911 = vmul.f32 %v889, %v1094
        %v1912 = vmul.f32 %v890, %v1093
        %v1913 = vmul.f32 %v891, %v1094
        %v1914 = vmul.f32 %v892, %v1093
        %v1915 = vmul.f32 %v893, %v1094
        %v1916 = vmul.f32 %v894, %v1093
        %v1917 = vmul.f32 %v895, %v1094
        %v1918 = vmul.f32 %v896, %v1093
        %v1919 = vmul.f32 %v897, %v1094
        %v1920 = vmul.f32 %v898, %v1093
        %v1921 = vmul.f32 %v899, %v1094
        %v1922 = vmul.f32 %v900, %v1093
        %v1923 = vmul.f32 %v901, %v1094
        %v1924 = vmul.f32 %v902, %v1093
        %v1925 = vmul.f32 %v903, %v1094
        %v1926 = vadd.f32 %v1894, %v1910
        %v1927 = vadd.f32 %v1895, %v1911
        %v1928 = vadd.f32 %v1896, %v1912
        %v1929 = vadd.f32 %v1897, %v1913
        %v1930 = vadd.f32 %v1898, %v1914
        %v1931 = vadd.f32 %v1899, %v1915
        %v1932 = vadd.f32 %v1900, %v1916
        %v1933 = vadd.f32 %v1901, %v1917
        %v1934 = vadd.f32 %v1902, %v1918
        %v1935 = vadd.f32 %v1903, %v1919
        %v1936 = vadd.f32 %v1904, %v1920
        %v1937 = vadd.f32 %v1905, %v1921
        %v1938 = vadd.f32 %v1906, %v1922
        %v1939 = vadd.f32 %v1907, %v1923
        %v1940 = vadd.f32 %v1908, %v1924
        %v1941 = vadd.f32 %v1909, %v1925
        %v1942 = vmul.f32 %v940, %v1448
        %v1943 = vmul.f32 %v941, %v1449
        %v1944 = vmul.f32 %v942, %v1448
        %v1945 = vmul.f32 %v943, %v1449
        %v1946 = vmul.f32 %v944, %v1448
        %v1947 = vmul.f32 %v945, %v1449
        %v1948 = vmul.f32 %v946, %v1448
        %v1949 = vmul.f32 %v947, %v1449
        %v1950 = vmul.f32 %v948, %v1448
        %v1951 = vmul.f32 %v949, %v1449
        %v1952 = vmul.f32 %v950, %v1448
        %v1953 = vmul.f32 %v951, %v1449
        %v1954 = vmul.f32 %v952, %v1448
        %v1955 = vmul.f32 %v953, %v1449
        %v1956 = vmul.f32 %v954, %v1448
        %v1957 = vmul.f32 %v955, %v1449
        %v1958 = vadd.f32 %v1926, %v1942
        %v1959 = vadd.f32 %v1927, %v1943
        %v1960 = vadd.f32 %v1928, %v1944
        %v1961 = vadd.f32 %v1929, %v1945
        %v1962 = vadd.f32 %v1930, %v1946
        %v1963 = vadd.f32 %v1931, %v1947
        %v1964 = vadd.f32 %v1932, %v1948
        %v1965 = vadd.f32 %v1933, %v1949
        %v1966 = vadd.f32 %v1934, %v1950
        %v1967 = vadd.f32 %v1935, %v1951
        %v1968 = vadd.f32 %v1936, %v1952
        %v1969 = vadd.f32 %v1937, %v1953
        %v1970 = vadd.f32 %v1938, %v1954
        %v1971 = vadd.f32 %v1939, %v1955
        %v1972 = vadd.f32 %v1940, %v1956
        %v1973 = vadd.f32 %v1941, %v1957
        %v1974 = vmul.f32 %v992, %v1197
        %v1975 = vmul.f32 %v993, %v1198
        %v1976 = vmul.f32 %v994, %v1197
        %v1977 = vmul.f32 %v995, %v1198
        %v1978 = vmul.f32 %v996, %v1197
        %v1979 = vmul.f32 %v997, %v1198
        %v1980 = vmul.f32 %v998, %v1197
        %v1981 = vmul.f32 %v999, %v1198
        %v1982 = vmul.f32 %v1000, %v1197
        %v1983 = vmul.f32 %v1001, %v1198
        %v1984 = vmul.f32 %v1002, %v1197
        %v1985 = vmul.f32 %v1003, %v1198
        %v1986 = vmul.f32 %v1004, %v1197
        %v1987 = vmul.f32 %v1005, %v1198
        %v1988 = vmul.f32 %v1006, %v1197
        %v1989 = vmul.f32 %v1007, %v1198
        %v1990 = vadd.f32 %v1958, %v1974
        %v1991 = vadd.f32 %v1959, %v1975
        %v1992 = vadd.f32 %v1960, %v1976
        %v1993 = vadd.f32 %v1961, %v1977
        %v1994 = vadd.f32 %v1962, %v1978
        %v1995 = vadd.f32 %v1963, %v1979
        %v1996 = vadd.f32 %v1964, %v1980
        %v1997 = vadd.f32 %v1965, %v1981
        %v1998 = vadd.f32 %v1966, %v1982
        %v1999 = vadd.f32 %v1967, %v1983
        %v2000 = vadd.f32 %v1968, %v1984
        %v2001 = vadd.f32 %v1969, %v1985
        %v2002 = vadd.f32 %v1970, %v1986
        %v2003 = vadd.f32 %v1971, %v1987
        %v2004 = vadd.f32 %v1972, %v1988
        %v2005 = vadd.f32 %v1973, %v1989
        %v2006 = vmul.f32 %v1044, %v1249
        %v2007 = vmul.f32 %v1045, %v1250
        %v2008 = vmul.f32 %v1046, %v1249
        %v2009 = vmul.f32 %v1047, %v1250
        %v2010 = vmul.f32 %v1048, %v1249
        %v2011 = vmul.f32 %v1049, %v1250
        %v2012 = vmul.f32 %v1050, %v1249
        %v2013 = vmul.f32 %v1051, %v1250
        %v2014 = vmul.f32 %v1052, %v1249
        %v2015 = vmul.f32 %v1053, %v1250
        %v2016 = vmul.f32 %v1054, %v1249
        %v2017 = vmul.f32 %v1055, %v1250
        %v2018 = vmul.f32 %v1056, %v1249
        %v2019 = vmul.f32 %v1057, %v1250
        %v2020 = vmul.f32 %v1058, %v1249
        %v2021 = vmul.f32 %v1059, %v1250
        %v2022 = vadd.f32 %v1990, %v2006
        %v2023 = vadd.f32 %v1991, %v2007
        %v2024 = vadd.f32 %v1992, %v2008
        %v2025 = vadd.f32 %v1993, %v2009
        %v2026 = vadd.f32 %v1994, %v2010
        %v2027 = vadd.f32 %v1995, %v2011
        %v2028 = vadd.f32 %v1996, %v2012
        %v2029 = vadd.f32 %v1997, %v2013
        %v2030 = vadd.f32 %v1998, %v2014
        %v2031 = vadd.f32 %v1999, %v2015
        %v2032 = vadd.f32 %v2000, %v2016
        %v2033 = vadd.f32 %v2001, %v2017
        %v2034 = vadd.f32 %v2002, %v2018
        %v2035 = vadd.f32 %v2003, %v2019
        %v2036 = vadd.f32 %v2004, %v2020
        %v2037 = vadd.f32 %v2005, %v2021
        %v2038 = vmul.f32 %v1096, %v1547
        %v2039 = vmul.f32 %v1097, %v1548
        %v2040 = vmul.f32 %v1098, %v1547
        %v2041 = vmul.f32 %v1099, %v1548
        %v2042 = vmul.f32 %v1100, %v1547
        %v2043 = vmul.f32 %v1101, %v1548
        %v2044 = vmul.f32 %v1102, %v1547
        %v2045 = vmul.f32 %v1103, %v1548
        %v2046 = vmul.f32 %v1104, %v1547
        %v2047 = vmul.f32 %v1105, %v1548
        %v2048 = vmul.f32 %v1106, %v1547
        %v2049 = vmul.f32 %v1107, %v1548
        %v2050 = vmul.f32 %v1108, %v1547
        %v2051 = vmul.f32 %v1109, %v1548
        %v2052 = vmul.f32 %v1110, %v1547
        %v2053 = vmul.f32 %v1111, %v1548
        %v2054 = vadd.f32 %v2022, %v2038
        %v2055 = vadd.f32 %v2023, %v2039
        %v2056 = vadd.f32 %v2024, %v2040
        %v2057 = vadd.f32 %v2025, %v2041
        %v2058 = vadd.f32 %v2026, %v2042
        %v2059 = vadd.f32 %v2027, %v2043
        %v2060 = vadd.f32 %v2028, %v2044
        %v2061 = vadd.f32 %v2029, %v2045
        %v2062 = vadd.f32 %v2030, %v2046
        %v2063 = vadd.f32 %v2031, %v2047
        %v2064 = vadd.f32 %v2032, %v2048
        %v2065 = vadd.f32 %v2033, %v2049
        %v2066 = vadd.f32 %v2034, %v2050
        %v2067 = vadd.f32 %v2035, %v2051
        %v2068 = vadd.f32 %v2036, %v2052
        %v2069 = vadd.f32 %v2037, %v2053
        %v2070 = vmul.f32 %v1148, %v1809
        %v2071 = vmul.f32 %v1149, %v1810
        %v2072 = vmul.f32 %v1150, %v1809
        %v2073 = vmul.f32 %v1151, %v1810
        %v2074 = vmul.f32 %v1152, %v1809
        %v2075 = vmul.f32 %v1153, %v1810
        %v2076 = vmul.f32 %v1154, %v1809
        %v2077 = vmul.f32 %v1155, %v1810
        %v2078 = vmul.f32 %v1156, %v1809
        %v2079 = vmul.f32 %v1157, %v1810
        %v2080 = vmul.f32 %v1158, %v1809
        %v2081 = vmul.f32 %v1159, %v1810
        %v2082 = vmul.f32 %v1160, %v1809
        %v2083 = vmul.f32 %v1161, %v1810
        %v2084 = vmul.f32 %v1162, %v1809
        %v2085 = vmul.f32 %v1163, %v1810
        %v2086 = vadd.f32 %v2054, %v2070
        %v2087 = vadd.f32 %v2055, %v2071
        %v2088 = vadd.f32 %v2056, %v2072
        %v2089 = vadd.f32 %v2057, %v2073
        %v2090 = vadd.f32 %v2058, %v2074
        %v2091 = vadd.f32 %v2059, %v2075
        %v2092 = vadd.f32 %v2060, %v2076
        %v2093 = vadd.f32 %v2061, %v2077
        %v2094 = vadd.f32 %v2062, %v2078
        %v2095 = vadd.f32 %v2063, %v2079
        %v2096 = vadd.f32 %v2064, %v2080
        %v2097 = vadd.f32 %v2065, %v2081
        %v2098 = vadd.f32 %v2066, %v2082
        %v2099 = vadd.f32 %v2067, %v2083
        %v2100 = vadd.f32 %v2068, %v2084
        %v2101 = vadd.f32 %v2069, %v2085
        %v2102 = vmul.f32 %v1200, %v1844
        %v2103 = vmul.f32 %v1201, %v1845
        %v2104 = vmul.f32 %v1202, %v1844
        %v2105 = vmul.f32 %v1203, %v1845
        %v2106 = vmul.f32 %v1204, %v1844
        %v2107 = vmul.f32 %v1205, %v1845
        %v2108 = vmul.f32 %v1206, %v1844
        %v2109 = vmul.f32 %v1207, %v1845
        %v2110 = vmul.f32 %v1208, %v1844
        %v2111 = vmul.f32 %v1209, %v1845
        %v2112 = vmul.f32 %v1210, %v1844
        %v2113 = vmul.f32 %v1211, %v1845
        %v2114 = vmul.f32 %v1212, %v1844
        %v2115 = vmul.f32 %v1213, %v1845
        %v2116 = vmul.f32 %v1214, %v1844
        %v2117 = vmul.f32 %v1215, %v1845
        %v2118 = vadd.f32 %v2086, %v2102
        %v2119 = vadd.f32 %v2087, %v2103
        %v2120 = vadd.f32 %v2088, %v2104
        %v2121 = vadd.f32 %v2089, %v2105
        %v2122 = vadd.f32 %v2090, %v2106
        %v2123 = vadd.f32 %v2091, %v2107
        %v2124 = vadd.f32 %v2092, %v2108
        %v2125 = vadd.f32 %v2093, %v2109
        %v2126 = vadd.f32 %v2094, %v2110
        %v2127 = vadd.f32 %v2095, %v2111
        %v2128 = vadd.f32 %v2096, %v2112
        %v2129 = vadd.f32 %v2097, %v2113
        %v2130 = vadd.f32 %v2098, %v2114
        %v2131 = vadd.f32 %v2099, %v2115
        %v2132 = vadd.f32 %v2100, %v2116
        %v2133 = vadd.f32 %v2101, %v2117
        %s2134 = scalar_lea.vmem %s830, 240
        %v2135 = vld [vmem:[%s2134] sm:$0xff]
        %v2136 = vld [vmem:[%s2134 + $0x8] sm:$0x1f]
        %v2137 = vmul.f32 %v1252, %v2135
        %v2138 = vmul.f32 %v1253, %v2136
        %v2139 = vmul.f32 %v1254, %v2135
        %v2140 = vmul.f32 %v1255, %v2136
        %v2141 = vmul.f32 %v1256, %v2135
        %v2142 = vmul.f32 %v1257, %v2136
        %v2143 = vmul.f32 %v1258, %v2135
        %v2144 = vmul.f32 %v1259, %v2136
        %v2145 = vmul.f32 %v1260, %v2135
        %v2146 = vmul.f32 %v1261, %v2136
        %v2147 = vmul.f32 %v1262, %v2135
        %v2148 = vmul.f32 %v1263, %v2136
        %v2149 = vmul.f32 %v1264, %v2135
        %v2150 = vmul.f32 %v1265, %v2136
        %v2151 = vmul.f32 %v1266, %v2135
        %v2152 = vmul.f32 %v1267, %v2136
        %v2153 = vadd.f32 %v2118, %v2137
        %v2154 = vadd.f32 %v2119, %v2138
        %v2155 = vadd.f32 %v2120, %v2139
        %v2156 = vadd.f32 %v2121, %v2140
        %v2157 = vadd.f32 %v2122, %v2141
        %v2158 = vadd.f32 %v2123, %v2142
        %v2159 = vadd.f32 %v2124, %v2143
        %v2160 = vadd.f32 %v2125, %v2144
        %v2161 = vadd.f32 %v2126, %v2145
        %v2162 = vadd.f32 %v2127, %v2146
        %v2163 = vadd.f32 %v2128, %v2147
        %v2164 = vadd.f32 %v2129, %v2148
        %v2165 = vadd.f32 %v2130, %v2149
        %v2166 = vadd.f32 %v2131, %v2150
        %v2167 = vadd.f32 %v2132, %v2151
        %v2168 = vadd.f32 %v2133, %v2152
        %v2169 = vmax.f32 %v1878, %v2153
        %v2170 = vmax.f32 %v1879, %v2154
        %v2171 = vmax.f32 %v1880, %v2155
        %v2172 = vmax.f32 %v1881, %v2156
        %v2173 = vmax.f32 %v1882, %v2157
        %v2174 = vmax.f32 %v1883, %v2158
        %v2175 = vmax.f32 %v1884, %v2159
        %v2176 = vmax.f32 %v1885, %v2160
        %v2177 = vmax.f32 %v1886, %v2161
        %v2178 = vmax.f32 %v1887, %v2162
        %v2179 = vmax.f32 %v1888, %v2163
        %v2180 = vmax.f32 %v1889, %v2164
        %v2181 = vmax.f32 %v1890, %v2165
        %v2182 = vmax.f32 %v1891, %v2166
        %v2183 = vmax.f32 %v1892, %v2167
        %v2184 = vmax.f32 %v1893, %v2168
        %v2185 = vld [vmem:[%s837] sm:$0xff]
        %v2186 = vld [vmem:[%s837 + $0x8] sm:$0x1f]
        %v2187 = vld [vmem:[%s837 + $0x10] sm:$0xff]
        %v2188 = vld [vmem:[%s837 + $0x18] sm:$0x1f]
        %v2189 = vld [vmem:[%s837 + $0x20] sm:$0xff]
        %v2190 = vld [vmem:[%s837 + $0x28] sm:$0x1f]
        %v2191 = vld [vmem:[%s837 + $0x30] sm:$0xff]
        %v2192 = vld [vmem:[%s837 + $0x38] sm:$0x1f]
        %v2193 = vld [vmem:[%s837 + $0x40] sm:$0xff]
        %v2194 = vld [vmem:[%s837 + $0x48] sm:$0x1f]
        %v2195 = vld [vmem:[%s837 + $0x50] sm:$0xff]
        %v2196 = vld [vmem:[%s837 + $0x58] sm:$0x1f]
        %v2197 = vld [vmem:[%s837 + $0x60] sm:$0xff]
        %v2198 = vld [vmem:[%s837 + $0x68] sm:$0x1f]
        %v2199 = vld [vmem:[%s837 + $0x70] sm:$0xff]
        %v2200 = vld [vmem:[%s837 + $0x78] sm:$0x1f]
        %v2201 = vadd.f32 %v2169, %v2185
        %v2202 = vadd.f32 %v2170, %v2186
        %v2203 = vadd.f32 %v2171, %v2187
        %v2204 = vadd.f32 %v2172, %v2188
        %v2205 = vadd.f32 %v2173, %v2189
        %v2206 = vadd.f32 %v2174, %v2190
        %v2207 = vadd.f32 %v2175, %v2191
        %v2208 = vadd.f32 %v2176, %v2192
        %v2209 = vadd.f32 %v2177, %v2193
        %v2210 = vadd.f32 %v2178, %v2194
        %v2211 = vadd.f32 %v2179, %v2195
        %v2212 = vadd.f32 %v2180, %v2196
        %v2213 = vadd.f32 %v2181, %v2197
        %v2214 = vadd.f32 %v2182, %v2198
        %v2215 = vadd.f32 %v2183, %v2199
        %v2216 = vadd.f32 %v2184, %v2200
        %v2217 = vmax.f32 %v2201, 0.0
        %v2218 = vmax.f32 %v2202, 0.0
        %v2219 = vmax.f32 %v2203, 0.0
        %v2220 = vmax.f32 %v2204, 0.0
        %v2221 = vmax.f32 %v2205, 0.0
        %v2222 = vmax.f32 %v2206, 0.0
        %v2223 = vmax.f32 %v2207, 0.0
        %v2224 = vmax.f32 %v2208, 0.0
        %v2225 = vmax.f32 %v2209, 0.0
        %v2226 = vmax.f32 %v2210, 0.0
        %v2227 = vmax.f32 %v2211, 0.0
        %v2228 = vmax.f32 %v2212, 0.0
        %v2229 = vmax.f32 %v2213, 0.0
        %v2230 = vmax.f32 %v2214, 0.0
        %v2231 = vmax.f32 %v2215, 0.0
        %v2232 = vmax.f32 %v2216, 0.0
        %vm2233 = vcmask 105472
        %2234 = vst.msk [vmem:[%s848] sm:$0xff] %vm2233, %v2217
        %vm2235 = vcmask 102400
        %2236 = vst.msk [vmem:[%s848 + $0x8] sm:$0x1f] %vm2235, %v2218
        %2237 = vst.msk [vmem:[%s848 + $0x10] sm:$0xff] %vm2233, %v2219
        %2238 = vst.msk [vmem:[%s848 + $0x18] sm:$0x1f] %vm2235, %v2220
        %2239 = vst.msk [vmem:[%s848 + $0x20] sm:$0xff] %vm2233, %v2221
        %2240 = vst.msk [vmem:[%s848 + $0x28] sm:$0x1f] %vm2235, %v2222
        %2241 = vst.msk [vmem:[%s848 + $0x30] sm:$0xff] %vm2233, %v2223
        %2242 = vst.msk [vmem:[%s848 + $0x38] sm:$0x1f] %vm2235, %v2224
        %2243 = vst.msk [vmem:[%s848 + $0x40] sm:$0xff] %vm2233, %v2225
        %2244 = vst.msk [vmem:[%s848 + $0x48] sm:$0x1f] %vm2235, %v2226
        %2245 = vst.msk [vmem:[%s848 + $0x50] sm:$0xff] %vm2233, %v2227
        %2246 = vst.msk [vmem:[%s848 + $0x58] sm:$0x1f] %vm2235, %v2228
        %2247 = vst.msk [vmem:[%s848 + $0x60] sm:$0xff] %vm2233, %v2229
        %2248 = vst.msk [vmem:[%s848 + $0x68] sm:$0x1f] %vm2235, %v2230
        %2249 = vst.msk [vmem:[%s848 + $0x70] sm:$0xff] %vm2233, %v2231
        %2250 = vst.msk [vmem:[%s848 + $0x78] sm:$0x1f] %vm2235, %v2232
        %s2251 = smul.u32 8, %s19
        %p2252 = scmp.lt.s32.totalorder %s18, 1
        %s2253 = scalar_select %p2252, %s18, 1
        %p2254 = scmp.lt.s32.totalorder %s2251, 31
        %s2255 = scalar_select %p2254, %s2251, 31
        %s2256 = smul.addr %s2255, 2
        %s2257 = smul.addr %s2253, 64
        %s2258 = sadd.s32 %s2256, %s2257
        %s2259 = smul.addr %s2258, 8
        %s2260 = scalar_lea.vmem %s3, %s2259
        // Predicated region
        $region71: #{net_forward.3} parent=65 // pred_check
          %p2261 = pneg %p124
        $region72: #{net_forward.3} parent=65 // pred_check_branch
          %2263 = sbr.rel (%p2261) target = $region74
        $region73: #{net_forward.3} parent=65 // pred_region
          %s2264 = smul.u32 8, %s19
        $region74: #{net_forward.3} parent=65 // pred_fallthru
          _
      $region66: #{net_forward.3} parent=5 // pred_fallthru
        _
      %p2265 = scmp.le.s32.totalorder 2, %s9
      // Predicated region
      $region75: #{net_forward.3} parent=5 // pred_check
        %p2266 = pneg %p2265
      $region76: #{net_forward.3} parent=5 // pred_check_branch
        %2268 = sbr.rel (%p2266) target = $region78
      $region77: #{net_forward.3} parent=5 // pred_region
        %s2269 = ssub.s32 %s9, 2
        // Predicated region
        $region79: #{net_forward.3} parent=77 // pred_check
          %p2270 = pneg %p130
        $region80: #{net_forward.3} parent=77 // pred_check_branch
          %2272 = sbr.rel (%p2270) target = $region82
        $region81: #{net_forward.3} parent=77 // pred_region
          %s2273 = smul.u32 8, %s21
          %p2274 = scmp.lt.s32.totalorder %s20, 1
          %s2275 = scalar_select %p2274, %s20, 1
          %p2276 = scmp.lt.s32.totalorder %s2273, 31
          %s2277 = scalar_select %p2276, %s2273, 31
          %s2278 = smul.addr %s2277, 2
          %s2279 = smul.addr %s2275, 64
          %s2280 = sadd.s32 %s2278, %s2279
          %s2281 = smul.addr %s2280, 8
          %s2282 = scalar_lea.vmem %s3, %s2281
        $region82: #{net_forward.3} parent=77 // pred_fallthru
          _
      $region78: #{net_forward.3} parent=5 // pred_fallthru
        _
    $region6: #{net_forward.3} parent=1 // loop_footer
      %s13 = sadd.s32 1, %s9
    $region7: #{net_forward.3} parent=1 // loop_footer_branch
      %8 = sbr.rel target = $region3
    $region8: #{net_forward.3} parent=1 // loop_exit
      _

// kernel: net_forward.4
$region0: #{net_forward.4}
  #allocation0 [shape = 'u32[]', space=smem, size = 0x4, offset = 0x4, fixed_abs, tag = 'smem constant byte address 0x4 - core index']
  #allocation1 [shape = 'u32[144,128]{1,0:T(1,128)}', space=vmem, size = 0x12000, scoped, tag = 'internal scratch']
  %s0 = inlined_call_operand.vmem [shape: bf16[242,288], index: 0, kind: input, shape index: {}]
  %s1 = inlined_call_operand.vmem [shape: bf16[288,64], index: 1, kind: input, shape index: {}]
  %s2 = inlined_call_operand.vmem [shape: f32[1,64], index: 2, kind: input, shape index: {}]
  %s3 = inlined_call_operand.vmem [shape: f32[242,64], index: 3, kind: output, shape index: {}]
  %s4 = sld [smem:[#allocation0]]
  $region22: #{net_forward.4} parent=0
    _
  %s6 = ssub.s32 1, %s4
  %s7 = scalar_select 0, %s6, %s4
  // Predicated region
  $region2: #{net_forward.4} parent=0 // pred_check
    _
  $region3: #{net_forward.4} parent=0 // pred_check_branch
    %9 = sbr.rel (0) target = $region5
  $region4: #{net_forward.4} parent=0 // pred_region
    _
  $region5: #{net_forward.4} parent=0 // pred_fallthru
    _
  // Predicated region
  $region6: #{net_forward.4} parent=0 // pred_check
    _
  $region7: #{net_forward.4} parent=0 // pred_check_branch
    %11 = sbr.rel (0) target = $region9
  $region8: #{net_forward.4} parent=0 // pred_region
    _
  $region9: #{net_forward.4} parent=0 // pred_fallthru
    _
  // Predicated region
  $region10: #{net_forward.4} parent=0 // pred_check
    _
  $region11: #{net_forward.4} parent=0 // pred_check_branch
    %13 = sbr.rel (0) target = $region13
  $region12: #{net_forward.4} parent=0 // pred_region
    _
  $region13: #{net_forward.4} parent=0 // pred_fallthru
    _
  %v15 = vld [vmem:[%s0] sm:$0xff]
  %v16 = vld [vmem:[%s0 + $0x8] sm:$0xf]
  %v17 = vld [vmem:[%s0 + $0xc] sm:$0xff]
  %v18 = vld [vmem:[%s0 + $0x14] sm:$0xf]
  %v19 = vld [vmem:[%s0 + $0x18] sm:$0xff]
  %v20 = vld [vmem:[%s0 + $0x20] sm:$0xf]
  %v21 = vld [vmem:[%s0 + $0x24] sm:$0xff]
  %v22 = vld [vmem:[%s0 + $0x2c] sm:$0xf]
  %v23 = vld [vmem:[%s0 + $0x30] sm:$0xff]
  %v24 = vld [vmem:[%s0 + $0x38] sm:$0xf]
  %v25 = vld [vmem:[%s0 + $0x3c] sm:$0xff]
  %v26 = vld [vmem:[%s0 + $0x44] sm:$0xf]
  %v27 = vld [vmem:[%s0 + $0x48] sm:$0xff]
  %v28 = vld [vmem:[%s0 + $0x50] sm:$0xf]
  %v29 = vld [vmem:[%s0 + $0x54] sm:$0xff]
  %v30 = vld [vmem:[%s0 + $0x5c] sm:$0xf]
  %v31 = vld [vmem:[%s0 + $0x60] sm:$0xff]
  %v32 = vld [vmem:[%s0 + $0x68] sm:$0xf]
  %v33 = vld [vmem:[%s0 + $0x6c] sm:$0xff]
  %v34 = vld [vmem:[%s0 + $0x74] sm:$0xf]
  %v35 = vld [vmem:[%s0 + $0x78] sm:$0xff]
  %v36 = vld [vmem:[%s0 + $0x80] sm:$0xf]
  %v37 = vld [vmem:[%s0 + $0x84] sm:$0xff]
  %v38 = vld [vmem:[%s0 + $0x8c] sm:$0xf]
  %v39 = vld [vmem:[%s0 + $0x90] sm:$0xff]
  %v40 = vld [vmem:[%s0 + $0x98] sm:$0xf]
  %v41 = vld [vmem:[%s0 + $0x9c] sm:$0xff]
  %v42 = vld [vmem:[%s0 + $0xa4] sm:$0xf]
  %v43 = vld [vmem:[%s0 + $0xa8] sm:$0xff]
  %v44 = vld [vmem:[%s0 + $0xb0] sm:$0xf]
  %v45 = vld [vmem:[%s0 + $0xb4] sm:$0xff]
  %v46 = vld [vmem:[%s0 + $0xbc] sm:$0xf]
  %v47 = vld [vmem:[%s0 + $0xc0] sm:$0xff]
  %v48 = vld [vmem:[%s0 + $0xc8] sm:$0xf]
  %v49 = vld [vmem:[%s0 + $0xcc] sm:$0xff]
  %v50 = vld [vmem:[%s0 + $0xd4] sm:$0xf]
  %v51 = vld [vmem:[%s0 + $0xd8] sm:$0xff]
  %v52 = vld [vmem:[%s0 + $0xe0] sm:$0xf]
  %v53 = vld [vmem:[%s0 + $0xe4] sm:$0xff]
  %v54 = vld [vmem:[%s0 + $0xec] sm:$0xf]
  %v55 = vld [vmem:[%s0 + $0xf0] sm:$0xff]
  %v56 = vld [vmem:[%s0 + $0xf8] sm:$0xf]
  %v57 = vld [vmem:[%s0 + $0xfc] sm:$0xff]
  %v58 = vld [vmem:[%s0 + $0x104] sm:$0xf]
  %v59 = vld [vmem:[%s0 + $0x108] sm:$0xff]
  %v60 = vld [vmem:[%s0 + $0x110] sm:$0xf]
  %v61 = vld [vmem:[%s0 + $0x114] sm:$0xff]
  %v62 = vld [vmem:[%s0 + $0x11c] sm:$0xf]
  %v63 = vld [vmem:[%s0 + $0x120] sm:$0xff]
  %v64 = vld [vmem:[%s0 + $0x128] sm:$0xf]
  %v65 = vld [vmem:[%s0 + $0x12c] sm:$0xff]
  %v66 = vld [vmem:[%s0 + $0x134] sm:$0xf]
  %v67 = vld [vmem:[%s0 + $0x138] sm:$0xff]
  %v68 = vld [vmem:[%s0 + $0x140] sm:$0xf]
  %v69 = vld [vmem:[%s0 + $0x144] sm:$0xff]
  %v70 = vld [vmem:[%s0 + $0x14c] sm:$0xf]
  %v71 = vld [vmem:[%s0 + $0x150] sm:$0xff]
  %v72 = vld [vmem:[%s0 + $0x158] sm:$0xf]
  %v73 = vld [vmem:[%s0 + $0x15c] sm:$0xff]
  %v74 = vld [vmem:[%s0 + $0x164] sm:$0xf]
  %v75 = vld [vmem:[%s0 + $0x168] sm:$0x11]
  %v76 = vld [vmem:[%s0 + $0x170] sm:$0x1]
  %v77 = vld [vmem:[%s1] sm:$0xf]
  %v78 = vld [vmem:[%s1 + $0x4] sm:$0xf]
  %v79 = vld [vmem:[%s1 + $0x8] sm:$0xf]
  %v80 = vld [vmem:[%s1 + $0xc] sm:$0xf]
  %v81 = vld [vmem:[%s1 + $0x10] sm:$0xf]
  %v82 = vld [vmem:[%s1 + $0x14] sm:$0xf]
  %v83 = vld [vmem:[%s1 + $0x18] sm:$0xf]
  %v84 = vld [vmem:[%s1 + $0x1c] sm:$0xf]
  %v85 = vld [vmem:[%s1 + $0x20] sm:$0xf]
  %v86 = vld [vmem:[%s1 + $0x24] sm:$0xf]
  %v87 = vld [vmem:[%s1 + $0x28] sm:$0xf]
  %v88 = vld [vmem:[%s1 + $0x2c] sm:$0xf]
  %v89 = vld [vmem:[%s1 + $0x30] sm:$0xf]
  %v90 = vld [vmem:[%s1 + $0x34] sm:$0xf]
  %v91 = vld [vmem:[%s1 + $0x38] sm:$0xf]
  %v92 = vld [vmem:[%s1 + $0x3c] sm:$0xf]
  %v93 = vld [vmem:[%s1 + $0x40] sm:$0xf]
  %v94 = vld [vmem:[%s1 + $0x44] sm:$0xf]
  %v95 = vld [vmem:[%s1 + $0x48] sm:$0xf]
  %v96 = vld [vmem:[%s1 + $0x4c] sm:$0xf]
  %v97 = vld [vmem:[%s1 + $0x50] sm:$0xf]
  %v98 = vld [vmem:[%s1 + $0x54] sm:$0xf]
  %v99 = vld [vmem:[%s1 + $0x58] sm:$0xf]
  %v100 = vld [vmem:[%s1 + $0x5c] sm:$0xf]
  %v101 = vld [vmem:[%s1 + $0x60] sm:$0xf]
  %v102 = vld [vmem:[%s1 + $0x64] sm:$0xf]
  %v103 = vld [vmem:[%s1 + $0x68] sm:$0xf]
  %v104 = vld [vmem:[%s1 + $0x6c] sm:$0xf]
  %v105 = vld [vmem:[%s1 + $0x70] sm:$0xf]
  %v106 = vld [vmem:[%s1 + $0x74] sm:$0xf]
  %v107 = vld [vmem:[%s1 + $0x78] sm:$0xf]
  %v108 = vld [vmem:[%s1 + $0x7c] sm:$0xf]
  %v109 = vld [vmem:[%s1 + $0x80] sm:$0xf]
  %v110 = vld [vmem:[%s1 + $0x84] sm:$0xf]
  %v111 = vld [vmem:[%s1 + $0x88] sm:$0xf]
  %v112 = vld [vmem:[%s1 + $0x8c] sm:$0xf]
  %v113 = vld [vmem:[%s2] sm:$0x1]
  %v115 = vlaneseq
  %v116 = vshrl.u32 %v115, 7
  %v117 = vsub.s32 0, %v116
  %v118 = vrot.slane %v113, %v117
  %v182 = vunpack.c.l.b16 %v15
  %v183 = vunpack.c.h.b16 %v15
  %v184 = vunpack.c.l.b16 %v16
  %v185 = vunpack.c.l.b16 %v17
  %v186 = vunpack.c.h.b16 %v17
  %v187 = vunpack.c.l.b16 %v18
  %v188 = vunpack.c.l.b16 %v19
  %v189 = vunpack.c.h.b16 %v19
  %v190 = vunpack.c.l.b16 %v20
  %v191 = vunpack.c.l.b16 %v21
  %v192 = vunpack.c.h.b16 %v21
  %v193 = vunpack.c.l.b16 %v22
  %v194 = vunpack.c.l.b16 %v23
  %v195 = vunpack.c.h.b16 %v23
  %v196 = vunpack.c.l.b16 %v24
  %v197 = vunpack.c.l.b16 %v25
  %v198 = vunpack.c.h.b16 %v25
  %v199 = vunpack.c.l.b16 %v26
  %v200 = vunpack.c.l.b16 %v27
  %v201 = vunpack.c.h.b16 %v27
  %v202 = vunpack.c.l.b16 %v28
  %v203 = vunpack.c.l.b16 %v29
  %v204 = vunpack.c.h.b16 %v29
  %v205 = vunpack.c.l.b16 %v30
  %v206 = vunpack.c.l.b16 %v31
  %v207 = vunpack.c.h.b16 %v31
  %v208 = vunpack.c.l.b16 %v32
  %v209 = vunpack.c.l.b16 %v33
  %v210 = vunpack.c.h.b16 %v33
  %v211 = vunpack.c.l.b16 %v34
  %v212 = vunpack.c.l.b16 %v35
  %v213 = vunpack.c.h.b16 %v35
  %v214 = vunpack.c.l.b16 %v36
  %v215 = vunpack.c.l.b16 %v37
  %v216 = vunpack.c.h.b16 %v37
  %v217 = vunpack.c.l.b16 %v38
  %v218 = vunpack.c.l.b16 %v39
  %v219 = vunpack.c.h.b16 %v39
  %v220 = vunpack.c.l.b16 %v40
  %v221 = vunpack.c.l.b16 %v41
  %v222 = vunpack.c.h.b16 %v41
  %v223 = vunpack.c.l.b16 %v42
  %v224 = vunpack.c.l.b16 %v43
  %v225 = vunpack.c.h.b16 %v43
  %v226 = vunpack.c.l.b16 %v44
  %v227 = vunpack.c.l.b16 %v45
  %v228 = vunpack.c.h.b16 %v45
  %v229 = vunpack.c.l.b16 %v46
  %v230 = vunpack.c.l.b16 %v47
  %v231 = vunpack.c.h.b16 %v47
  %v232 = vunpack.c.l.b16 %v48
  %v233 = vunpack.c.l.b16 %v49
  %v234 = vunpack.c.h.b16 %v49
  %v235 = vunpack.c.l.b16 %v50
  %v236 = vunpack.c.l.b16 %v51
  %v237 = vunpack.c.h.b16 %v51
  %v238 = vunpack.c.l.b16 %v52
  %v239 = vunpack.c.l.b16 %v53
  %v240 = vunpack.c.h.b16 %v53
  %v241 = vunpack.c.l.b16 %v54
  %v242 = vunpack.c.l.b16 %v55
  %v243 = vunpack.c.h.b16 %v55
  %v244 = vunpack.c.l.b16 %v56
  %v245 = vunpack.c.l.b16 %v57
  %v246 = vunpack.c.h.b16 %v57
  %v247 = vunpack.c.l.b16 %v58
  %v248 = vunpack.c.l.b16 %v59
  %v249 = vunpack.c.h.b16 %v59
  %v250 = vunpack.c.l.b16 %v60
  %v251 = vunpack.c.l.b16 %v61
  %v252 = vunpack.c.h.b16 %v61
  %v253 = vunpack.c.l.b16 %v62
  %v254 = vunpack.c.l.b16 %v63
  %v255 = vunpack.c.h.b16 %v63
  %v256 = vunpack.c.l.b16 %v64
  %v257 = vunpack.c.l.b16 %v65
  %v258 = vunpack.c.h.b16 %v65
  %v259 = vunpack.c.l.b16 %v66
  %v260 = vunpack.c.l.b16 %v67
  %v261 = vunpack.c.h.b16 %v67
  %v262 = vunpack.c.l.b16 %v68
  %v263 = vunpack.c.l.b16 %v69
  %v264 = vunpack.c.h.b16 %v69
  %v265 = vunpack.c.l.b16 %v70
  %v266 = vunpack.c.l.b16 %v71
  %v267 = vunpack.c.h.b16 %v71
  %v268 = vunpack.c.l.b16 %v72
  %v269 = vunpack.c.l.b16 %v73
  %v270 = vunpack.c.h.b16 %v73
  %v271 = vunpack.c.l.b16 %v74
  %v272 = vunpack.c.l.b16 %v75
  %v273 = vunpack.c.h.b16 %v75
  %v274 = vunpack.c.l.b16 %v76
  %v275 = vpack.c.b16 %v185, %v182
  %v276 = vpack.c.b16 %v186, %v183
  %v277 = vpack.c.b16 %v187, %v184
  %v278 = vpack.c.b16 %v191, %v188
  %v279 = vpack.c.b16 %v192, %v189
  %v280 = vpack.c.b16 %v193, %v190
  %v281 = vpack.c.b16 %v197, %v194
  %v282 = vpack.c.b16 %v198, %v195
  %v283 = vpack.c.b16 %v199, %v196
  %v284 = vpack.c.b16 %v203, %v200
  %v285 = vpack.c.b16 %v204, %v201
  %v286 = vpack.c.b16 %v205, %v202
  %v287 = vpack.c.b16 %v209, %v206
  %v288 = vpack.c.b16 %v210, %v207
  %v289 = vpack.c.b16 %v211, %v208
  %v290 = vpack.c.b16 %v215, %v212
  %v291 = vpack.c.b16 %v216, %v213
  %v292 = vpack.c.b16 %v217, %v214
  %v293 = vpack.c.b16 %v221, %v218
  %v294 = vpack.c.b16 %v222, %v219
  %v295 = vpack.c.b16 %v223, %v220
  %v296 = vpack.c.b16 %v227, %v224
  %v297 = vpack.c.b16 %v228, %v225
  %v298 = vpack.c.b16 %v229, %v226
  %v299 = vpack.c.b16 %v233, %v230
  %v300 = vpack.c.b16 %v234, %v231
  %v301 = vpack.c.b16 %v235, %v232
  %v302 = vpack.c.b16 %v239, %v236
  %v303 = vpack.c.b16 %v240, %v237
  %v304 = vpack.c.b16 %v241, %v238
  %v305 = vpack.c.b16 %v245, %v242
  %v306 = vpack.c.b16 %v246, %v243
  %v307 = vpack.c.b16 %v247, %v244
  %v308 = vpack.c.b16 %v251, %v248
  %v309 = vpack.c.b16 %v252, %v249
  %v310 = vpack.c.b16 %v253, %v250
  %v311 = vpack.c.b16 %v257, %v254
  %v312 = vpack.c.b16 %v258, %v255
  %v313 = vpack.c.b16 %v259, %v256
  %v314 = vpack.c.b16 %v263, %v260
  %v315 = vpack.c.b16 %v264, %v261
  %v316 = vpack.c.b16 %v265, %v262
  %v317 = vpack.c.b16 %v269, %v266
  %v318 = vpack.c.b16 %v270, %v267
  %v319 = vpack.c.b16 %v271, %v268
  %v320 = vpack.c.b16 %v272, %v272
  %v321 = vpack.c.b16 %v273, %v273
  %v322 = vpack.c.b16 %v274, %v274
  %v391 = vunpack.c.l.b16 %v77
  %v392 = vunpack.c.l.b16 %v78
  %v393 = vunpack.c.l.b16 %v79
  %v394 = vunpack.c.l.b16 %v80
  %v395 = vunpack.c.l.b16 %v81
  %v396 = vunpack.c.l.b16 %v82
  %v397 = vunpack.c.l.b16 %v83
  %v398 = vunpack.c.l.b16 %v84
  %v399 = vunpack.c.l.b16 %v85
  %v400 = vunpack.c.l.b16 %v86
  %v401 = vunpack.c.l.b16 %v87
  %v402 = vunpack.c.l.b16 %v88
  %v403 = vunpack.c.l.b16 %v89
  %v404 = vunpack.c.l.b16 %v90
  %v405 = vunpack.c.l.b16 %v91
  %v406 = vunpack.c.l.b16 %v92
  %v407 = vunpack.c.l.b16 %v93
  %v408 = vunpack.c.l.b16 %v94
  %v409 = vunpack.c.l.b16 %v95
  %v410 = vunpack.c.l.b16 %v96
  %v411 = vunpack.c.l.b16 %v97
  %v412 = vunpack.c.l.b16 %v98
  %v413 = vunpack.c.l.b16 %v99
  %v414 = vunpack.c.l.b16 %v100
  %v415 = vunpack.c.l.b16 %v101
  %v416 = vunpack.c.l.b16 %v102
  %v417 = vunpack.c.l.b16 %v103
  %v418 = vunpack.c.l.b16 %v104
  %v419 = vunpack.c.l.b16 %v105
  %v420 = vunpack.c.l.b16 %v106
  %v421 = vunpack.c.l.b16 %v107
  %v422 = vunpack.c.l.b16 %v108
  %v423 = vunpack.c.l.b16 %v109
  %v424 = vunpack.c.l.b16 %v110
  %v425 = vunpack.c.l.b16 %v111
  %v426 = vunpack.c.l.b16 %v112
  %v427 = vpack.c.b16 %v392, %v391
  %v428 = vpack.c.b16 %v394, %v393
  %v429 = vpack.c.b16 %v396, %v395
  %v430 = vpack.c.b16 %v398, %v397
  %v431 = vpack.c.b16 %v400, %v399
  %v432 = vpack.c.b16 %v402, %v401
  %v433 = vpack.c.b16 %v404, %v403
  %v434 = vpack.c.b16 %v406, %v405
  %v435 = vpack.c.b16 %v408, %v407
  %v436 = vpack.c.b16 %v410, %v409
  %v437 = vpack.c.b16 %v412, %v411
  %v438 = vpack.c.b16 %v414, %v413
  %v439 = vpack.c.b16 %v416, %v415
  %v440 = vpack.c.b16 %v418, %v417
  %v441 = vpack.c.b16 %v420, %v419
  %v442 = vpack.c.b16 %v422, %v421
  %v443 = vpack.c.b16 %v424, %v423
  %v444 = vpack.c.b16 %v426, %v425
  %vm463 = vcmask 261120
  %v465 = vsel %vm463, %v277, 0
  %v468 = vsel %vm463, %v280, 0
  %v471 = vsel %vm463, %v283, 0
  %v474 = vsel %vm463, %v286, 0
  %v477 = vsel %vm463, %v289, 0
  %v480 = vsel %vm463, %v292, 0
  %v483 = vsel %vm463, %v295, 0
  %v486 = vsel %vm463, %v298, 0
  %v489 = vsel %vm463, %v301, 0
  %v492 = vsel %vm463, %v304, 0
  %v495 = vsel %vm463, %v307, 0
  %v498 = vsel %vm463, %v310, 0
  %v501 = vsel %vm463, %v313, 0
  %v504 = vsel %vm463, %v316, 0
  %v507 = vsel %vm463, %v319, 0
  %v510 = vsel %vm463, %v322, 0
  %512 = vmatprep.subr.bf16.mxu0 0
  %513 = vmatpush1.bf16.msra.mxu0 %v427
  %514 = vmatprep.subr.bf16.mxu0 0
  %515 = vmatpush1.bf16.msra.mxu0 %v428
  %516 = vmatprep.subr.bf16.mxu0 0
  %517 = vmatpush1.bf16.msra.mxu0 %v429
  %518 = vmatprep.subr.bf16.mxu0 0
  %519 = vmatpush1.bf16.msra.mxu0 %v430
  %520 = vmatprep.subr.bf16.mxu0 0
  %521 = vmatpush1.bf16.msra.mxu0 %v431
  %522 = vmatprep.subr.bf16.mxu0 0
  %523 = vmatpush1.bf16.msra.mxu0 %v432
  %524 = vmatprep.subr.bf16.mxu0 0
  %525 = vmatpush1.bf16.msra.mxu0 %v433
  %526 = vmatprep.subr.bf16.mxu0 0
  %527 = vmatpush1.bf16.msra.mxu0 %v434
  %528 = vmatprep.subr.bf16.mxu0 0
  %529 = vmatpush1.bf16.msra.mxu0 %v435
  %530 = vmatprep.subr.bf16.mxu0 0
  %531 = vmatpush1.bf16.msra.mxu0 %v436
  %532 = vmatprep.subr.bf16.mxu0 0
  %533 = vmatpush1.bf16.msra.mxu0 %v437
  %534 = vmatprep.subr.bf16.mxu0 0
  %535 = vmatpush1.bf16.msra.mxu0 %v438
  %536 = vmatprep.subr.bf16.mxu0 0
  %537 = vmatpush1.bf16.msra.mxu0 %v439
  %538 = vmatprep.subr.bf16.mxu0 0
  %539 = vmatpush1.bf16.msra.mxu0 %v440
  %540 = vmatprep.subr.bf16.mxu0 0
  %541 = vmatpush1.bf16.msra.mxu0 %v441
  %542 = vmatprep.subr.bf16.mxu0 0
  %543 = vmatpush1.bf16.msra.mxu0 %v442
  %544 = vmatprep.mubr.bf16.mxu0 %v276
  %545 = vmatmul.mubr.bf16.gmra.mrb[0].mxu0 %v275
  %v546 = vpop.f32.mrb[0].mxu0
  %v547 = vadd.f32 %v118, %v546
  %v548 = vpop.f32.mrb[0].mxu0
  %v549 = vpop.f32.mrb[0].mxu0
  %v550 = vadd.f32 %v118, %v549
  %v551 = vpop.f32.mrb[0].mxu0
  %552 = vmatprep.mubr.bf16.mxu0 %v279
  %553 = vmatmul.mubr.bf16.gmra.mrb[0].mxu0 %v278
  %v554 = vpop.f32.mrb[0].mxu0
  %v555 = vadd.f32 %v118, %v554
  %v556 = vpop.f32.mrb[0].mxu0
  %v557 = vpop.f32.mrb[0].mxu0
  %v558 = vadd.f32 %v118, %v557
  %v559 = vpop.f32.mrb[0].mxu0
  %560 = vmatprep.mubr.bf16.mxu0 %v282
  %561 = vmatmul.mubr.bf16.gmra.mrb[0].mxu0 %v281
  %v562 = vpop.f32.mrb[0].mxu0
  %v563 = vadd.f32 %v118, %v562
  %v564 = vpop.f32.mrb[0].mxu0
  %v565 = vpop.f32.mrb[0].mxu0
  %v566 = vadd.f32 %v118, %v565
  %v567 = vpop.f32.mrb[0].mxu0
  %568 = vmatprep.mubr.bf16.mxu0 %v285
  %569 = vmatmul.mubr.bf16.gmra.mrb[0].mxu0 %v284
  %v570 = vpop.f32.mrb[0].mxu0
  %v571 = vadd.f32 %v118, %v570
  %v572 = vpop.f32.mrb[0].mxu0
  %v573 = vpop.f32.mrb[0].mxu0
  %v574 = vadd.f32 %v118, %v573
  %v575 = vpop.f32.mrb[0].mxu0
  %576 = vmatprep.mubr.bf16.mxu0 %v288
  %577 = vmatmul.mubr.bf16.gmra.mrb[0].mxu0 %v287
  %v578 = vpop.f32.mrb[0].mxu0
  %v579 = vadd.f32 %v118, %v578
  %v580 = vpop.f32.mrb[0].mxu0
  %v581 = vpop.f32.mrb[0].mxu0
  %v582 = vadd.f32 %v118, %v581
  %v583 = vpop.f32.mrb[0].mxu0
  %584 = vmatprep.mubr.bf16.mxu0 %v291
  %585 = vmatmul.mubr.bf16.gmra.mrb[0].mxu0 %v290
  %v586 = vpop.f32.mrb[0].mxu0
  %v587 = vadd.f32 %v118, %v586
  %v588 = vpop.f32.mrb[0].mxu0
  %v589 = vpop.f32.mrb[0].mxu0
  %v590 = vadd.f32 %v118, %v589
  %v591 = vpop.f32.mrb[0].mxu0
  %592 = vmatprep.mubr.bf16.mxu0 %v294
  %593 = vmatmul.mubr.bf16.gmra.mrb[0].mxu0 %v293
  %v594 = vpop.f32.mrb[0].mxu0
  %v595 = vadd.f32 %v118, %v594
  %v596 = vpop.f32.mrb[0].mxu0
  %v597 = vpop.f32.mrb[0].mxu0
  %v598 = vadd.f32 %v118, %v597
  %v599 = vpop.f32.mrb[0].mxu0
  %600 = vmatprep.mubr.bf16.mxu0 %v297
  %601 = vmatmul.mubr.bf16.gmra.mrb[0].mxu0 %v296
  %v602 = vpop.f32.mrb[0].mxu0
  %v603 = vadd.f32 %v118, %v602
  %v604 = vpop.f32.mrb[0].mxu0
  %v605 = vpop.f32.mrb[0].mxu0
  %v606 = vadd.f32 %v118, %v605
  %v607 = vpop.f32.mrb[0].mxu0
  %608 = vmatprep.mubr.bf16.mxu0 %v300
  %609 = vmatmul.mubr.bf16.gmra.mrb[0].mxu0 %v299
  %v610 = vpop.f32.mrb[0].mxu0
  %v611 = vadd.f32 %v118, %v610
  %v612 = vpop.f32.mrb[0].mxu0
  %v613 = vpop.f32.mrb[0].mxu0
  %v614 = vadd.f32 %v118, %v613
  %v615 = vpop.f32.mrb[0].mxu0
  %616 = vmatprep.mubr.bf16.mxu0 %v303
  %617 = vmatmul.mubr.bf16.gmra.mrb[0].mxu0 %v302
  %v618 = vpop.f32.mrb[0].mxu0
  %v619 = vadd.f32 %v118, %v618
  %v620 = vpop.f32.mrb[0].mxu0
  %v621 = vpop.f32.mrb[0].mxu0
  %v622 = vadd.f32 %v118, %v621
  %v623 = vpop.f32.mrb[0].mxu0
  %624 = vmatprep.mubr.bf16.mxu0 %v306
  %625 = vmatmul.mubr.bf16.gmra.mrb[0].mxu0 %v305
  %v626 = vpop.f32.mrb[0].mxu0
  %v627 = vadd.f32 %v118, %v626
  %v628 = vpop.f32.mrb[0].mxu0
  %v629 = vpop.f32.mrb[0].mxu0
  %v630 = vadd.f32 %v118, %v629
  %v631 = vpop.f32.mrb[0].mxu0
  %632 = vmatprep.mubr.bf16.mxu0 %v309
  %633 = vmatmul.mubr.bf16.gmra.mrb[0].mxu0 %v308
  %v634 = vpop.f32.mrb[0].mxu0
  %v635 = vadd.f32 %v118, %v634
  %v636 = vpop.f32.mrb[0].mxu0
  %v637 = vpop.f32.mrb[0].mxu0
  %v638 = vadd.f32 %v118, %v637
  %v639 = vpop.f32.mrb[0].mxu0
  %640 = vmatprep.mubr.bf16.mxu0 %v312
  %641 = vmatmul.mubr.bf16.gmra.mrb[0].mxu0 %v311
  %v642 = vpop.f32.mrb[0].mxu0
  %v643 = vadd.f32 %v118, %v642
  %v644 = vpop.f32.mrb[0].mxu0
  %v645 = vpop.f32.mrb[0].mxu0
  %v646 = vadd.f32 %v118, %v645
  %v647 = vpop.f32.mrb[0].mxu0
  %648 = vmatprep.mubr.bf16.mxu0 %v315
  %649 = vmatmul.mubr.bf16.gmra.mrb[0].mxu0 %v314
  %v650 = vpop.f32.mrb[0].mxu0
  %v651 = vadd.f32 %v118, %v650
  %v652 = vpop.f32.mrb[0].mxu0
  %v653 = vpop.f32.mrb[0].mxu0
  %v654 = vadd.f32 %v118, %v653
  %v655 = vpop.f32.mrb[0].mxu0
  %656 = vmatprep.mubr.bf16.mxu0 %v318
  %657 = vmatmul.mubr.bf16.gmra.mrb[0].mxu0 %v317
  %v658 = vpop.f32.mrb[0].mxu0
  %v659 = vadd.f32 %v118, %v658
  %v660 = vpop.f32.mrb[0].mxu0
  %v661 = vpop.f32.mrb[0].mxu0
  %v662 = vadd.f32 %v118, %v661
  %v663 = vpop.f32.mrb[0].mxu0
  %664 = vmatprep.mubr.bf16.mxu0 %v321
  %665 = vmatmul.mubr.bf16.gmra.mrb[0].mxu0 %v320
  %v666 = vpop.f32.mrb[0].mxu0
  %v667 = vadd.f32 %v118, %v666
  %v668 = vpop.f32.mrb[0].mxu0
  %v669 = vpop.f32.mrb[0].mxu0
  %v670 = vpop.f32.mrb[0].mxu0
  %671 = vdwg.mxu0
  %672 = vmatprep.subr.bf16.mxu0 0
  %673 = vmatpush1.bf16.msra.mxu0 %v443
  %674 = vmatprep.subr.bf16.mxu0 0
  %675 = vmatpush1.bf16.msra.mxu0 %v444
  %676 = vmatprep.subr.bf16.mxu0 0
  %677 = vmatpush1.bf16.msra.mxu0 0
  %678 = vmatprep.subr.bf16.mxu0 0
  %679 = vmatpush1.bf16.msra.mxu0 0
  %680 = vmatprep.subr.bf16.mxu0 0
  %681 = vmatpush1.bf16.msra.mxu0 0
  %682 = vmatprep.subr.bf16.mxu0 0
  %683 = vmatpush1.bf16.msra.mxu0 0
  %684 = vmatprep.subr.bf16.mxu0 0
  %685 = vmatpush1.bf16.msra.mxu0 0
  %686 = vmatprep.subr.bf16.mxu0 0
  %687 = vmatpush1.bf16.msra.mxu0 0
  %688 = vmatprep.subr.bf16.mxu0 0
  %689 = vmatpush1.bf16.msra.mxu0 0
  %690 = vmatprep.subr.bf16.mxu0 0
  %691 = vmatpush1.bf16.msra.mxu0 0
  %692 = vmatprep.subr.bf16.mxu0 0
  %693 = vmatpush1.bf16.msra.mxu0 0
  %694 = vmatprep.subr.bf16.mxu0 0
  %695 = vmatpush1.bf16.msra.mxu0 0
  %696 = vmatprep.subr.bf16.mxu0 0
  %697 = vmatpush1.bf16.msra.mxu0 0
  %698 = vmatprep.subr.bf16.mxu0 0
  %699 = vmatpush1.bf16.msra.mxu0 0
  %700 = vmatprep.subr.bf16.mxu0 0
  %701 = vmatpush1.bf16.msra.mxu0 0
  %702 = vmatprep.subr.bf16.mxu0 0
  %703 = vmatpush1.bf16.msra.mxu0 0
  %704 = vmatprep.mubr.bf16.mxu0 0
  %705 = vmatmul.mubr.bf16.gmra.mrb[0].mxu0 %v465
  %v706 = vpop.f32.mrb[0].mxu0
  %v707 = vadd.f32 %v547, %v706
  %v708 = vpop.f32.mrb[0].mxu0
  %v709 = vpop.f32.mrb[0].mxu0
  %v710 = vadd.f32 %v550, %v709
  %v711 = vpop.f32.mrb[0].mxu0
  %712 = vmatprep.mubr.bf16.mxu0 0
  %713 = vmatmul.mubr.bf16.gmra.mrb[0].mxu0 %v468
  %v714 = vpop.f32.mrb[0].mxu0
  %v715 = vadd.f32 %v555, %v714
  %v716 = vpop.f32.mrb[0].mxu0
  %v717 = vpop.f32.mrb[0].mxu0
  %v718 = vadd.f32 %v558, %v717
  %v719 = vpop.f32.mrb[0].mxu0
  %720 = vmatprep.mubr.bf16.mxu0 0
  %721 = vmatmul.mubr.bf16.gmra.mrb[0].mxu0 %v471
  %v722 = vpop.f32.mrb[0].mxu0
  %v723 = vadd.f32 %v563, %v722
  %v724 = vpop.f32.mrb[0].mxu0
  %v725 = vpop.f32.mrb[0].mxu0
  %v726 = vadd.f32 %v566, %v725
  %v727 = vpop.f32.mrb[0].mxu0
  %728 = vmatprep.mubr.bf16.mxu0 0
  %729 = vmatmul.mubr.bf16.gmra.mrb[0].mxu0 %v474
  %v730 = vpop.f32.mrb[0].mxu0
  %v731 = vadd.f32 %v571, %v730
  %v732 = vpop.f32.mrb[0].mxu0
  %v733 = vpop.f32.mrb[0].mxu0
  %v734 = vadd.f32 %v574, %v733
  %v735 = vpop.f32.mrb[0].mxu0
  %736 = vmatprep.mubr.bf16.mxu0 0
  %737 = vmatmul.mubr.bf16.gmra.mrb[0].mxu0 %v477
  %v738 = vpop.f32.mrb[0].mxu0
  %v739 = vadd.f32 %v579, %v738
  %v740 = vpop.f32.mrb[0].mxu0
  %v741 = vpop.f32.mrb[0].mxu0
  %v742 = vadd.f32 %v582, %v741
  %v743 = vpop.f32.mrb[0].mxu0
  %744 = vmatprep.mubr.bf16.mxu0 0
  %745 = vmatmul.mubr.bf16.gmra.mrb[0].mxu0 %v480
  %v746 = vpop.f32.mrb[0].mxu0
  %v747 = vadd.f32 %v587, %v746
  %v748 = vpop.f32.mrb[0].mxu0
  %v749 = vpop.f32.mrb[0].mxu0
  %v750 = vadd.f32 %v590, %v749
  %v751 = vpop.f32.mrb[0].mxu0
  %752 = vmatprep.mubr.bf16.mxu0 0
  %753 = vmatmul.mubr.bf16.gmra.mrb[0].mxu0 %v483
  %v754 = vpop.f32.mrb[0].mxu0
  %v755 = vadd.f32 %v595, %v754
  %v756 = vpop.f32.mrb[0].mxu0
  %v757 = vpop.f32.mrb[0].mxu0
  %v758 = vadd.f32 %v598, %v757
  %v759 = vpop.f32.mrb[0].mxu0
  %760 = vmatprep.mubr.bf16.mxu0 0
  %761 = vmatmul.mubr.bf16.gmra.mrb[0].mxu0 %v486
  %v762 = vpop.f32.mrb[0].mxu0
  %v763 = vadd.f32 %v603, %v762
  %v764 = vpop.f32.mrb[0].mxu0
  %v765 = vpop.f32.mrb[0].mxu0
  %v766 = vadd.f32 %v606, %v765
  %v767 = vpop.f32.mrb[0].mxu0
  %768 = vmatprep.mubr.bf16.mxu0 0
  %769 = vmatmul.mubr.bf16.gmra.mrb[0].mxu0 %v489
  %v770 = vpop.f32.mrb[0].mxu0
  %v771 = vadd.f32 %v611, %v770
  %v772 = vpop.f32.mrb[0].mxu0
  %v773 = vpop.f32.mrb[0].mxu0
  %v774 = vadd.f32 %v614, %v773
  %v775 = vpop.f32.mrb[0].mxu0
  %776 = vmatprep.mubr.bf16.mxu0 0
  %777 = vmatmul.mubr.bf16.gmra.mrb[0].mxu0 %v492
  %v778 = vpop.f32.mrb[0].mxu0
  %v779 = vadd.f32 %v619, %v778
  %v780 = vpop.f32.mrb[0].mxu0
  %v781 = vpop.f32.mrb[0].mxu0
  %v782 = vadd.f32 %v622, %v781
  %v783 = vpop.f32.mrb[0].mxu0
  %784 = vmatprep.mubr.bf16.mxu0 0
  %785 = vmatmul.mubr.bf16.gmra.mrb[0].mxu0 %v495
  %v786 = vpop.f32.mrb[0].mxu0
  %v787 = vadd.f32 %v627, %v786
  %v788 = vpop.f32.mrb[0].mxu0
  %v789 = vpop.f32.mrb[0].mxu0
  %v790 = vadd.f32 %v630, %v789
  %v791 = vpop.f32.mrb[0].mxu0
  %792 = vmatprep.mubr.bf16.mxu0 0
  %793 = vmatmul.mubr.bf16.gmra.mrb[0].mxu0 %v498
  %v794 = vpop.f32.mrb[0].mxu0
  %v795 = vadd.f32 %v635, %v794
  %v796 = vpop.f32.mrb[0].mxu0
  %v797 = vpop.f32.mrb[0].mxu0
  %v798 = vadd.f32 %v638, %v797
  %v799 = vpop.f32.mrb[0].mxu0
  %800 = vmatprep.mubr.bf16.mxu0 0
  %801 = vmatmul.mubr.bf16.gmra.mrb[0].mxu0 %v501
  %v802 = vpop.f32.mrb[0].mxu0
  %v803 = vadd.f32 %v643, %v802
  %v804 = vpop.f32.mrb[0].mxu0
  %v805 = vpop.f32.mrb[0].mxu0
  %v806 = vadd.f32 %v646, %v805
  %v807 = vpop.f32.mrb[0].mxu0
  %808 = vmatprep.mubr.bf16.mxu0 0
  %809 = vmatmul.mubr.bf16.gmra.mrb[0].mxu0 %v504
  %v810 = vpop.f32.mrb[0].mxu0
  %v811 = vadd.f32 %v651, %v810
  %v812 = vpop.f32.mrb[0].mxu0
  %v813 = vpop.f32.mrb[0].mxu0
  %v814 = vadd.f32 %v654, %v813
  %v815 = vpop.f32.mrb[0].mxu0
  %816 = vmatprep.mubr.bf16.mxu0 0
  %817 = vmatmul.mubr.bf16.gmra.mrb[0].mxu0 %v507
  %v818 = vpop.f32.mrb[0].mxu0
  %v819 = vadd.f32 %v659, %v818
  %v820 = vpop.f32.mrb[0].mxu0
  %v821 = vpop.f32.mrb[0].mxu0
  %v822 = vadd.f32 %v662, %v821
  %v823 = vpop.f32.mrb[0].mxu0
  %824 = vmatprep.mubr.bf16.mxu0 0
  %825 = vmatmul.mubr.bf16.gmra.mrb[0].mxu0 %v510
  %v826 = vpop.f32.mrb[0].mxu0
  %v827 = vadd.f32 %v667, %v826
  %v828 = vpop.f32.mrb[0].mxu0
  %v829 = vpop.f32.mrb[0].mxu0
  %v830 = vpop.f32.mrb[0].mxu0
  %831 = vdwg.mxu0
  %v832 = vmax.f32 %v707, 0.0
  %v833 = vmax.f32 %v710, 0.0
  %v834 = vmax.f32 %v715, 0.0
  %v835 = vmax.f32 %v718, 0.0
  %v836 = vmax.f32 %v723, 0.0
  %v837 = vmax.f32 %v726, 0.0
  %v838 = vmax.f32 %v731, 0.0
  %v839 = vmax.f32 %v734, 0.0
  %v840 = vmax.f32 %v739, 0.0
  %v841 = vmax.f32 %v742, 0.0
  %v842 = vmax.f32 %v747, 0.0
  %v843 = vmax.f32 %v750, 0.0
  %v844 = vmax.f32 %v755, 0.0
  %v845 = vmax.f32 %v758, 0.0
  %v846 = vmax.f32 %v763, 0.0
  %v847 = vmax.f32 %v766, 0.0
  %v848 = vmax.f32 %v771, 0.0
  %v849 = vmax.f32 %v774, 0.0
  %v850 = vmax.f32 %v779, 0.0
  %v851 = vmax.f32 %v782, 0.0
  %v852 = vmax.f32 %v787, 0.0
  %v853 = vmax.f32 %v790, 0.0
  %v854 = vmax.f32 %v795, 0.0
  %v855 = vmax.f32 %v798, 0.0
  %v856 = vmax.f32 %v803, 0.0
  %v857 = vmax.f32 %v806, 0.0
  %v858 = vmax.f32 %v811, 0.0
  %v859 = vmax.f32 %v814, 0.0
  %v860 = vmax.f32 %v819, 0.0
  %v861 = vmax.f32 %v822, 0.0
  %v862 = vmax.f32 %v827, 0.0
  %vm863 = vcmask 523264
  %864 = vst.msk [vmem:[%s3] sm:$0xff] %vm863, %v832
  %865 = vst.msk [vmem:[%s3 + $0x8] sm:$0xff] %vm863, %v833
  %866 = vst.msk [vmem:[%s3 + $0x10] sm:$0xff] %vm863, %v834
  %867 = vst.msk [vmem:[%s3 + $0x18] sm:$0xff] %vm863, %v835
  %868 = vst.msk [vmem:[%s3 + $0x20] sm:$0xff] %vm863, %v836
  %869 = vst.msk [vmem:[%s3 + $0x28] sm:$0xff] %vm863, %v837
  %870 = vst.msk [vmem:[%s3 + $0x30] sm:$0xff] %vm863, %v838
  %871 = vst.msk [vmem:[%s3 + $0x38] sm:$0xff] %vm863, %v839
  %872 = vst.msk [vmem:[%s3 + $0x40] sm:$0xff] %vm863, %v840
  %873 = vst.msk [vmem:[%s3 + $0x48] sm:$0xff] %vm863, %v841
  %874 = vst.msk [vmem:[%s3 + $0x50] sm:$0xff] %vm863, %v842
  %875 = vst.msk [vmem:[%s3 + $0x58] sm:$0xff] %vm863, %v843
  %876 = vst.msk [vmem:[%s3 + $0x60] sm:$0xff] %vm863, %v844
  %877 = vst.msk [vmem:[%s3 + $0x68] sm:$0xff] %vm863, %v845
  %878 = vst.msk [vmem:[%s3 + $0x70] sm:$0xff] %vm863, %v846
  %879 = vst.msk [vmem:[%s3 + $0x78] sm:$0xff] %vm863, %v847
  %880 = vst.msk [vmem:[%s3 + $0x80] sm:$0xff] %vm863, %v848
  %881 = vst.msk [vmem:[%s3 + $0x88] sm:$0xff] %vm863, %v849
  %882 = vst.msk [vmem:[%s3 + $0x90] sm:$0xff] %vm863, %v850
  %883 = vst.msk [vmem:[%s3 + $0x98] sm:$0xff] %vm863, %v851
  %884 = vst.msk [vmem:[%s3 + $0xa0] sm:$0xff] %vm863, %v852
  %885 = vst.msk [vmem:[%s3 + $0xa8] sm:$0xff] %vm863, %v853
  %886 = vst.msk [vmem:[%s3 + $0xb0] sm:$0xff] %vm863, %v854
  %887 = vst.msk [vmem:[%s3 + $0xb8] sm:$0xff] %vm863, %v855
  %888 = vst.msk [vmem:[%s3 + $0xc0] sm:$0xff] %vm863, %v856
  %889 = vst.msk [vmem:[%s3 + $0xc8] sm:$0xff] %vm863, %v857
  %890 = vst.msk [vmem:[%s3 + $0xd0] sm:$0xff] %vm863, %v858
  %891 = vst.msk [vmem:[%s3 + $0xd8] sm:$0xff] %vm863, %v859
  %892 = vst.msk [vmem:[%s3 + $0xe0] sm:$0xff] %vm863, %v860
  %893 = vst.msk [vmem:[%s3 + $0xe8] sm:$0xff] %vm863, %v861
  %vm894 = vcmask 517120
  %895 = vst.msk [vmem:[%s3 + $0xf0] sm:$0x3] %vm894, %v862
  // Predicated region
  $region14: #{net_forward.4} parent=0 // pred_check
    _
  $region15: #{net_forward.4} parent=0 // pred_check_branch
    %897 = sbr.rel (0) target = $region17
  $region16: #{net_forward.4} parent=0 // pred_region
    _
  $region17: #{net_forward.4} parent=0 // pred_fallthru
    _
  // Predicated region
  $region18: #{net_forward.4} parent=0 // pred_check
    _
  $region19: #{net_forward.4} parent=0 // pred_check_branch
    %899 = sbr.rel (0) target = $region21
  $region20: #{net_forward.4} parent=0 // pred_region
    _
  $region21: #{net_forward.4} parent=0 // pred_fallthru
    _

// kernel: net_forward.5
$region0: #{net_forward.5}
  #allocation0 [shape = 'u32[]', space=smem, size = 0x4, offset = 0x4, fixed_abs, tag = 'smem constant byte address 0x4 - core index']
  #allocation1 [shape = 'u32[144,128]{1,0:T(1,128)}', space=vmem, size = 0x12000, scoped, tag = 'internal scratch']
  %s0 = inlined_call_operand.vmem [shape: f32[2,1600], index: 0, kind: input, shape index: {}]
  %s1 = inlined_call_operand.vmem [shape: f32[2,1600], index: 1, kind: input, shape index: {}]
  %s2 = inlined_call_operand.vmem [shape: f32[2,1600], index: 2, kind: input, shape index: {}]
  %s3 = inlined_call_operand.vmem [shape: f32[2,1600], index: 3, kind: input, shape index: {}]
  %s4 = inlined_call_operand.vmem [shape: bf16[1600,128], index: 4, kind: input, shape index: {}]
  %s5 = inlined_call_operand.vmem [shape: f32[1,128], index: 5, kind: input, shape index: {}]
  %s6 = inlined_call_operand.vmem [shape: bf16[128,10], index: 6, kind: input, shape index: {}]
  %s7 = inlined_call_operand.vmem [shape: f32[1,10], index: 7, kind: input, shape index: {}]
  %s8 = inlined_call_operand.hbm [shape: f32[2,10], index: 8, kind: output, shape index: {}]
  %s9 = sld [smem:[#allocation0]]
  $region42: #{net_forward.5} parent=0
    _
  %s11 = ssub.s32 1, %s9
  %s12 = scalar_select 0, %s11, %s9
  $region1: #{net_forward.5} parent=0
    #allocation2 [shape = 'u8[1024]{0}', space=vmem, size = 0x400, scoped, tag = 'output window, operand 0, single buffered']
    #allocation3 [shape = 's32[1]{0}', space=sflag, size = 0x4, scoped, tag = 'scoped memory for net_forward.5']
    %13 = vsyncpa [#allocation3], 0
    // Predicated region
    $region2: #{net_forward.5} parent=1 // pred_check
      _
    $region3: #{net_forward.5} parent=1 // pred_check_branch
      %15 = sbr.rel (0) target = $region5
    $region4: #{net_forward.5} parent=1 // pred_region
      _
    $region5: #{net_forward.5} parent=1 // pred_fallthru
      _
    // Predicated region
    $region6: #{net_forward.5} parent=1 // pred_check
      _
    $region7: #{net_forward.5} parent=1 // pred_check_branch
      %17 = sbr.rel (0) target = $region9
    $region8: #{net_forward.5} parent=1 // pred_region
      _
    $region9: #{net_forward.5} parent=1 // pred_fallthru
      _
    // Predicated region
    $region10: #{net_forward.5} parent=1 // pred_check
      _
    $region11: #{net_forward.5} parent=1 // pred_check_branch
      %19 = sbr.rel (0) target = $region13
    $region12: #{net_forward.5} parent=1 // pred_region
      _
    $region13: #{net_forward.5} parent=1 // pred_fallthru
      _
    // Predicated region
    $region14: #{net_forward.5} parent=1 // pred_check
      _
    $region15: #{net_forward.5} parent=1 // pred_check_branch
      %21 = sbr.rel (0) target = $region17
    $region16: #{net_forward.5} parent=1 // pred_region
      _
    $region17: #{net_forward.5} parent=1 // pred_fallthru
      _
    // Predicated region
    $region18: #{net_forward.5} parent=1 // pred_check
      _
    $region19: #{net_forward.5} parent=1 // pred_check_branch
      %23 = sbr.rel (0) target = $region21
    $region20: #{net_forward.5} parent=1 // pred_region
      _
    $region21: #{net_forward.5} parent=1 // pred_fallthru
      _
    // Predicated region
    $region22: #{net_forward.5} parent=1 // pred_check
      _
    $region23: #{net_forward.5} parent=1 // pred_check_branch
      %25 = sbr.rel (0) target = $region25
    $region24: #{net_forward.5} parent=1 // pred_region
      _
    $region25: #{net_forward.5} parent=1 // pred_fallthru
      _
    // Predicated region
    $region26: #{net_forward.5} parent=1 // pred_check
      _
    $region27: #{net_forward.5} parent=1 // pred_check_branch
      %27 = sbr.rel (0) target = $region29
    $region28: #{net_forward.5} parent=1 // pred_region
      _
    $region29: #{net_forward.5} parent=1 // pred_fallthru
      _
    // Predicated region
    $region30: #{net_forward.5} parent=1 // pred_check
      _
    $region31: #{net_forward.5} parent=1 // pred_check_branch
      %29 = sbr.rel (0) target = $region33
    $region32: #{net_forward.5} parent=1 // pred_region
      _
    $region33: #{net_forward.5} parent=1 // pred_fallthru
      _
    %v31 = vld [vmem:[%s0] sm:$0xff]
    %v32 = vld [vmem:[%s0 + $0x8] sm:$0xff]
    %v33 = vld [vmem:[%s0 + $0x10] sm:$0xff]
    %v34 = vld [vmem:[%s0 + $0x18] sm:$0x3]
    %v35 = vld [vmem:[%s1] sm:$0xff]
    %v36 = vld [vmem:[%s1 + $0x8] sm:$0xff]
    %v37 = vld [vmem:[%s1 + $0x10] sm:$0xff]
    %v38 = vld [vmem:[%s1 + $0x18] sm:$0x3]
    %v39 = vmax.f32 %v31, %v35
    %v40 = vmax.f32 %v32, %v36
    %v41 = vmax.f32 %v33, %v37
    %v42 = vmax.f32 %v34, %v38
    %v43 = vld [vmem:[%s2] sm:$0xff]
    %v44 = vld [vmem:[%s2 + $0x8] sm:$0xff]
    %v45 = vld [vmem:[%s2 + $0x10] sm:$0xff]
    %v46 = vld [vmem:[%s2 + $0x18] sm:$0x3]
    %v47 = vld [vmem:[%s3] sm:$0xff]
    %v48 = vld [vmem:[%s3 + $0x8] sm:$0xff]
    %v49 = vld [vmem:[%s3 + $0x10] sm:$0xff]
    %v50 = vld [vmem:[%s3 + $0x18] sm:$0x3]
    %v51 = vmax.f32 %v43, %v47
    %v52 = vmax.f32 %v44, %v48
    %v53 = vmax.f32 %v45, %v49
    %v54 = vmax.f32 %v46, %v50
    %v55 = vmax.f32 %v39, %v51
    %v56 = vmax.f32 %v40, %v52
    %v57 = vmax.f32 %v41, %v53
    %v58 = vmax.f32 %v42, %v54
    %v63 = vcombine.high %v55, %v55
    %v65 = vunpack.c.l.s4 1983009808
    %v66 = vunpack.c.0.s8 %v65
    %v67 = vlaneseq
    %v68 = vshrl.u32 %v67, 7
    %v69 = vsub.s32 %v66, %v68
    %v70 = vrot.slane %v55, %v69
    %v72 = vunpack.c.l.s4 1983009808
    %v73 = vunpack.c.0.s8 %v72
    %v74 = vlaneseq
    %v75 = vshrl.u32 %v74, 7
    %v76 = vsub.s32 %v73, %v75
    %v77 = vrot.slane %v63, %v76
    %v78 = vcombine.high %v70, %v70
    %v79 = vcombine.high %v77, %v77
    %v80 = vcombine.high %v56, %v56
    %v82 = vunpack.c.l.s4 1983009808
    %v83 = vunpack.c.0.s8 %v82
    %v84 = vlaneseq
    %v85 = vshrl.u32 %v84, 7
    %v86 = vsub.s32 %v83, %v85
    %v87 = vrot.slane %v56, %v86
    %v89 = vunpack.c.l.s4 1983009808
    %v90 = vunpack.c.0.s8 %v89
    %v91 = vlaneseq
    %v92 = vshrl.u32 %v91, 7
    %v93 = vsub.s32 %v90, %v92
    %v94 = vrot.slane %v80, %v93
    %v95 = vcombine.high %v87, %v87
    %v96 = vcombine.high %v94, %v94
    %v97 = vcombine.high %v57, %v57
    %v99 = vunpack.c.l.s4 1983009808
    %v100 = vunpack.c.0.s8 %v99
    %v101 = vlaneseq
    %v102 = vshrl.u32 %v101, 7
    %v103 = vsub.s32 %v100, %v102
    %v104 = vrot.slane %v57, %v103
    %v106 = vunpack.c.l.s4 1983009808
    %v107 = vunpack.c.0.s8 %v106
    %v108 = vlaneseq
    %v109 = vshrl.u32 %v108, 7
    %v110 = vsub.s32 %v107, %v109
    %v111 = vrot.slane %v97, %v110
    %v112 = vcombine.high %v104, %v104
    %v113 = vcombine.high %v111, %v111
    %v115 = vunpack.c.l.s4 1983009808
    %v116 = vunpack.c.0.s8 %v115
    %v117 = vlaneseq
    %v118 = vshrl.u32 %v117, 7
    %v119 = vsub.s32 %v116, %v118
    %v120 = vrot.slane %v58, %v119
    %v134 = vpack.c.bf16 %v70, %v70
    %v135 = vpack.c.bf16 %v78, %v78
    %v136 = vpack.c.bf16 %v77, %v77
    %v137 = vpack.c.bf16 %v79, %v79
    %v138 = vpack.c.bf16 %v87, %v87
    %v139 = vpack.c.bf16 %v95, %v95
    %v140 = vpack.c.bf16 %v94, %v94
    %v141 = vpack.c.bf16 %v96, %v96
    %v142 = vpack.c.bf16 %v104, %v104
    %v143 = vpack.c.bf16 %v112, %v112
    %v144 = vpack.c.bf16 %v111, %v111
    %v145 = vpack.c.bf16 %v113, %v113
    %v146 = vpack.c.bf16 %v120, %v120
    %v147 = vld [vmem:[%s4] sm:$0xf]
    %v148 = vld [vmem:[%s4 + $0x4] sm:$0xf]
    %v149 = vld [vmem:[%s4 + $0x8] sm:$0xf]
    %v150 = vld [vmem:[%s4 + $0xc] sm:$0xf]
    %v151 = vld [vmem:[%s4 + $0x10] sm:$0xf]
    %v152 = vld [vmem:[%s4 + $0x14] sm:$0xf]
    %v153 = vld [vmem:[%s4 + $0x18] sm:$0xf]
    %v154 = vld [vmem:[%s4 + $0x1c] sm:$0xf]
    %v155 = vld [vmem:[%s4 + $0x20] sm:$0xf]
    %v156 = vld [vmem:[%s4 + $0x24] sm:$0xf]
    %v157 = vld [vmem:[%s4 + $0x28] sm:$0xf]
    %v158 = vld [vmem:[%s4 + $0x2c] sm:$0xf]
    %v159 = vld [vmem:[%s4 + $0x30] sm:$0xf]
    %v160 = vld [vmem:[%s4 + $0x34] sm:$0xf]
    %v161 = vld [vmem:[%s4 + $0x38] sm:$0xf]
    %v162 = vld [vmem:[%s4 + $0x3c] sm:$0xf]
    %v163 = vld [vmem:[%s4 + $0x40] sm:$0xf]
    %v164 = vld [vmem:[%s4 + $0x44] sm:$0xf]
    %v165 = vld [vmem:[%s4 + $0x48] sm:$0xf]
    %v166 = vld [vmem:[%s4 + $0x4c] sm:$0xf]
    %v167 = vld [vmem:[%s4 + $0x50] sm:$0xf]
    %v168 = vld [vmem:[%s4 + $0x54] sm:$0xf]
    %v169 = vld [vmem:[%s4 + $0x58] sm:$0xf]
    %v170 = vld [vmem:[%s4 + $0x5c] sm:$0xf]
    %v171 = vld [vmem:[%s4 + $0x60] sm:$0xf]
    %v172 = vld [vmem:[%s4 + $0x64] sm:$0xf]
    %v173 = vld [vmem:[%s4 + $0x68] sm:$0xf]
    %v174 = vld [vmem:[%s4 + $0x6c] sm:$0xf]
    %v175 = vld [vmem:[%s4 + $0x70] sm:$0xf]
    %v176 = vld [vmem:[%s4 + $0x74] sm:$0xf]
    %v177 = vld [vmem:[%s4 + $0x78] sm:$0xf]
    %v178 = vld [vmem:[%s4 + $0x7c] sm:$0xf]
    %v179 = vld [vmem:[%s4 + $0x80] sm:$0xf]
    %v180 = vld [vmem:[%s4 + $0x84] sm:$0xf]
    %v181 = vld [vmem:[%s4 + $0x88] sm:$0xf]
    %v182 = vld [vmem:[%s4 + $0x8c] sm:$0xf]
    %v183 = vld [vmem:[%s4 + $0x90] sm:$0xf]
    %v184 = vld [vmem:[%s4 + $0x94] sm:$0xf]
    %v185 = vld [vmem:[%s4 + $0x98] sm:$0xf]
    %v186 = vld [vmem:[%s4 + $0x9c] sm:$0xf]
    %v187 = vld [vmem:[%s4 + $0xa0] sm:$0xf]
    %v188 = vld [vmem:[%s4 + $0xa4] sm:$0xf]
    %v189 = vld [vmem:[%s4 + $0xa8] sm:$0xf]
    %v190 = vld [vmem:[%s4 + $0xac] sm:$0xf]
    %v191 = vld [vmem:[%s4 + $0xb0] sm:$0xf]
    %v192 = vld [vmem:[%s4 + $0xb4] sm:$0xf]
    %v193 = vld [vmem:[%s4 + $0xb8] sm:$0xf]
    %v194 = vld [vmem:[%s4 + $0xbc] sm:$0xf]
    %v195 = vld [vmem:[%s4 + $0xc0] sm:$0xf]
    %v196 = vld [vmem:[%s4 + $0xc4] sm:$0xf]
    %v197 = vld [vmem:[%s4 + $0xc8] sm:$0xf]
    %v198 = vld [vmem:[%s4 + $0xcc] sm:$0xf]
    %v199 = vld [vmem:[%s4 + $0xd0] sm:$0xf]
    %v200 = vld [vmem:[%s4 + $0xd4] sm:$0xf]
    %v201 = vld [vmem:[%s4 + $0xd8] sm:$0xf]
    %v202 = vld [vmem:[%s4 + $0xdc] sm:$0xf]
    %v203 = vld [vmem:[%s4 + $0xe0] sm:$0xf]
    %v204 = vld [vmem:[%s4 + $0xe4] sm:$0xf]
    %v205 = vld [vmem:[%s4 + $0xe8] sm:$0xf]
    %v206 = vld [vmem:[%s4 + $0xec] sm:$0xf]
    %v207 = vld [vmem:[%s4 + $0xf0] sm:$0xf]
    %v208 = vld [vmem:[%s4 + $0xf4] sm:$0xf]
    %v209 = vld [vmem:[%s4 + $0xf8] sm:$0xf]
    %v210 = vld [vmem:[%s4 + $0xfc] sm:$0xf]
    %v211 = vld [vmem:[%s4 + $0x100] sm:$0xf]
    %v212 = vld [vmem:[%s4 + $0x104] sm:$0xf]
    %v213 = vld [vmem:[%s4 + $0x108] sm:$0xf]
    %v214 = vld [vmem:[%s4 + $0x10c] sm:$0xf]
    %v215 = vld [vmem:[%s4 + $0x110] sm:$0xf]
    %v216 = vld [vmem:[%s4 + $0x114] sm:$0xf]
    %v217 = vld [vmem:[%s4 + $0x118] sm:$0xf]
    %v218 = vld [vmem:[%s4 + $0x11c] sm:$0xf]
    %v219 = vld [vmem:[%s4 + $0x120] sm:$0xf]
    %v220 = vld [vmem:[%s4 + $0x124] sm:$0xf]
    %v221 = vld [vmem:[%s4 + $0x128] sm:$0xf]
    %v222 = vld [vmem:[%s4 + $0x12c] sm:$0xf]
    %v223 = vld [vmem:[%s4 + $0x130] sm:$0xf]
    %v224 = vld [vmem:[%s4 + $0x134] sm:$0xf]
    %v225 = vld [vmem:[%s4 + $0x138] sm:$0xf]
    %v226 = vld [vmem:[%s4 + $0x13c] sm:$0xf]
    %v227 = vld [vmem:[%s4 + $0x140] sm:$0xf]
    %v228 = vld [vmem:[%s4 + $0x144] sm:$0xf]
    %v229 = vld [vmem:[%s4 + $0x148] sm:$0xf]
    %v230 = vld [vmem:[%s4 + $0x14c] sm:$0xf]
    %v231 = vld [vmem:[%s4 + $0x150] sm:$0xf]
    %v232 = vld [vmem:[%s4 + $0x154] sm:$0xf]
    %v233 = vld [vmem:[%s4 + $0x158] sm:$0xf]
    %v234 = vld [vmem:[%s4 + $0x15c] sm:$0xf]
    %v235 = vld [vmem:[%s4 + $0x160] sm:$0xf]
    %v236 = vld [vmem:[%s4 + $0x164] sm:$0xf]
    %v237 = vld [vmem:[%s4 + $0x168] sm:$0xf]
    %v238 = vld [vmem:[%s4 + $0x16c] sm:$0xf]
    %v239 = vld [vmem:[%s4 + $0x170] sm:$0xf]
    %v240 = vld [vmem:[%s4 + $0x174] sm:$0xf]
    %v241 = vld [vmem:[%s4 + $0x178] sm:$0xf]
    %v242 = vld [vmem:[%s4 + $0x17c] sm:$0xf]
    %v243 = vld [vmem:[%s4 + $0x180] sm:$0xf]
    %v244 = vld [vmem:[%s4 + $0x184] sm:$0xf]
    %v245 = vld [vmem:[%s4 + $0x188] sm:$0xf]
    %v246 = vld [vmem:[%s4 + $0x18c] sm:$0xf]
    %v247 = vld [vmem:[%s4 + $0x190] sm:$0xf]
    %v248 = vld [vmem:[%s4 + $0x194] sm:$0xf]
    %v249 = vld [vmem:[%s4 + $0x198] sm:$0xf]
    %v250 = vld [vmem:[%s4 + $0x19c] sm:$0xf]
    %v251 = vld [vmem:[%s4 + $0x1a0] sm:$0xf]
    %v252 = vld [vmem:[%s4 + $0x1a4] sm:$0xf]
    %v253 = vld [vmem:[%s4 + $0x1a8] sm:$0xf]
    %v254 = vld [vmem:[%s4 + $0x1ac] sm:$0xf]
    %v255 = vld [vmem:[%s4 + $0x1b0] sm:$0xf]
    %v256 = vld [vmem:[%s4 + $0x1b4] sm:$0xf]
    %v257 = vld [vmem:[%s4 + $0x1b8] sm:$0xf]
    %v258 = vld [vmem:[%s4 + $0x1bc] sm:$0xf]
    %v259 = vld [vmem:[%s4 + $0x1c0] sm:$0xf]
    %v260 = vld [vmem:[%s4 + $0x1c4] sm:$0xf]
    %v261 = vld [vmem:[%s4 + $0x1c8] sm:$0xf]
    %v262 = vld [vmem:[%s4 + $0x1cc] sm:$0xf]
    %v263 = vld [vmem:[%s4 + $0x1d0] sm:$0xf]
    %v264 = vld [vmem:[%s4 + $0x1d4] sm:$0xf]
    %v265 = vld [vmem:[%s4 + $0x1d8] sm:$0xf]
    %v266 = vld [vmem:[%s4 + $0x1dc] sm:$0xf]
    %v267 = vld [vmem:[%s4 + $0x1e0] sm:$0xf]
    %v268 = vld [vmem:[%s4 + $0x1e4] sm:$0xf]
    %v269 = vld [vmem:[%s4 + $0x1e8] sm:$0xf]
    %v270 = vld [vmem:[%s4 + $0x1ec] sm:$0xf]
    %v271 = vld [vmem:[%s4 + $0x1f0] sm:$0xf]
    %v272 = vld [vmem:[%s4 + $0x1f4] sm:$0xf]
    %v273 = vld [vmem:[%s4 + $0x1f8] sm:$0xf]
    %v274 = vld [vmem:[%s4 + $0x1fc] sm:$0xf]
    %v275 = vld [vmem:[%s4 + $0x200] sm:$0xf]
    %v276 = vld [vmem:[%s4 + $0x204] sm:$0xf]
    %v277 = vld [vmem:[%s4 + $0x208] sm:$0xf]
    %v278 = vld [vmem:[%s4 + $0x20c] sm:$0xf]
    %v279 = vld [vmem:[%s4 + $0x210] sm:$0xf]
    %v280 = vld [vmem:[%s4 + $0x214] sm:$0xf]
    %v281 = vld [vmem:[%s4 + $0x218] sm:$0xf]
    %v282 = vld [vmem:[%s4 + $0x21c] sm:$0xf]
    %v283 = vld [vmem:[%s4 + $0x220] sm:$0xf]
    %v284 = vld [vmem:[%s4 + $0x224] sm:$0xf]
    %v285 = vld [vmem:[%s4 + $0x228] sm:$0xf]
    %v286 = vld [vmem:[%s4 + $0x22c] sm:$0xf]
    %v287 = vld [vmem:[%s4 + $0x230] sm:$0xf]
    %v288 = vld [vmem:[%s4 + $0x234] sm:$0xf]
    %v289 = vld [vmem:[%s4 + $0x238] sm:$0xf]
    %v290 = vld [vmem:[%s4 + $0x23c] sm:$0xf]
    %v291 = vld [vmem:[%s4 + $0x240] sm:$0xf]
    %v292 = vld [vmem:[%s4 + $0x244] sm:$0xf]
    %v293 = vld [vmem:[%s4 + $0x248] sm:$0xf]
    %v294 = vld [vmem:[%s4 + $0x24c] sm:$0xf]
    %v295 = vld [vmem:[%s4 + $0x250] sm:$0xf]
    %v296 = vld [vmem:[%s4 + $0x254] sm:$0xf]
    %v297 = vld [vmem:[%s4 + $0x258] sm:$0xf]
    %v298 = vld [vmem:[%s4 + $0x25c] sm:$0xf]
    %v299 = vld [vmem:[%s4 + $0x260] sm:$0xf]
    %v300 = vld [vmem:[%s4 + $0x264] sm:$0xf]
    %v301 = vld [vmem:[%s4 + $0x268] sm:$0xf]
    %v302 = vld [vmem:[%s4 + $0x26c] sm:$0xf]
    %v303 = vld [vmem:[%s4 + $0x270] sm:$0xf]
    %v304 = vld [vmem:[%s4 + $0x274] sm:$0xf]
    %v305 = vld [vmem:[%s4 + $0x278] sm:$0xf]
    %v306 = vld [vmem:[%s4 + $0x27c] sm:$0xf]
    %v307 = vld [vmem:[%s4 + $0x280] sm:$0xf]
    %v308 = vld [vmem:[%s4 + $0x284] sm:$0xf]
    %v309 = vld [vmem:[%s4 + $0x288] sm:$0xf]
    %v310 = vld [vmem:[%s4 + $0x28c] sm:$0xf]
    %v311 = vld [vmem:[%s4 + $0x290] sm:$0xf]
    %v312 = vld [vmem:[%s4 + $0x294] sm:$0xf]
    %v313 = vld [vmem:[%s4 + $0x298] sm:$0xf]
    %v314 = vld [vmem:[%s4 + $0x29c] sm:$0xf]
    %v315 = vld [vmem:[%s4 + $0x2a0] sm:$0xf]
    %v316 = vld [vmem:[%s4 + $0x2a4] sm:$0xf]
    %v317 = vld [vmem:[%s4 + $0x2a8] sm:$0xf]
    %v318 = vld [vmem:[%s4 + $0x2ac] sm:$0xf]
    %v319 = vld [vmem:[%s4 + $0x2b0] sm:$0xf]
    %v320 = vld [vmem:[%s4 + $0x2b4] sm:$0xf]
    %v321 = vld [vmem:[%s4 + $0x2b8] sm:$0xf]
    %v322 = vld [vmem:[%s4 + $0x2bc] sm:$0xf]
    %v323 = vld [vmem:[%s4 + $0x2c0] sm:$0xf]
    %v324 = vld [vmem:[%s4 + $0x2c4] sm:$0xf]
    %v325 = vld [vmem:[%s4 + $0x2c8] sm:$0xf]
    %v326 = vld [vmem:[%s4 + $0x2cc] sm:$0xf]
    %v327 = vld [vmem:[%s4 + $0x2d0] sm:$0xf]
    %v328 = vld [vmem:[%s4 + $0x2d4] sm:$0xf]
    %v329 = vld [vmem:[%s4 + $0x2d8] sm:$0xf]
    %v330 = vld [vmem:[%s4 + $0x2dc] sm:$0xf]
    %v331 = vld [vmem:[%s4 + $0x2e0] sm:$0xf]
    %v332 = vld [vmem:[%s4 + $0x2e4] sm:$0xf]
    %v333 = vld [vmem:[%s4 + $0x2e8] sm:$0xf]
    %v334 = vld [vmem:[%s4 + $0x2ec] sm:$0xf]
    %v335 = vld [vmem:[%s4 + $0x2f0] sm:$0xf]
    %v336 = vld [vmem:[%s4 + $0x2f4] sm:$0xf]
    %v337 = vld [vmem:[%s4 + $0x2f8] sm:$0xf]
    %v338 = vld [vmem:[%s4 + $0x2fc] sm:$0xf]
    %v339 = vld [vmem:[%s4 + $0x300] sm:$0xf]
    %v340 = vld [vmem:[%s4 + $0x304] sm:$0xf]
    %v341 = vld [vmem:[%s4 + $0x308] sm:$0xf]
    %v342 = vld [vmem:[%s4 + $0x30c] sm:$0xf]
    %v343 = vld [vmem:[%s4 + $0x310] sm:$0xf]
    %v344 = vld [vmem:[%s4 + $0x314] sm:$0xf]
    %v345 = vld [vmem:[%s4 + $0x318] sm:$0xf]
    %v346 = vld [vmem:[%s4 + $0x31c] sm:$0xf]
    %v347 = vld [vmem:[%s5] sm:$0x1]
    %v349 = vlaneseq
    %v350 = vshrl.u32 %v349, 7
    %v351 = vsub.s32 0, %v350
    %v352 = vrot.slane %v347, %v351
    %v554 = vunpack.c.l.b16 %v147
    %v555 = vunpack.c.l.b16 %v148
    %v556 = vunpack.c.l.b16 %v149
    %v557 = vunpack.c.l.b16 %v150
    %v558 = vunpack.c.l.b16 %v151
    %v559 = vunpack.c.l.b16 %v152
    %v560 = vunpack.c.l.b16 %v153
    %v561 = vunpack.c.l.b16 %v154
    %v562 = vunpack.c.l.b16 %v155
    %v563 = vunpack.c.l.b16 %v156
    %v564 = vunpack.c.l.b16 %v157
    %v565 = vunpack.c.l.b16 %v158
    %v566 = vunpack.c.l.b16 %v159
    %v567 = vunpack.c.l.b16 %v160
    %v568 = vunpack.c.l.b16 %v161
    %v569 = vunpack.c.l.b16 %v162
    %v570 = vunpack.c.l.b16 %v163
    %v571 = vunpack.c.l.b16 %v164
    %v572 = vunpack.c.l.b16 %v165
    %v573 = vunpack.c.l.b16 %v166
    %v574 = vunpack.c.l.b16 %v167
    %v575 = vunpack.c.l.b16 %v168
    %v576 = vunpack.c.l.b16 %v169
    %v577 = vunpack.c.l.b16 %v170
    %v578 = vunpack.c.l.b16 %v171
    %v579 = vunpack.c.l.b16 %v172
    %v580 = vunpack.c.l.b16 %v173
    %v581 = vunpack.c.l.b16 %v174
    %v582 = vunpack.c.l.b16 %v175
    %v583 = vunpack.c.l.b16 %v176
    %v584 = vunpack.c.l.b16 %v177
    %v585 = vunpack.c.l.b16 %v178
    %v586 = vunpack.c.l.b16 %v179
    %v587 = vunpack.c.l.b16 %v180
    %v588 = vunpack.c.l.b16 %v181
    %v589 = vunpack.c.l.b16 %v182
    %v590 = vunpack.c.l.b16 %v183
    %v591 = vunpack.c.l.b16 %v184
    %v592 = vunpack.c.l.b16 %v185
    %v593 = vunpack.c.l.b16 %v186
    %v594 = vunpack.c.l.b16 %v187
    %v595 = vunpack.c.l.b16 %v188
    %v596 = vunpack.c.l.b16 %v189
    %v597 = vunpack.c.l.b16 %v190
    %v598 = vunpack.c.l.b16 %v191
    %v599 = vunpack.c.l.b16 %v192
    %v600 = vunpack.c.l.b16 %v193
    %v601 = vunpack.c.l.b16 %v194
    %v602 = vunpack.c.l.b16 %v195
    %v603 = vunpack.c.l.b16 %v196
    %v604 = vunpack.c.l.b16 %v197
    %v605 = vunpack.c.l.b16 %v198
    %v606 = vunpack.c.l.b16 %v199
    %v607 = vunpack.c.l.b16 %v200
    %v608 = vunpack.c.l.b16 %v201
    %v609 = vunpack.c.l.b16 %v202
    %v610 = vunpack.c.l.b16 %v203
    %v611 = vunpack.c.l.b16 %v204
    %v612 = vunpack.c.l.b16 %v205
    %v613 = vunpack.c.l.b16 %v206
    %v614 = vunpack.c.l.b16 %v207
    %v615 = vunpack.c.l.b16 %v208
    %v616 = vunpack.c.l.b16 %v209
    %v617 = vunpack.c.l.b16 %v210
    %v618 = vunpack.c.l.b16 %v211
    %v619 = vunpack.c.l.b16 %v212
    %v620 = vunpack.c.l.b16 %v213
    %v621 = vunpack.c.l.b16 %v214
    %v622 = vunpack.c.l.b16 %v215
    %v623 = vunpack.c.l.b16 %v216
    %v624 = vunpack.c.l.b16 %v217
    %v625 = vunpack.c.l.b16 %v218
    %v626 = vunpack.c.l.b16 %v219
    %v627 = vunpack.c.l.b16 %v220
    %v628 = vunpack.c.l.b16 %v221
    %v629 = vunpack.c.l.b16 %v222
    %v630 = vunpack.c.l.b16 %v223
    %v631 = vunpack.c.l.b16 %v224
    %v632 = vunpack.c.l.b16 %v225
    %v633 = vunpack.c.l.b16 %v226
    %v634 = vunpack.c.l.b16 %v227
    %v635 = vunpack.c.l.b16 %v228
    %v636 = vunpack.c.l.b16 %v229
    %v637 = vunpack.c.l.b16 %v230
    %v638 = vunpack.c.l.b16 %v231
    %v639 = vunpack.c.l.b16 %v232
    %v640 = vunpack.c.l.b16 %v233
    %v641 = vunpack.c.l.b16 %v234
    %v642 = vunpack.c.l.b16 %v235
    %v643 = vunpack.c.l.b16 %v236
    %v644 = vunpack.c.l.b16 %v237
    %v645 = vunpack.c.l.b16 %v238
    %v646 = vunpack.c.l.b16 %v239
    %v647 = vunpack.c.l.b16 %v240
    %v648 = vunpack.c.l.b16 %v241
    %v649 = vunpack.c.l.b16 %v242
    %v650 = vunpack.c.l.b16 %v243
    %v651 = vunpack.c.l.b16 %v244
    %v652 = vunpack.c.l.b16 %v245
    %v653 = vunpack.c.l.b16 %v246
    %v654 = vunpack.c.l.b16 %v247
    %v655 = vunpack.c.l.b16 %v248
    %v656 = vunpack.c.l.b16 %v249
    %v657 = vunpack.c.l.b16 %v250
    %v658 = vunpack.c.l.b16 %v251
    %v659 = vunpack.c.l.b16 %v252
    %v660 = vunpack.c.l.b16 %v253
    %v661 = vunpack.c.l.b16 %v254
    %v662 = vunpack.c.l.b16 %v255
    %v663 = vunpack.c.l.b16 %v256
    %v664 = vunpack.c.l.b16 %v257
    %v665 = vunpack.c.l.b16 %v258
    %v666 = vunpack.c.l.b16 %v259
    %v667 = vunpack.c.l.b16 %v260
    %v668 = vunpack.c.l.b16 %v261
    %v669 = vunpack.c.l.b16 %v262
    %v670 = vunpack.c.l.b16 %v263
    %v671 = vunpack.c.l.b16 %v264
    %v672 = vunpack.c.l.b16 %v265
    %v673 = vunpack.c.l.b16 %v266
    %v674 = vunpack.c.l.b16 %v267
    %v675 = vunpack.c.l.b16 %v268
    %v676 = vunpack.c.l.b16 %v269
    %v677 = vunpack.c.l.b16 %v270
    %v678 = vunpack.c.l.b16 %v271
    %v679 = vunpack.c.l.b16 %v272
    %v680 = vunpack.c.l.b16 %v273
    %v681 = vunpack.c.l.b16 %v274
    %v682 = vunpack.c.l.b16 %v275
    %v683 = vunpack.c.l.b16 %v276
    %v684 = vunpack.c.l.b16 %v277
    %v685 = vunpack.c.l.b16 %v278
    %v686 = vunpack.c.l.b16 %v279
    %v687 = vunpack.c.l.b16 %v280
    %v688 = vunpack.c.l.b16 %v281
    %v689 = vunpack.c.l.b16 %v282
    %v690 = vunpack.c.l.b16 %v283
    %v691 = vunpack.c.l.b16 %v284
    %v692 = vunpack.c.l.b16 %v285
    %v693 = vunpack.c.l.b16 %v286
    %v694 = vunpack.c.l.b16 %v287
    %v695 = vunpack.c.l.b16 %v288
    %v696 = vunpack.c.l.b16 %v289
    %v697 = vunpack.c.l.b16 %v290
    %v698 = vunpack.c.l.b16 %v291
    %v699 = vunpack.c.l.b16 %v292
    %v700 = vunpack.c.l.b16 %v293
    %v701 = vunpack.c.l.b16 %v294
    %v702 = vunpack.c.l.b16 %v295
    %v703 = vunpack.c.l.b16 %v296
    %v704 = vunpack.c.l.b16 %v297
    %v705 = vunpack.c.l.b16 %v298
    %v706 = vunpack.c.l.b16 %v299
    %v707 = vunpack.c.l.b16 %v300
    %v708 = vunpack.c.l.b16 %v301
    %v709 = vunpack.c.l.b16 %v302
    %v710 = vunpack.c.l.b16 %v303
    %v711 = vunpack.c.l.b16 %v304
    %v712 = vunpack.c.l.b16 %v305
    %v713 = vunpack.c.l.b16 %v306
    %v714 = vunpack.c.l.b16 %v307
    %v715 = vunpack.c.l.b16 %v308
    %v716 = vunpack.c.l.b16 %v309
    %v717 = vunpack.c.l.b16 %v310
    %v718 = vunpack.c.l.b16 %v311
    %v719 = vunpack.c.l.b16 %v312
    %v720 = vunpack.c.l.b16 %v313
    %v721 = vunpack.c.l.b16 %v314
    %v722 = vunpack.c.l.b16 %v315
    %v723 = vunpack.c.l.b16 %v316
    %v724 = vunpack.c.l.b16 %v317
    %v725 = vunpack.c.l.b16 %v318
    %v726 = vunpack.c.l.b16 %v319
    %v727 = vunpack.c.l.b16 %v320
    %v728 = vunpack.c.l.b16 %v321
    %v729 = vunpack.c.l.b16 %v322
    %v730 = vunpack.c.l.b16 %v323
    %v731 = vunpack.c.l.b16 %v324
    %v732 = vunpack.c.l.b16 %v325
    %v733 = vunpack.c.l.b16 %v326
    %v734 = vunpack.c.l.b16 %v327
    %v735 = vunpack.c.l.b16 %v328
    %v736 = vunpack.c.l.b16 %v329
    %v737 = vunpack.c.l.b16 %v330
    %v738 = vunpack.c.l.b16 %v331
    %v739 = vunpack.c.l.b16 %v332
    %v740 = vunpack.c.l.b16 %v333
    %v741 = vunpack.c.l.b16 %v334
    %v742 = vunpack.c.l.b16 %v335
    %v743 = vunpack.c.l.b16 %v336
    %v744 = vunpack.c.l.b16 %v337
    %v745 = vunpack.c.l.b16 %v338
    %v746 = vunpack.c.l.b16 %v339
    %v747 = vunpack.c.l.b16 %v340
    %v748 = vunpack.c.l.b16 %v341
    %v749 = vunpack.c.l.b16 %v342
    %v750 = vunpack.c.l.b16 %v343
    %v751 = vunpack.c.l.b16 %v344
    %v752 = vunpack.c.l.b16 %v345
    %v753 = vunpack.c.l.b16 %v346
    %v754 = vpack.c.b16 %v555, %v554
    %v755 = vpack.c.b16 %v557, %v556
    %v756 = vpack.c.b16 %v559, %v558
    %v757 = vpack.c.b16 %v561, %v560
    %v758 = vpack.c.b16 %v563, %v562
    %v759 = vpack.c.b16 %v565, %v564
    %v760 = vpack.c.b16 %v567, %v566
    %v761 = vpack.c.b16 %v569, %v568
    %v762 = vpack.c.b16 %v571, %v570
    %v763 = vpack.c.b16 %v573, %v572
    %v764 = vpack.c.b16 %v575, %v574
    %v765 = vpack.c.b16 %v577, %v576
    %v766 = vpack.c.b16 %v579, %v578
    %v767 = vpack.c.b16 %v581, %v580
    %v768 = vpack.c.b16 %v583, %v582
    %v769 = vpack.c.b16 %v585, %v584
    %v770 = vpack.c.b16 %v587, %v586
    %v771 = vpack.c.b16 %v589, %v588
    %v772 = vpack.c.b16 %v591, %v590
    %v773 = vpack.c.b16 %v593, %v592
    %v774 = vpack.c.b16 %v595, %v594
    %v775 = vpack.c.b16 %v597, %v596
    %v776 = vpack.c.b16 %v599, %v598
    %v777 = vpack.c.b16 %v601, %v600
    %v778 = vpack.c.b16 %v603, %v602
    %v779 = vpack.c.b16 %v605, %v604
    %v780 = vpack.c.b16 %v607, %v606
    %v781 = vpack.c.b16 %v609, %v608
    %v782 = vpack.c.b16 %v611, %v610
    %v783 = vpack.c.b16 %v613, %v612
    %v784 = vpack.c.b16 %v615, %v614
    %v785 = vpack.c.b16 %v617, %v616
    %v786 = vpack.c.b16 %v619, %v618
    %v787 = vpack.c.b16 %v621, %v620
    %v788 = vpack.c.b16 %v623, %v622
    %v789 = vpack.c.b16 %v625, %v624
    %v790 = vpack.c.b16 %v627, %v626
    %v791 = vpack.c.b16 %v629, %v628
    %v792 = vpack.c.b16 %v631, %v630
    %v793 = vpack.c.b16 %v633, %v632
    %v794 = vpack.c.b16 %v635, %v634
    %v795 = vpack.c.b16 %v637, %v636
    %v796 = vpack.c.b16 %v639, %v638
    %v797 = vpack.c.b16 %v641, %v640
    %v798 = vpack.c.b16 %v643, %v642
    %v799 = vpack.c.b16 %v645, %v644
    %v800 = vpack.c.b16 %v647, %v646
    %v801 = vpack.c.b16 %v649, %v648
    %v802 = vpack.c.b16 %v651, %v650
    %v803 = vpack.c.b16 %v653, %v652
    %v804 = vpack.c.b16 %v655, %v654
    %v805 = vpack.c.b16 %v657, %v656
    %v806 = vpack.c.b16 %v659, %v658
    %v807 = vpack.c.b16 %v661, %v660
    %v808 = vpack.c.b16 %v663, %v662
    %v809 = vpack.c.b16 %v665, %v664
    %v810 = vpack.c.b16 %v667, %v666
    %v811 = vpack.c.b16 %v669, %v668
    %v812 = vpack.c.b16 %v671, %v670
    %v813 = vpack.c.b16 %v673, %v672
    %v814 = vpack.c.b16 %v675, %v674
    %v815 = vpack.c.b16 %v677, %v676
    %v816 = vpack.c.b16 %v679, %v678
    %v817 = vpack.c.b16 %v681, %v680
    %v818 = vpack.c.b16 %v683, %v682
    %v819 = vpack.c.b16 %v685, %v684
    %v820 = vpack.c.b16 %v687, %v686
    %v821 = vpack.c.b16 %v689, %v688
    %v822 = vpack.c.b16 %v691, %v690
    %v823 = vpack.c.b16 %v693, %v692
    %v824 = vpack.c.b16 %v695, %v694
    %v825 = vpack.c.b16 %v697, %v696
    %v826 = vpack.c.b16 %v699, %v698
    %v827 = vpack.c.b16 %v701, %v700
    %v828 = vpack.c.b16 %v703, %v702
    %v829 = vpack.c.b16 %v705, %v704
    %v830 = vpack.c.b16 %v707, %v706
    %v831 = vpack.c.b16 %v709, %v708
    %v832 = vpack.c.b16 %v711, %v710
    %v833 = vpack.c.b16 %v713, %v712
    %v834 = vpack.c.b16 %v715, %v714
    %v835 = vpack.c.b16 %v717, %v716
    %v836 = vpack.c.b16 %v719, %v718
    %v837 = vpack.c.b16 %v721, %v720
    %v838 = vpack.c.b16 %v723, %v722
    %v839 = vpack.c.b16 %v725, %v724
    %v840 = vpack.c.b16 %v727, %v726
    %v841 = vpack.c.b16 %v729, %v728
    %v842 = vpack.c.b16 %v731, %v730
    %v843 = vpack.c.b16 %v733, %v732
    %v844 = vpack.c.b16 %v735, %v734
    %v845 = vpack.c.b16 %v737, %v736
    %v846 = vpack.c.b16 %v739, %v738
    %v847 = vpack.c.b16 %v741, %v740
    %v848 = vpack.c.b16 %v743, %v742
    %v849 = vpack.c.b16 %v745, %v744
    %v850 = vpack.c.b16 %v747, %v746
    %v851 = vpack.c.b16 %v749, %v748
    %v852 = vpack.c.b16 %v751, %v750
    %v853 = vpack.c.b16 %v753, %v752
    %vm954 = vcmask 523264
    %v956 = vsel %vm954, %v146, 0
    %958 = vmatprep.subr.bf16.mxu0 0
    %959 = vmatpush1.bf16.msra.mxu0 %v754
    %960 = vmatprep.subr.bf16.mxu0 0
    %961 = vmatpush1.bf16.msra.mxu0 %v755
    %962 = vmatprep.subr.bf16.mxu0 0
    %963 = vmatpush1.bf16.msra.mxu0 %v756
    %964 = vmatprep.subr.bf16.mxu0 0
    %965 = vmatpush1.bf16.msra.mxu0 %v757
    %966 = vmatprep.subr.bf16.mxu0 0
    %967 = vmatpush1.bf16.msra.mxu0 %v758
    %968 = vmatprep.subr.bf16.mxu0 0
    %969 = vmatpush1.bf16.msra.mxu0 %v759
    %970 = vmatprep.subr.bf16.mxu0 0
    %971 = vmatpush1.bf16.msra.mxu0 %v760
    %972 = vmatprep.subr.bf16.mxu0 0
    %973 = vmatpush1.bf16.msra.mxu0 %v761
    %974 = vmatprep.subr.bf16.mxu0 0
    %975 = vmatpush1.bf16.msra.mxu0 %v762
    %976 = vmatprep.subr.bf16.mxu0 0
    %977 = vmatpush1.bf16.msra.mxu0 %v763
    %978 = vmatprep.subr.bf16.mxu0 0
    %979 = vmatpush1.bf16.msra.mxu0 %v764
    %980 = vmatprep.subr.bf16.mxu0 0
    %981 = vmatpush1.bf16.msra.mxu0 %v765
    %982 = vmatprep.subr.bf16.mxu0 0
    %983 = vmatpush1.bf16.msra.mxu0 %v766
    %984 = vmatprep.subr.bf16.mxu0 0
    %985 = vmatpush1.bf16.msra.mxu0 %v767
    %986 = vmatprep.subr.bf16.mxu0 0
    %987 = vmatpush1.bf16.msra.mxu0 %v768
    %988 = vmatprep.subr.bf16.mxu0 0
    %989 = vmatpush1.bf16.msra.mxu0 %v769
    %990 = vmatprep.mubr.bf16.mxu0 %v135
    %991 = vmatmul.mubr.bf16.gmra.mrb[0].mxu0 %v134
    %v992 = vpop.f32.mrb[0].mxu0
    %v993 = vadd.f32 %v352, %v992
    %v994 = vpop.f32.mrb[0].mxu0
    %v995 = vpop.f32.mrb[0].mxu0
    %v996 = vpop.f32.mrb[0].mxu0
    %997 = vdwg.mxu0
    %998 = vmatprep.subr.bf16.mxu0 0
    %999 = vmatpush1.bf16.msra.mxu0 %v770
    %1000 = vmatprep.subr.bf16.mxu0 0
    %1001 = vmatpush1.bf16.msra.mxu0 %v771
    %1002 = vmatprep.subr.bf16.mxu0 0
    %1003 = vmatpush1.bf16.msra.mxu0 %v772
    %1004 = vmatprep.subr.bf16.mxu0 0
    %1005 = vmatpush1.bf16.msra.mxu0 %v773
    %1006 = vmatprep.subr.bf16.mxu0 0
    %1007 = vmatpush1.bf16.msra.mxu0 %v774
    %1008 = vmatprep.subr.bf16.mxu0 0
    %1009 = vmatpush1.bf16.msra.mxu0 %v775
    %1010 = vmatprep.subr.bf16.mxu0 0
    %1011 = vmatpush1.bf16.msra.mxu0 %v776
    %1012 = vmatprep.subr.bf16.mxu0 0
    %1013 = vmatpush1.bf16.msra.mxu0 %v777
    %1014 = vmatprep.subr.bf16.mxu0 0
    %1015 = vmatpush1.bf16.msra.mxu0 %v778
    %1016 = vmatprep.subr.bf16.mxu0 0
    %1017 = vmatpush1.bf16.msra.mxu0 %v779
    %1018 = vmatprep.subr.bf16.mxu0 0
    %1019 = vmatpush1.bf16.msra.mxu0 %v780
    %1020 = vmatprep.subr.bf16.mxu0 0
    %1021 = vmatpush1.bf16.msra.mxu0 %v781
    %1022 = vmatprep.subr.bf16.mxu0 0
    %1023 = vmatpush1.bf16.msra.mxu0 %v782
    %1024 = vmatprep.subr.bf16.mxu0 0
    %1025 = vmatpush1.bf16.msra.mxu0 %v783
    %1026 = vmatprep.subr.bf16.mxu0 0
    %1027 = vmatpush1.bf16.msra.mxu0 %v784
    %1028 = vmatprep.subr.bf16.mxu0 0
    %1029 = vmatpush1.bf16.msra.mxu0 %v785
    %1030 = vmatprep.mubr.bf16.mxu0 %v137
    %1031 = vmatmul.mubr.bf16.gmra.mrb[0].mxu0 %v136
    %v1032 = vpop.f32.mrb[0].mxu0
    %v1033 = vadd.f32 %v993, %v1032
    %v1034 = vpop.f32.mrb[0].mxu0
    %v1035 = vpop.f32.mrb[0].mxu0
    %v1036 = vpop.f32.mrb[0].mxu0
    %1037 = vdwg.mxu0
    %1038 = vmatprep.subr.bf16.mxu0 0
    %1039 = vmatpush1.bf16.msra.mxu0 %v786
    %1040 = vmatprep.subr.bf16.mxu0 0
    %1041 = vmatpush1.bf16.msra.mxu0 %v787
    %1042 = vmatprep.subr.bf16.mxu0 0
    %1043 = vmatpush1.bf16.msra.mxu0 %v788
    %1044 = vmatprep.subr.bf16.mxu0 0
    %1045 = vmatpush1.bf16.msra.mxu0 %v789
    %1046 = vmatprep.subr.bf16.mxu0 0
    %1047 = vmatpush1.bf16.msra.mxu0 %v790
    %1048 = vmatprep.subr.bf16.mxu0 0
    %1049 = vmatpush1.bf16.msra.mxu0 %v791
    %1050 = vmatprep.subr.bf16.mxu0 0
    %1051 = vmatpush1.bf16.msra.mxu0 %v792
    %1052 = vmatprep.subr.bf16.mxu0 0
    %1053 = vmatpush1.bf16.msra.mxu0 %v793
    %1054 = vmatprep.subr.bf16.mxu0 0
    %1055 = vmatpush1.bf16.msra.mxu0 %v794
    %1056 = vmatprep.subr.bf16.mxu0 0
    %1057 = vmatpush1.bf16.msra.mxu0 %v795
    %1058 = vmatprep.subr.bf16.mxu0 0
    %1059 = vmatpush1.bf16.msra.mxu0 %v796
    %1060 = vmatprep.subr.bf16.mxu0 0
    %1061 = vmatpush1.bf16.msra.mxu0 %v797
    %1062 = vmatprep.subr.bf16.mxu0 0
    %1063 = vmatpush1.bf16.msra.mxu0 %v798
    %1064 = vmatprep.subr.bf16.mxu0 0
    %1065 = vmatpush1.bf16.msra.mxu0 %v799
    %1066 = vmatprep.subr.bf16.mxu0 0
    %1067 = vmatpush1.bf16.msra.mxu0 %v800
    %1068 = vmatprep.subr.bf16.mxu0 0
    %1069 = vmatpush1.bf16.msra.mxu0 %v801
    %1070 = vmatprep.mubr.bf16.mxu0 %v139
    %1071 = vmatmul.mubr.bf16.gmra.mrb[0].mxu0 %v138
    %v1072 = vpop.f32.mrb[0].mxu0
    %v1073 = vadd.f32 %v1033, %v1072
    %v1074 = vpop.f32.mrb[0].mxu0
    %v1075 = vpop.f32.mrb[0].mxu0
    %v1076 = vpop.f32.mrb[0].mxu0
    %1077 = vdwg.mxu0
    %1078 = vmatprep.subr.bf16.mxu0 0
    %1079 = vmatpush1.bf16.msra.mxu0 %v802
    %1080 = vmatprep.subr.bf16.mxu0 0
    %1081 = vmatpush1.bf16.msra.mxu0 %v803
    %1082 = vmatprep.subr.bf16.mxu0 0
    %1083 = vmatpush1.bf16.msra.mxu0 %v804
    %1084 = vmatprep.subr.bf16.mxu0 0
    %1085 = vmatpush1.bf16.msra.mxu0 %v805
    %1086 = vmatprep.subr.bf16.mxu0 0
    %1087 = vmatpush1.bf16.msra.mxu0 %v806
    %1088 = vmatprep.subr.bf16.mxu0 0
    %1089 = vmatpush1.bf16.msra.mxu0 %v807
    %1090 = vmatprep.subr.bf16.mxu0 0
    %1091 = vmatpush1.bf16.msra.mxu0 %v808
    %1092 = vmatprep.subr.bf16.mxu0 0
    %1093 = vmatpush1.bf16.msra.mxu0 %v809
    %1094 = vmatprep.subr.bf16.mxu0 0
    %1095 = vmatpush1.bf16.msra.mxu0 %v810
    %1096 = vmatprep.subr.bf16.mxu0 0
    %1097 = vmatpush1.bf16.msra.mxu0 %v811
    %1098 = vmatprep.subr.bf16.mxu0 0
    %1099 = vmatpush1.bf16.msra.mxu0 %v812
    %1100 = vmatprep.subr.bf16.mxu0 0
    %1101 = vmatpush1.bf16.msra.mxu0 %v813
    %1102 = vmatprep.subr.bf16.mxu0 0
    %1103 = vmatpush1.bf16.msra.mxu0 %v814
    %1104 = vmatprep.subr.bf16.mxu0 0
    %1105 = vmatpush1.bf16.msra.mxu0 %v815
    %1106 = vmatprep.subr.bf16.mxu0 0
    %1107 = vmatpush1.bf16.msra.mxu0 %v816
    %1108 = vmatprep.subr.bf16.mxu0 0
    %1109 = vmatpush1.bf16.msra.mxu0 %v817
    %1110 = vmatprep.mubr.bf16.mxu0 %v141
    %1111 = vmatmul.mubr.bf16.gmra.mrb[0].mxu0 %v140
    %v1112 = vpop.f32.mrb[0].mxu0
    %v1113 = vadd.f32 %v1073, %v1112
    %v1114 = vpop.f32.mrb[0].mxu0
    %v1115 = vpop.f32.mrb[0].mxu0
    %v1116 = vpop.f32.mrb[0].mxu0
    %1117 = vdwg.mxu0
    %1118 = vmatprep.subr.bf16.mxu0 0
    %1119 = vmatpush1.bf16.msra.mxu0 %v818
    %1120 = vmatprep.subr.bf16.mxu0 0
    %1121 = vmatpush1.bf16.msra.mxu0 %v819
    %1122 = vmatprep.subr.bf16.mxu0 0
    %1123 = vmatpush1.bf16.msra.mxu0 %v820
    %1124 = vmatprep.subr.bf16.mxu0 0
    %1125 = vmatpush1.bf16.msra.mxu0 %v821
    %1126 = vmatprep.subr.bf16.mxu0 0
    %1127 = vmatpush1.bf16.msra.mxu0 %v822
    %1128 = vmatprep.subr.bf16.mxu0 0
    %1129 = vmatpush1.bf16.msra.mxu0 %v823
    %1130 = vmatprep.subr.bf16.mxu0 0
    %1131 = vmatpush1.bf16.msra.mxu0 %v824
    %1132 = vmatprep.subr.bf16.mxu0 0
    %1133 = vmatpush1.bf16.msra.mxu0 %v825
    %1134 = vmatprep.subr.bf16.mxu0 0
    %1135 = vmatpush1.bf16.msra.mxu0 %v826
    %1136 = vmatprep.subr.bf16.mxu0 0
    %1137 = vmatpush1.bf16.msra.mxu0 %v827
    %1138 = vmatprep.subr.bf16.mxu0 0
    %1139 = vmatpush1.bf16.msra.mxu0 %v828
    %1140 = vmatprep.subr.bf16.mxu0 0
    %1141 = vmatpush1.bf16.msra.mxu0 %v829
    %1142 = vmatprep.subr.bf16.mxu0 0
    %1143 = vmatpush1.bf16.msra.mxu0 %v830
    %1144 = vmatprep.subr.bf16.mxu0 0
    %1145 = vmatpush1.bf16.msra.mxu0 %v831
    %1146 = vmatprep.subr.bf16.mxu0 0
    %1147 = vmatpush1.bf16.msra.mxu0 %v832
    %1148 = vmatprep.subr.bf16.mxu0 0
    %1149 = vmatpush1.bf16.msra.mxu0 %v833
    %1150 = vmatprep.mubr.bf16.mxu0 %v143
    %1151 = vmatmul.mubr.bf16.gmra.mrb[0].mxu0 %v142
    %v1152 = vpop.f32.mrb[0].mxu0
    %v1153 = vadd.f32 %v1113, %v1152
    %v1154 = vpop.f32.mrb[0].mxu0
    %v1155 = vpop.f32.mrb[0].mxu0
    %v1156 = vpop.f32.mrb[0].mxu0
    %1157 = vdwg.mxu0
    %1158 = vmatprep.subr.bf16.mxu0 0
    %1159 = vmatpush1.bf16.msra.mxu0 %v834
    %1160 = vmatprep.subr.bf16.mxu0 0
    %1161 = vmatpush1.bf16.msra.mxu0 %v835
    %1162 = vmatprep.subr.bf16.mxu0 0
    %1163 = vmatpush1.bf16.msra.mxu0 %v836
    %1164 = vmatprep.subr.bf16.mxu0 0
    %1165 = vmatpush1.bf16.msra.mxu0 %v837
    %1166 = vmatprep.subr.bf16.mxu0 0
    %1167 = vmatpush1.bf16.msra.mxu0 %v838
    %1168 = vmatprep.subr.bf16.mxu0 0
    %1169 = vmatpush1.bf16.msra.mxu0 %v839
    %1170 = vmatprep.subr.bf16.mxu0 0
    %1171 = vmatpush1.bf16.msra.mxu0 %v840
    %1172 = vmatprep.subr.bf16.mxu0 0
    %1173 = vmatpush1.bf16.msra.mxu0 %v841
    %1174 = vmatprep.subr.bf16.mxu0 0
    %1175 = vmatpush1.bf16.msra.mxu0 %v842
    %1176 = vmatprep.subr.bf16.mxu0 0
    %1177 = vmatpush1.bf16.msra.mxu0 %v843
    %1178 = vmatprep.subr.bf16.mxu0 0
    %1179 = vmatpush1.bf16.msra.mxu0 %v844
    %1180 = vmatprep.subr.bf16.mxu0 0
    %1181 = vmatpush1.bf16.msra.mxu0 %v845
    %1182 = vmatprep.subr.bf16.mxu0 0
    %1183 = vmatpush1.bf16.msra.mxu0 %v846
    %1184 = vmatprep.subr.bf16.mxu0 0
    %1185 = vmatpush1.bf16.msra.mxu0 %v847
    %1186 = vmatprep.subr.bf16.mxu0 0
    %1187 = vmatpush1.bf16.msra.mxu0 %v848
    %1188 = vmatprep.subr.bf16.mxu0 0
    %1189 = vmatpush1.bf16.msra.mxu0 %v849
    %1190 = vmatprep.mubr.bf16.mxu0 %v145
    %1191 = vmatmul.mubr.bf16.gmra.mrb[0].mxu0 %v144
    %v1192 = vpop.f32.mrb[0].mxu0
    %v1193 = vadd.f32 %v1153, %v1192
    %v1194 = vpop.f32.mrb[0].mxu0
    %v1195 = vpop.f32.mrb[0].mxu0
    %v1196 = vpop.f32.mrb[0].mxu0
    %1197 = vdwg.mxu0
    %1198 = vmatprep.subr.bf16.mxu0 0
    %1199 = vmatpush1.bf16.msra.mxu0 %v850
    %1200 = vmatprep.subr.bf16.mxu0 0
    %1201 = vmatpush1.bf16.msra.mxu0 %v851
    %1202 = vmatprep.subr.bf16.mxu0 0
    %1203 = vmatpush1.bf16.msra.mxu0 %v852
    %1204 = vmatprep.subr.bf16.mxu0 0
    %1205 = vmatpush1.bf16.msra.mxu0 %v853
    %1206 = vmatprep.subr.bf16.mxu0 0
    %1207 = vmatpush1.bf16.msra.mxu0 0
    %1208 = vmatprep.subr.bf16.mxu0 0
    %1209 = vmatpush1.bf16.msra.mxu0 0
    %1210 = vmatprep.subr.bf16.mxu0 0
    %1211 = vmatpush1.bf16.msra.mxu0 0
    %1212 = vmatprep.subr.bf16.mxu0 0
    %1213 = vmatpush1.bf16.msra.mxu0 0
    %1214 = vmatprep.subr.bf16.mxu0 0
    %1215 = vmatpush1.bf16.msra.mxu0 0
    %1216 = vmatprep.subr.bf16.mxu0 0
    %1217 = vmatpush1.bf16.msra.mxu0 0
    %1218 = vmatprep.subr.bf16.mxu0 0
    %1219 = vmatpush1.bf16.msra.mxu0 0
    %1220 = vmatprep.subr.bf16.mxu0 0
    %1221 = vmatpush1.bf16.msra.mxu0 0
    %1222 = vmatprep.subr.bf16.mxu0 0
    %1223 = vmatpush1.bf16.msra.mxu0 0
    %1224 = vmatprep.subr.bf16.mxu0 0
    %1225 = vmatpush1.bf16.msra.mxu0 0
    %1226 = vmatprep.subr.bf16.mxu0 0
    %1227 = vmatpush1.bf16.msra.mxu0 0
    %1228 = vmatprep.subr.bf16.mxu0 0
    %1229 = vmatpush1.bf16.msra.mxu0 0
    %1230 = vmatprep.mubr.bf16.mxu0 0
    %1231 = vmatmul.mubr.bf16.gmra.mrb[0].mxu0 %v956
    %v1232 = vpop.f32.mrb[0].mxu0
    %v1233 = vadd.f32 %v1193, %v1232
    %v1234 = vpop.f32.mrb[0].mxu0
    %v1235 = vpop.f32.mrb[0].mxu0
    %v1236 = vpop.f32.mrb[0].mxu0
    %1237 = vdwg.mxu0
    %v1238 = vmax.f32 %v1233, 0.0
    %v1239 = vpack.c.bf16 %v1238, %v1238
    %v1240 = vld [vmem:[%s6] sm:$0xf]
    %v1241 = vld [vmem:[%s6 + $0x4] sm:$0xf]
    %v1242 = vld [vmem:[%s6 + $0x8] sm:$0xf]
    %v1243 = vld [vmem:[%s6 + $0xc] sm:$0xf]
    %v1244 = vld [vmem:[%s6 + $0x10] sm:$0xf]
    %v1245 = vld [vmem:[%s6 + $0x14] sm:$0xf]
    %v1246 = vld [vmem:[%s6 + $0x18] sm:$0xf]
    %v1247 = vld [vmem:[%s6 + $0x1c] sm:$0xf]
    %v1248 = vld [vmem:[%s6 + $0x20] sm:$0xf]
    %v1249 = vld [vmem:[%s6 + $0x24] sm:$0xf]
    %v1250 = vld [vmem:[%s6 + $0x28] sm:$0xf]
    %v1251 = vld [vmem:[%s6 + $0x2c] sm:$0xf]
    %v1252 = vld [vmem:[%s6 + $0x30] sm:$0xf]
    %v1253 = vld [vmem:[%s6 + $0x34] sm:$0xf]
    %v1254 = vld [vmem:[%s6 + $0x38] sm:$0xf]
    %v1255 = vld [vmem:[%s6 + $0x3c] sm:$0xf]
    %v1256 = vld [vmem:[%s7] sm:$0x1]
    %v1258 = vlaneseq
    %v1259 = vshrl.u32 %v1258, 7
    %v1260 = vsub.s32 0, %v1259
    %v1261 = vrot.slane %v1256, %v1260
    %v1279 = vunpack.c.l.b16 %v1240
    %v1280 = vunpack.c.l.b16 %v1241
    %v1281 = vunpack.c.l.b16 %v1242
    %v1282 = vunpack.c.l.b16 %v1243
    %v1283 = vunpack.c.l.b16 %v1244
    %v1284 = vunpack.c.l.b16 %v1245
    %v1285 = vunpack.c.l.b16 %v1246
    %v1286 = vunpack.c.l.b16 %v1247
    %v1287 = vunpack.c.l.b16 %v1248
    %v1288 = vunpack.c.l.b16 %v1249
    %v1289 = vunpack.c.l.b16 %v1250
    %v1290 = vunpack.c.l.b16 %v1251
    %v1291 = vunpack.c.l.b16 %v1252
    %v1292 = vunpack.c.l.b16 %v1253
    %v1293 = vunpack.c.l.b16 %v1254
    %v1294 = vunpack.c.l.b16 %v1255
    %v1295 = vpack.c.b16 %v1280, %v1279
    %v1296 = vpack.c.b16 %v1282, %v1281
    %v1297 = vpack.c.b16 %v1284, %v1283
    %v1298 = vpack.c.b16 %v1286, %v1285
    %v1299 = vpack.c.b16 %v1288, %v1287
    %v1300 = vpack.c.b16 %v1290, %v1289
    %v1301 = vpack.c.b16 %v1292, %v1291
    %v1302 = vpack.c.b16 %v1294, %v1293
    %1311 = vmatprep.subr.bf16.mxu0 0
    %1312 = vmatpush1.bf16.msra.mxu0 %v1295
    %1313 = vmatprep.subr.bf16.mxu0 0
    %1314 = vmatpush1.bf16.msra.mxu0 %v1296
    %1315 = vmatprep.subr.bf16.mxu0 0
    %1316 = vmatpush1.bf16.msra.mxu0 %v1297
    %1317 = vmatprep.subr.bf16.mxu0 0
    %1318 = vmatpush1.bf16.msra.mxu0 %v1298
    %1319 = vmatprep.subr.bf16.mxu0 0
    %1320 = vmatpush1.bf16.msra.mxu0 %v1299
    %1321 = vmatprep.subr.bf16.mxu0 0
    %1322 = vmatpush1.bf16.msra.mxu0 %v1300
    %1323 = vmatprep.subr.bf16.mxu0 0
    %1324 = vmatpush1.bf16.msra.mxu0 %v1301
    %1325 = vmatprep.subr.bf16.mxu0 0
    %1326 = vmatpush1.bf16.msra.mxu0 %v1302
    %1327 = vmatprep.subr.bf16.mxu0 0
    %1328 = vmatpush1.bf16.msra.mxu0 0
    %1329 = vmatprep.subr.bf16.mxu0 0
    %1330 = vmatpush1.bf16.msra.mxu0 0
    %1331 = vmatprep.subr.bf16.mxu0 0
    %1332 = vmatpush1.bf16.msra.mxu0 0
    %1333 = vmatprep.subr.bf16.mxu0 0
    %1334 = vmatpush1.bf16.msra.mxu0 0
    %1335 = vmatprep.subr.bf16.mxu0 0
    %1336 = vmatpush1.bf16.msra.mxu0 0
    %1337 = vmatprep.subr.bf16.mxu0 0
    %1338 = vmatpush1.bf16.msra.mxu0 0
    %1339 = vmatprep.subr.bf16.mxu0 0
    %1340 = vmatpush1.bf16.msra.mxu0 0
    %1341 = vmatprep.subr.bf16.mxu0 0
    %1342 = vmatpush1.bf16.msra.mxu0 0
    %1343 = vmatprep.mubr.bf16.mxu0 0
    %1344 = vmatmul.mubr.bf16.gmra.mrb[0].mxu0 %v1239
    %v1345 = vpop.f32.mrb[0].mxu0
    %v1346 = vadd.f32 %v1261, %v1345
    %v1347 = vpop.f32.mrb[0].mxu0
    %v1348 = vpop.f32.mrb[0].mxu0
    %v1349 = vpop.f32.mrb[0].mxu0
    %1350 = vdwg.mxu0
    %vm1351 = vcmask 74752
    %1352 = vst.msk [vmem:[#allocation2] sm:$0x3] %vm1351, %v1346
    // Predicated region
    $region34: #{net_forward.5} parent=1 // pred_check
      _
    $region35: #{net_forward.5} parent=1 // pred_check_branch
      %1354 = sbr.rel (0) target = $region37
    $region36: #{net_forward.5} parent=1 // pred_region
      %s1356 = ssub.s32 32, 32
      %1357 = vsyncadd [#allocation3], %s1356
      %s1359 = sshll.u32 [#allocation2], 4
      %s1360 = int_to_ptr.vmem [resolvable:$true] %s1359
      %1362 = dma.vmem_to_hbm [thread:$0]  %s1360, 32, %s8, [#allocation3]
    $region37: #{net_forward.5} parent=1 // pred_fallthru
      _
    // Predicated region
    $region38: #{net_forward.5} parent=1 // pred_check
      _
    $region39: #{net_forward.5} parent=1 // pred_check_branch
      %1364 = sbr.rel (0) target = $region41
    $region40: #{net_forward.5} parent=1 // pred_region
      %1365 = dma.done [#allocation3], 32
    $region41: #{net_forward.5} parent=1 // pred_fallthru
      _
    %1366 = vsyncpa [#allocation3], 1

</llo_original>
